<compile_context>
chip_gen: v5e
topology: v5e:2x2
jax: 0.10.0
libtpu: 0.0.40
codegen_flags: <defaults>
</compile_context>

<pallas_src>
import jax
import jax.numpy as jnp
from jax.experimental import pallas as pl
from jax.experimental.pallas import tpu as pltpu

_HEAD_NAMES = ('yaw', 'pitch', 'roll', 't', 'exp')


def _round_up(x, m):
    return ((x + m - 1) // m) * m


# ----------------------------------------------------------------------------
# Kernel
# ----------------------------------------------------------------------------
def make_mapping_net_kernel(layer, t_true):
    """Kernel closed over the static config (encoder depth, true time length)."""
    K1 = 7            # first conv kernel size (dilation 1)
    K2, DIL = 3, 3    # encoder conv kernel size / dilation

    def kernel(x_ref, wf_ref, bf_ref, ew_ref, eb_ref, wh_ref, bh_ref,
               o_ref, canvas_ref):
        bt, t_pad, cin = x_ref.shape
        d = bf_ref.shape[1]
        l1 = t_true - (K1 - 1)                      # valid rows after first conv
        l_final = l1 - DIL * (K2 - 1) * layer       # valid rows after all blocks

        def tap_fuse(z3, k_taps, dil, l_out):
            # z3: (bt, t_pad, k_taps*d).  Shift-add the per-tap lane slices.
            # Static sublane shifts never cross a batch boundary and co-issue
            # on the XLU slot alongside the MXU-bound main path.
            acc = z3[:, 0:l_out, 0:d]
            for k in range(1, k_taps):
                acc = acc + z3[:, k * dil:k * dil + l_out, k * d:(k + 1) * d]
            return acc

        # ---- first conv: ONE (bt*t_pad, cin) x (cin, 7*d) MXU matmul ----
        x = x_ref[...].reshape(bt * t_pad, cin)                         # bf16
        z = jnp.dot(x, wf_ref[...], preferred_element_type=jnp.float32)
        z = z.reshape(bt, t_pad, K1 * d)
        canvas_ref[...] = jnp.zeros_like(canvas_ref)                    # clear stale VMEM
        canvas_ref[:, 0:l1, :] = tap_fuse(z, K1, 1, l1) + bf_ref[...]

        # ---- encoder blocks: LeakyReLU(0.1) -> dilated conv -> residual ----
        l_in = l1
        for i in range(layer):
            l_out = l_in - DIL * (K2 - 1)
            full = canvas_ref[...]                                      # (bt, t_pad, d) f32
            h = jnp.where(full > 0, full, 0.1 * full)                   # f32 elementwise
            h = h.reshape(bt * t_pad, d).astype(jnp.bfloat16)
            zi = jnp.dot(h, ew_ref[i], preferred_element_type=jnp.float32)
            zi = zi.reshape(bt, t_pad, K2 * d)
            y = tap_fuse(zi, K2, DIL, l_out) + eb_ref[i]
            canvas_ref[:, 0:l_out, :] = y + full[:, DIL:DIL + l_out, :]  # residual [3:-3]
            l_in = l_out

        # ---- AdaptiveAvgPool1d(1): mean over valid rows, 1/L kept in f32 ----
        pooled = jnp.sum(canvas_ref[:, 0:l_final, :], axis=1) * (1.0 / l_final)

        # ---- fused heads: one lane-dense matmul, one unmasked store ----
        heads = jnp.dot(pooled.astype(jnp.bfloat16), wh_ref[...],
                        preferred_element_type=jnp.float32) + bh_ref[...]
        o_ref[0] = heads                                                # (bt, n_pad)

    return kernel


# ----------------------------------------------------------------------------
# One-time weight preparation (hoisted out of the per-call path)
# ----------------------------------------------------------------------------
def prepare_mapping_params(params):
    """Layout plumbing + casts.  Call ONCE; the per-call path then never
    re-reads / re-lays-out the weights in HBM."""
    layer = len(params['enc'])
    assert layer >= 1
    wf, bf = params['first']
    d, cin, k1 = wf.shape
    d_pad = _round_up(d, 128)          # keep every lane slice vreg-aligned
    cin_pad = _round_up(cin, 128)

    # first conv: wcat[c, k*d_pad + o] = w[o, c, k]; padded channels are zero.
    wf_t = jnp.pad(jnp.transpose(wf, (1, 2, 0)),
                   ((0, cin_pad - cin), (0, 0), (0, d_pad - d)))
    wf_cat = wf_t.reshape(cin_pad, k1 * d_pad).astype(jnp.bfloat16)
    bf_p = jnp.pad(bf, (0, d_pad - d)).reshape(1, d_pad).astype(jnp.float32)

    # encoder convs, stacked on a leading `layer` axis (so a streaming grid
    # axis is a one-line change if descriptor_nc ever outgrows v7x VMEM).
    ew, eb = [], []
    for (w, b) in params['enc']:
        wt = jnp.pad(jnp.transpose(w, (1, 2, 0)),
                     ((0, d_pad - d), (0, 0), (0, d_pad - d)))
        ew.append(wt.reshape(d_pad, 3 * d_pad))
        eb.append(jnp.pad(b, (0, d_pad - d)).reshape(1, d_pad))
    ew = jnp.stack(ew).astype(jnp.bfloat16)          # (layer, d_pad, 3*d_pad)
    eb = jnp.stack(eb).astype(jnp.float32)           # (layer, 1, d_pad)

    # fused heads: concatenate on lanes, pad to a multiple of 128 lanes.
    hw = [params['fc_' + n][0] for n in _HEAD_NAMES]   # (n_out, D) PyTorch layout
    hb = [params['fc_' + n][1] for n in _HEAD_NAMES]
    sizes = tuple(int(w.shape[0]) for w in hw)
    n_total = sum(sizes)
    n_pad = _round_up(n_total, 128)
    w_all = jnp.concatenate([w.T for w in hw], axis=1)              # (D, n_total)
    w_all = jnp.pad(w_all, ((0, d_pad - d), (0, n_pad - n_total))).astype(jnp.bfloat16)
    b_all = jnp.pad(jnp.concatenate(hb), (0, n_pad - n_total)
                    ).reshape(1, n_pad).astype(jnp.float32)

    arrays = (wf_cat, bf_p, ew, eb, w_all, b_all)
    meta = dict(layer=layer, coeff_nc=int(cin), k1=int(k1),
                d_pad=int(d_pad), cin_pad=int(cin_pad),
                sizes=sizes, n_pad=int(n_pad))
    return arrays, meta


# ----------------------------------------------------------------------------
# Forward wrapper
# ----------------------------------------------------------------------------
def mapping_net_forward(x, prepped, *, target_m=256, single_buffer_weights=True):
    """x: (B, coeff_nc, T) float32 (PyTorch NCW).  Returns dict like the module.
    target_m: aim for ~128 rows per matmul on v5e, ~256 on v6e/v7x."""
    (wf_cat, bf_p, ew, eb, w_all, b_all), meta = prepped
    layer, k1 = meta['layer'], meta['k1']
    d_pad, cin_pad, n_pad = meta['d_pad'], meta['cin_pad'], meta['n_pad']
    sizes, cin = meta['sizes'], meta['coeff_nc']

    b, cx, t = x.shape
    assert cx == cin, "channel mismatch with prepared params"
    l_final = t - (k1 - 1) - 6 * layer
    assert l_final >= 1, "input too short for the valid convolutions"

    # ---- batch tiling: raise MXU M to ~target_m rows, but keep >= 2 grid
    # steps when possible so the 'parallel' axis can split across v7x's 2 TCs.
    t_pad = _round_up(t, 16)            # 16 keeps bf16 sublane merges layout-free
    bt = max(1, min(b, target_m // t_pad))
    if b > 1 and -(-b // bt) < 2:
        bt = -(-b // 2)
    steps = -(-b // bt)
    b_pad = steps * bt

    # channel-last input; zero padding (batch/time/channel) never reaches a
    # valid output row of the valid convolutions.
    xt = jnp.transpose(x, (0, 2, 1)).astype(jnp.bfloat16)
    xt = jnp.pad(xt, ((0, b_pad - b), (0, t_pad - t), (0, cin_pad - cin)))

    # ---- explicit VMEM budget with headroom, capped well under v7x's 64 MiB ----
    weight_bytes = sum(int(a.size) * a.dtype.itemsize
                       for a in (wf_cat, bf_p, ew, eb, w_all, b_all))
    io_bytes = bt * t_pad * cin_pad * 2 + bt * n_pad * 4             # per-step in/out blocks
    interm_bytes = (bt * t_pad * (k1 * d_pad) * 4                     # first-conv z slab
                    + 8 * bt * t_pad * d_pad * 4)                     # canvas + enc z + temps
    wmult = 1 if single_buffer_weights else 2
    vmem_needed = wmult * weight_bytes + 2 * io_bytes + interm_bytes + (2 << 20)
    vmem_limit = int(min(56 << 20, max(vmem_needed, 16 << 20)))
    # TODO(synk): if layer*d_pad*3*d_pad bf16 exceeds ~1/3 of v7x's 64 MiB VMEM
    # (descriptor_nc >= 2048), stream encoder weights over an extra "arbitrary"
    # grid axis (ew BlockSpec (1, d_pad, 3*d_pad)) instead of keeping them resident.
    # TODO(synk): for B=1 latency-bound serving, persist the ~20 MB weight set in
    # VMEM across calls via a cross-pallas_call prefetch (return VMEM ref + DMA
    # semaphore from an earlier call) instead of re-fetching it every call.

    flops = int(2 * b_pad * (t_pad * cin_pad * k1 * d_pad
                             + layer * t_pad * d_pad * 3 * d_pad
                             + d_pad * n_pad))
    bytes_accessed = int(weight_bytes + xt.size * 2 + b_pad * n_pad * 4)

    def build(weight_kw):
        return pl.pallas_call(
            make_mapping_net_kernel(layer, t),
            out_shape=jax.ShapeDtypeStruct((steps, bt, n_pad), jnp.float32),
            grid=(steps,),
            in_specs=[
                pl.BlockSpec((bt, t_pad, cin_pad), lambda i: (i, 0, 0)),        # x tile
                pl.BlockSpec((cin_pad, k1 * d_pad), lambda i: (0, 0), **weight_kw),
                pl.BlockSpec((1, d_pad), lambda i: (0, 0), **weight_kw),
                pl.BlockSpec((layer, d_pad, 3 * d_pad), lambda i: (0, 0, 0), **weight_kw),
                pl.BlockSpec((layer, 1, d_pad), lambda i: (0, 0, 0), **weight_kw),
                pl.BlockSpec((d_pad, n_pad), lambda i: (0, 0), **weight_kw),
                pl.BlockSpec((1, n_pad), lambda i: (0, 0), **weight_kw),
            ],
            out_specs=pl.BlockSpec((1, bt, n_pad), lambda i: (i, 0, 0)),
            scratch_shapes=[pltpu.VMEM((bt, t_pad, d_pad), jnp.float32)],
            compiler_params=pltpu.CompilerParams(
                dimension_semantics=("parallel",),
                vmem_limit_bytes=vmem_limit),
            cost_estimate=pl.CostEstimate(flops=flops, transcendentals=0,
                                          bytes_accessed=bytes_accessed),
        )

    args = (xt, wf_cat, bf_p, ew, eb, w_all, b_all)
    if single_buffer_weights:
        # Constant-index weight blocks are fetched once; single-buffering them
        # halves resident weight VMEM (matters at D=1024, layer=3 on v7x).
        try:
            out_all = build(dict(pipeline_mode=pl.Buffered(1)))(*args)
        except Exception:
            # pipeline_mode unsupported in this jax build -> default buffering.
            out_all = build({})(*args)
    else:
        out_all = build({})(*args)

    out_flat = out_all.reshape(b_pad, n_pad)[:b]
    outs, off = {}, 0
    for name, sz in zip(_HEAD_NAMES, sizes):
        outs[name] = out_flat[:, off:off + sz]
        off += sz
    return outs


# ----------------------------------------------------------------------------
# Parameter init (PyTorch layouts) + pure-JAX reference
# ----------------------------------------------------------------------------
def init_params(key, coeff_nc, descriptor_nc, layer, num_kp, num_bins):
    n_keys = 2 + 2 * layer + 10
    keys = iter(jax.random.split(key, n_keys))
    nk = lambda: next(keys)
    s = 0.1
    D = descriptor_nc
    p = {}
    p['first'] = (s * jax.random.normal(nk(), (D, coeff_nc, 7), jnp.float32),
                  s * jax.random.normal(nk(), (D,), jnp.float32))
    p['enc'] = []
    for _ in range(layer):
        p['enc'].append((s * jax.random.normal(nk(), (D, D, 3), jnp.float32),
                         s * jax.random.normal(nk(), (D,), jnp.float32)))

    def lin(n_out):
        return (s * jax.random.normal(nk(), (n_out, D), jnp.float32),
                s * jax.random.normal(nk(), (n_out,), jnp.float32))

    p['fc_yaw'] = lin(num_bins)
    p['fc_pitch'] = lin(num_bins)
    p['fc_roll'] = lin(num_bins)
    p['fc_t'] = lin(3)
    p['fc_exp'] = lin(3 * num_kp)
    return p


def ref_forward(x, params):
    """Pure-JAX f32 reference to sanity-check the Pallas kernel."""
    def conv(inp, w, b, dilation):
        out = jax.lax.conv_general_dilated(
            inp, w, window_strides=(1,), padding='VALID',
            rhs_dilation=(dilation,), dimension_numbers=('NCH', 'OIH', 'NCH'))
        return out + b[None, :, None]

    wf, bf = params['first']
    out = conv(x, wf, bf, 1)
    for (w, b) in params['enc']:
        h = jnp.where(out > 0, out, 0.1 * out)
        out = conv(h, w, b, 3) + out[:, :, 3:-3]
    pooled = jnp.mean(out, axis=2)

    def head(name):
        w, b = params['fc_' + name]
        return pooled @ w.T + b

    return {n: head(n) for n in _HEAD_NAMES}


# ----------------------------------------------------------------------------
if __name__ == "__main__":
    # Small config consistent with MappingNet(coeff_nc, descriptor_nc, layer, num_kp, num_bins)
    B, coeff_nc, T = 2, 8, 34                 # need T >= 7 + 6*layer for the valid convs
    descriptor_nc, layer, num_kp, num_bins = 32, 2, 5, 16

    key = jax.random.PRNGKey(0)
    kx, kp = jax.random.split(key)
    x = jax.random.normal(kx, (B, coeff_nc, T), jnp.float32)
    params = init_params(kp, coeff_nc, descriptor_nc, layer, num_kp, num_bins)

    prepped = prepare_mapping_params(params)   # one-time weight prep (hoisted)
    out = mapping_net_forward(x, prepped)
    out = jax.tree_util.tree_map(jax.block_until_ready, out)

    ref = ref_forward(x, params)
    # bf16 matmul inputs with f32 accumulation -> loosened tolerance.
    for name in _HEAD_NAMES:
        assert out[name].shape == ref[name].shape, name
        assert jnp.allclose(out[name], ref[name], rtol=2e-2, atol=2e-2), (
            name, float(jnp.max(jnp.abs(out[name] - ref[name]))))

    print("KERNEL_OK")
</pallas_src>

<mosaic_0001>
module attributes {stable_mosaic.version = 11 : i64} {
  func.func @kernel(%arg0: i32, %arg1: memref<1x48x128xbf16, #tpu.memory_space<vmem>>, %arg2: memref<128x896xbf16, #tpu.memory_space<vmem>>, %arg3: memref<1x128xf32, #tpu.memory_space<vmem>>, %arg4: memref<2x128x384xbf16, #tpu.memory_space<vmem>>, %arg5: memref<2x1x128xf32, #tpu.memory_space<vmem>>, %arg6: memref<128x128xbf16, #tpu.memory_space<vmem>>, %arg7: memref<1x128xf32, #tpu.memory_space<vmem>>, %arg8: memref<1x1x128xf32, #tpu.memory_space<vmem>>, %arg9: memref<1x48x128xf32, #tpu.memory_space<vmem>>) attributes {dimension_semantics = [#tpu.dimension_semantics<parallel>], iteration_bounds = array<i64: 2>, scalar_prefetch = 0 : i64, scratch_operands = 1 : i64, tpu.core_type = #tpu.core_type<tc>, window_params = [{transform_indices = @transform_0, window_bounds = array<i64: 1, 48, 128>}, {pipeline_mode = #tpu.pipeline_mode<synchronous>, transform_indices = @transform_1, window_bounds = array<i64: 128, 896>}, {pipeline_mode = #tpu.pipeline_mode<synchronous>, transform_indices = @transform_2, window_bounds = array<i64: 1, 128>}, {pipeline_mode = #tpu.pipeline_mode<synchronous>, transform_indices = @transform_3, window_bounds = array<i64: 2, 128, 384>}, {pipeline_mode = #tpu.pipeline_mode<synchronous>, transform_indices = @transform_4, window_bounds = array<i64: 2, 1, 128>}, {pipeline_mode = #tpu.pipeline_mode<synchronous>, transform_indices = @transform_5, window_bounds = array<i64: 128, 128>}, {pipeline_mode = #tpu.pipeline_mode<synchronous>, transform_indices = @transform_6, window_bounds = array<i64: 1, 128>}, {transform_indices = @transform_7, window_bounds = array<i64: 1, 1, 128>}]} {
    %c0 = arith.constant 0 : index
    %c0_0 = arith.constant 0 : index
    %c0_1 = arith.constant 0 : index
    %0 = vector.load %arg1[%c0, %c0_0, %c0_1] : memref<1x48x128xbf16, #tpu.memory_space<vmem>>, vector<1x48x128xbf16>
    %1 = vector.shape_cast %0 : vector<1x48x128xbf16> to vector<48x128xbf16>
    %c0_2 = arith.constant 0 : index
    %c0_3 = arith.constant 0 : index
    %2 = vector.load %arg2[%c0_2, %c0_3] : memref<128x896xbf16, #tpu.memory_space<vmem>>, vector<128x896xbf16>
    %cst = arith.constant dense<0.000000e+00> : vector<48x896xf32>
    %3 = tpu.matmul %1, %2, %cst {dimension_numbers = #tpu.dot_dimension_numbers<[1], [0], [0], [1], [0, 0, 1, 1], [], []>} : vector<48x128xbf16>, vector<128x896xbf16>, vector<48x896xf32> -> vector<48x896xf32>
    %4 = vector.shape_cast %3 : vector<48x896xf32> to vector<1x48x896xf32>
    %cst_4 = arith.constant 0.000000e+00 : f32
    %5 = vector.broadcast %cst_4 : f32 to vector<1x48x128xf32>
    %c0_5 = arith.constant 0 : index
    %c0_6 = arith.constant 0 : index
    %c0_7 = arith.constant 0 : index
    %6 = vector.load %arg9[%c0_5, %c0_6, %c0_7] : memref<1x48x128xf32, #tpu.memory_space<vmem>>, vector<1x48x128xf32>
    tpu.vector_store %arg9[%c0_5, %c0_6, %c0_7], %5 {strides = array<i32>} : memref<1x48x128xf32, #tpu.memory_space<vmem>>, vector<1x48x128xf32>,
    %7 = vector.extract_strided_slice %4 {offsets = [0, 0, 0], sizes = [1, 28, 128], strides = [1, 1, 1]} : vector<1x48x896xf32> to vector<1x28x128xf32>
    %8 = vector.extract_strided_slice %4 {offsets = [0, 1, 128], sizes = [1, 28, 128], strides = [1, 1, 1]} : vector<1x48x896xf32> to vector<1x28x128xf32>
    %9 = arith.addf %7, %8 : vector<1x28x128xf32>
    %10 = vector.extract_strided_slice %4 {offsets = [0, 2, 256], sizes = [1, 28, 128], strides = [1, 1, 1]} : vector<1x48x896xf32> to vector<1x28x128xf32>
    %11 = arith.addf %9, %10 : vector<1x28x128xf32>
    %12 = vector.extract_strided_slice %4 {offsets = [0, 3, 384], sizes = [1, 28, 128], strides = [1, 1, 1]} : vector<1x48x896xf32> to vector<1x28x128xf32>
    %13 = arith.addf %11, %12 : vector<1x28x128xf32>
    %14 = vector.extract_strided_slice %4 {offsets = [0, 4, 512], sizes = [1, 28, 128], strides = [1, 1, 1]} : vector<1x48x896xf32> to vector<1x28x128xf32>
    %15 = arith.addf %13, %14 : vector<1x28x128xf32>
    %16 = vector.extract_strided_slice %4 {offsets = [0, 5, 640], sizes = [1, 28, 128], strides = [1, 1, 1]} : vector<1x48x896xf32> to vector<1x28x128xf32>
    %17 = arith.addf %15, %16 : vector<1x28x128xf32>
    %18 = vector.extract_strided_slice %4 {offsets = [0, 6, 768], sizes = [1, 28, 128], strides = [1, 1, 1]} : vector<1x48x896xf32> to vector<1x28x128xf32>
    %19 = arith.addf %17, %18 : vector<1x28x128xf32>
    %c0_8 = arith.constant 0 : index
    %c0_9 = arith.constant 0 : index
    %20 = vector.load %arg3[%c0_8, %c0_9] : memref<1x128xf32, #tpu.memory_space<vmem>>, vector<1x128xf32>
    %21 = vector.shape_cast %20 : vector<1x128xf32> to vector<1x1x128xf32>
    %22 = vector.broadcast %21 : vector<1x1x128xf32> to vector<1x28x128xf32>
    %23 = arith.addf %19, %22 : vector<1x28x128xf32>
    %c0_10 = arith.constant 0 : index
    %c0_11 = arith.constant 0 : index
    %c0_12 = arith.constant 0 : index
    %24 = vector.load %arg9[%c0_10, %c0_11, %c0_12] : memref<1x48x128xf32, #tpu.memory_space<vmem>>, vector<1x28x128xf32>
    tpu.vector_store %arg9[%c0_10, %c0_11, %c0_12], %23 {strides = array<i32>} : memref<1x48x128xf32, #tpu.memory_space<vmem>>, vector<1x28x128xf32>,
    %c0_13 = arith.constant 0 : index
    %c0_14 = arith.constant 0 : index
    %c0_15 = arith.constant 0 : index
    %25 = vector.load %arg9[%c0_13, %c0_14, %c0_15] : memref<1x48x128xf32, #tpu.memory_space<vmem>>, vector<1x48x128xf32>
    %cst_16 = arith.constant 0.000000e+00 : f32
    %26 = vector.broadcast %cst_16 : f32 to vector<1x48x128xf32>
    %27 = arith.cmpf ogt, %25, %26 : vector<1x48x128xf32>
    %cst_17 = arith.constant 1.000000e-01 : f32
    %28 = vector.broadcast %cst_17 : f32 to vector<1x48x128xf32>
    %29 = arith.mulf %28, %25 : vector<1x48x128xf32>
    %30 = arith.select %27, %25, %29 : vector<1x48x128xi1>, vector<1x48x128xf32>
    %31 = vector.shape_cast %30 : vector<1x48x128xf32> to vector<48x128xf32>
    %32 = arith.truncf %31 : vector<48x128xf32> to vector<48x128xbf16>
    %c0_18 = arith.constant 0 : index
    %c0_19 = arith.constant 0 : index
    %c0_20 = arith.constant 0 : index
    %33 = vector.load %arg4[%c0_18, %c0_19, %c0_20] : memref<2x128x384xbf16, #tpu.memory_space<vmem>>, vector<1x128x384xbf16>
    %34 = vector.shape_cast %33 : vector<1x128x384xbf16> to vector<128x384xbf16>
    %cst_21 = arith.constant dense<0.000000e+00> : vector<48x384xf32>
    %35 = tpu.matmul %32, %34, %cst_21 {dimension_numbers = #tpu.dot_dimension_numbers<[1], [0], [0], [1], [0, 0, 1, 1], [], []>} : vector<48x128xbf16>, vector<128x384xbf16>, vector<48x384xf32> -> vector<48x384xf32>
    %36 = vector.shape_cast %35 : vector<48x384xf32> to vector<1x48x384xf32>
    %37 = vector.extract_strided_slice %36 {offsets = [0, 0, 0], sizes = [1, 22, 128], strides = [1, 1, 1]} : vector<1x48x384xf32> to vector<1x22x128xf32>
    %38 = vector.extract_strided_slice %36 {offsets = [0, 3, 128], sizes = [1, 22, 128], strides = [1, 1, 1]} : vector<1x48x384xf32> to vector<1x22x128xf32>
    %39 = arith.addf %37, %38 : vector<1x22x128xf32>
    %40 = vector.extract_strided_slice %36 {offsets = [0, 6, 256], sizes = [1, 22, 128], strides = [1, 1, 1]} : vector<1x48x384xf32> to vector<1x22x128xf32>
    %41 = arith.addf %39, %40 : vector<1x22x128xf32>
    %c0_22 = arith.constant 0 : index
    %c0_23 = arith.constant 0 : index
    %c0_24 = arith.constant 0 : index
    %42 = vector.load %arg5[%c0_22, %c0_23, %c0_24] : memref<2x1x128xf32, #tpu.memory_space<vmem>>, vector<1x1x128xf32>
    %43 = vector.shape_cast %42 : vector<1x1x128xf32> to vector<1x128xf32>
    %44 = vector.shape_cast %43 : vector<1x128xf32> to vector<1x1x128xf32>
    %45 = vector.broadcast %44 : vector<1x1x128xf32> to vector<1x22x128xf32>
    %46 = arith.addf %41, %45 : vector<1x22x128xf32>
    %47 = vector.extract_strided_slice %25 {offsets = [0, 3, 0], sizes = [1, 22, 128], strides = [1, 1, 1]} : vector<1x48x128xf32> to vector<1x22x128xf32>
    %48 = arith.addf %46, %47 : vector<1x22x128xf32>
    %c0_25 = arith.constant 0 : index
    %c0_26 = arith.constant 0 : index
    %c0_27 = arith.constant 0 : index
    %49 = vector.load %arg9[%c0_25, %c0_26, %c0_27] : memref<1x48x128xf32, #tpu.memory_space<vmem>>, vector<1x22x128xf32>
    tpu.vector_store %arg9[%c0_25, %c0_26, %c0_27], %48 {strides = array<i32>} : memref<1x48x128xf32, #tpu.memory_space<vmem>>, vector<1x22x128xf32>,
    %c0_28 = arith.constant 0 : index
    %c0_29 = arith.constant 0 : index
    %c0_30 = arith.constant 0 : index
    %50 = vector.load %arg9[%c0_28, %c0_29, %c0_30] : memref<1x48x128xf32, #tpu.memory_space<vmem>>, vector<1x48x128xf32>
    %cst_31 = arith.constant 0.000000e+00 : f32
    %51 = vector.broadcast %cst_31 : f32 to vector<1x48x128xf32>
    %52 = arith.cmpf ogt, %50, %51 : vector<1x48x128xf32>
    %cst_32 = arith.constant 1.000000e-01 : f32
    %53 = vector.broadcast %cst_32 : f32 to vector<1x48x128xf32>
    %54 = arith.mulf %53, %50 : vector<1x48x128xf32>
    %55 = arith.select %52, %50, %54 : vector<1x48x128xi1>, vector<1x48x128xf32>
    %56 = vector.shape_cast %55 : vector<1x48x128xf32> to vector<48x128xf32>
    %57 = arith.truncf %56 : vector<48x128xf32> to vector<48x128xbf16>
    %c1 = arith.constant 1 : index
    %c0_33 = arith.constant 0 : index
    %c0_34 = arith.constant 0 : index
    %58 = vector.load %arg4[%c1, %c0_33, %c0_34] : memref<2x128x384xbf16, #tpu.memory_space<vmem>>, vector<1x128x384xbf16>
    %59 = vector.shape_cast %58 : vector<1x128x384xbf16> to vector<128x384xbf16>
    %cst_35 = arith.constant dense<0.000000e+00> : vector<48x384xf32>
    %60 = tpu.matmul %57, %59, %cst_35 {dimension_numbers = #tpu.dot_dimension_numbers<[1], [0], [0], [1], [0, 0, 1, 1], [], []>} : vector<48x128xbf16>, vector<128x384xbf16>, vector<48x384xf32> -> vector<48x384xf32>
    %61 = vector.shape_cast %60 : vector<48x384xf32> to vector<1x48x384xf32>
    %62 = vector.extract_strided_slice %61 {offsets = [0, 0, 0], sizes = [1, 16, 128], strides = [1, 1, 1]} : vector<1x48x384xf32> to vector<1x16x128xf32>
    %63 = vector.extract_strided_slice %61 {offsets = [0, 3, 128], sizes = [1, 16, 128], strides = [1, 1, 1]} : vector<1x48x384xf32> to vector<1x16x128xf32>
    %64 = arith.addf %62, %63 : vector<1x16x128xf32>
    %65 = vector.extract_strided_slice %61 {offsets = [0, 6, 256], sizes = [1, 16, 128], strides = [1, 1, 1]} : vector<1x48x384xf32> to vector<1x16x128xf32>
    %66 = arith.addf %64, %65 : vector<1x16x128xf32>
    %c1_36 = arith.constant 1 : index
    %c0_37 = arith.constant 0 : index
    %c0_38 = arith.constant 0 : index
    %67 = vector.load %arg5[%c1_36, %c0_37, %c0_38] : memref<2x1x128xf32, #tpu.memory_space<vmem>>, vector<1x1x128xf32>
    %68 = vector.shape_cast %67 : vector<1x1x128xf32> to vector<1x128xf32>
    %69 = vector.shape_cast %68 : vector<1x128xf32> to vector<1x1x128xf32>
    %70 = vector.broadcast %69 : vector<1x1x128xf32> to vector<1x16x128xf32>
    %71 = arith.addf %66, %70 : vector<1x16x128xf32>
    %72 = vector.extract_strided_slice %50 {offsets = [0, 3, 0], sizes = [1, 16, 128], strides = [1, 1, 1]} : vector<1x48x128xf32> to vector<1x16x128xf32>
    %73 = arith.addf %71, %72 : vector<1x16x128xf32>
    %c0_39 = arith.constant 0 : index
    %c0_40 = arith.constant 0 : index
    %c0_41 = arith.constant 0 : index
    %74 = vector.load %arg9[%c0_39, %c0_40, %c0_41] : memref<1x48x128xf32, #tpu.memory_space<vmem>>, vector<1x16x128xf32>
    tpu.vector_store %arg9[%c0_39, %c0_40, %c0_41], %73 {strides = array<i32>} : memref<1x48x128xf32, #tpu.memory_space<vmem>>, vector<1x16x128xf32>,
    %c0_42 = arith.constant 0 : index
    %c0_43 = arith.constant 0 : index
    %c0_44 = arith.constant 0 : index
    %75 = vector.load %arg9[%c0_42, %c0_43, %c0_44] : memref<1x48x128xf32, #tpu.memory_space<vmem>>, vector<1x16x128xf32>
    %cst_45 = arith.constant dense<0.000000e+00> : vector<1x128xf32>
    %76 = vector.multi_reduction <add>, %75, %cst_45 [1] : vector<1x16x128xf32> to vector<1x128xf32>
    %cst_46 = arith.constant 6.250000e-02 : f32
    %77 = vector.broadcast %cst_46 : f32 to vector<1x128xf32>
    %78 = arith.mulf %76, %77 : vector<1x128xf32>
    %79 = arith.truncf %78 : vector<1x128xf32> to vector<1x128xbf16>
    %c0_47 = arith.constant 0 : index
    %c0_48 = arith.constant 0 : index
    %80 = vector.load %arg6[%c0_47, %c0_48] : memref<128x128xbf16, #tpu.memory_space<vmem>>, vector<128x128xbf16>
    %cst_49 = arith.constant dense<0.000000e+00> : vector<1x128xf32>
    %81 = tpu.matmul %79, %80, %cst_49 {dimension_numbers = #tpu.dot_dimension_numbers<[1], [0], [0], [1], [0, 0, 1, 1], [], []>} : vector<1x128xbf16>, vector<128x128xbf16>, vector<1x128xf32> -> vector<1x128xf32>
    %c0_50 = arith.constant 0 : index
    %c0_51 = arith.constant 0 : index
    %82 = vector.load %arg7[%c0_50, %c0_51] : memref<1x128xf32, #tpu.memory_space<vmem>>, vector<1x128xf32>
    %83 = arith.addf %81, %82 : vector<1x128xf32>
    %c0_52 = arith.constant 0 : index
    %c0_53 = arith.constant 0 : index
    %c0_54 = arith.constant 0 : index
    %84 = vector.load %arg8[%c0_52, %c0_53, %c0_54] : memref<1x1x128xf32, #tpu.memory_space<vmem>>, vector<1x1x128xf32>
    %85 = vector.shape_cast %84 : vector<1x1x128xf32> to vector<1x128xf32>
    %86 = vector.shape_cast %83 : vector<1x128xf32> to vector<1x1x128xf32>
    tpu.vector_store %arg8[%c0_52, %c0_53, %c0_54], %86 {strides = array<i32>} : memref<1x1x128xf32, #tpu.memory_space<vmem>>, vector<1x1x128xf32>,
    return
  }
  func.func @transform_0(%arg0: i32) -> (i32, i32, i32) {
    %c0_i32 = arith.constant 0 : i32
    %c0_i32_0 = arith.constant 0 : i32
    %c0_i32_1 = arith.constant 0 : i32
    return %arg0, %c0_i32, %c0_i32_0 : i32, i32, i32
  }
  func.func @transform_1(%arg0: i32) -> (i32, i32) {
    %c0_i32 = arith.constant 0 : i32
    %c0_i32_0 = arith.constant 0 : i32
    %c0_i32_1 = arith.constant 0 : i32
    return %c0_i32, %c0_i32_0 : i32, i32
  }
  func.func @transform_2(%arg0: i32) -> (i32, i32) {
    %c0_i32 = arith.constant 0 : i32
    %c0_i32_0 = arith.constant 0 : i32
    %c0_i32_1 = arith.constant 0 : i32
    return %c0_i32, %c0_i32_0 : i32, i32
  }
  func.func @transform_3(%arg0: i32) -> (i32, i32, i32) {
    %c0_i32 = arith.constant 0 : i32
    %c0_i32_0 = arith.constant 0 : i32
    %c0_i32_1 = arith.constant 0 : i32
    %c0_i32_2 = arith.constant 0 : i32
    return %c0_i32, %c0_i32_0, %c0_i32_1 : i32, i32, i32
  }
  func.func @transform_4(%arg0: i32) -> (i32, i32, i32) {
    %c0_i32 = arith.constant 0 : i32
    %c0_i32_0 = arith.constant 0 : i32
    %c0_i32_1 = arith.constant 0 : i32
    %c0_i32_2 = arith.constant 0 : i32
    return %c0_i32, %c0_i32_0, %c0_i32_1 : i32, i32, i32
  }
  func.func @transform_5(%arg0: i32) -> (i32, i32) {
    %c0_i32 = arith.constant 0 : i32
    %c0_i32_0 = arith.constant 0 : i32
    %c0_i32_1 = arith.constant 0 : i32
    return %c0_i32, %c0_i32_0 : i32, i32
  }
  func.func @transform_6(%arg0: i32) -> (i32, i32) {
    %c0_i32 = arith.constant 0 : i32
    %c0_i32_0 = arith.constant 0 : i32
    %c0_i32_1 = arith.constant 0 : i32
    return %c0_i32, %c0_i32_0 : i32, i32
  }
  func.func @transform_7(%arg0: i32) -> (i32, i32, i32) {
    %c0_i32 = arith.constant 0 : i32
    %c0_i32_0 = arith.constant 0 : i32
    %c0_i32_1 = arith.constant 0 : i32
    return %arg0, %c0_i32, %c0_i32_0 : i32, i32, i32
  }
}

module attributes {stable_mosaic.version = 11 : i64} {
  func.func @kernel(%arg0: i32, %arg1: memref<1x48x128xbf16, #tpu.memory_space<vmem>>, %arg2: memref<128x896xbf16, #tpu.memory_space<vmem>>, %arg3: memref<1x128xf32, #tpu.memory_space<vmem>>, %arg4: memref<2x128x384xbf16, #tpu.memory_space<vmem>>, %arg5: memref<2x1x128xf32, #tpu.memory_space<vmem>>, %arg6: memref<128x128xbf16, #tpu.memory_space<vmem>>, %arg7: memref<1x128xf32, #tpu.memory_space<vmem>>, %arg8: memref<1x1x128xf32, #tpu.memory_space<vmem>>, %arg9: memref<1x48x128xf32, #tpu.memory_space<vmem>>) attributes {dimension_semantics = [#tpu.dimension_semantics<parallel>], iteration_bounds = array<i64: 2>, scalar_prefetch = 0 : i64, scratch_operands = 1 : i64, tpu.core_type = #tpu.core_type<tc>, window_params = [{transform_indices = @transform_0, window_bounds = array<i64: 1, 48, 128>}, {pipeline_mode = #tpu.pipeline_mode<synchronous>, transform_indices = @transform_1, window_bounds = array<i64: 128, 896>}, {pipeline_mode = #tpu.pipeline_mode<synchronous>, transform_indices = @transform_2, window_bounds = array<i64: 1, 128>}, {pipeline_mode = #tpu.pipeline_mode<synchronous>, transform_indices = @transform_3, window_bounds = array<i64: 2, 128, 384>}, {pipeline_mode = #tpu.pipeline_mode<synchronous>, transform_indices = @transform_4, window_bounds = array<i64: 2, 1, 128>}, {pipeline_mode = #tpu.pipeline_mode<synchronous>, transform_indices = @transform_5, window_bounds = array<i64: 128, 128>}, {pipeline_mode = #tpu.pipeline_mode<synchronous>, transform_indices = @transform_6, window_bounds = array<i64: 1, 128>}, {transform_indices = @transform_7, window_bounds = array<i64: 1, 1, 128>}]} {
    %c0 = arith.constant 0 : index
    %c0_0 = arith.constant 0 : index
    %c0_1 = arith.constant 0 : index
    %0 = vector.load %arg1[%c0, %c0_0, %c0_1] : memref<1x48x128xbf16, #tpu.memory_space<vmem>>, vector<1x48x128xbf16>
    %1 = vector.shape_cast %0 : vector<1x48x128xbf16> to vector<48x128xbf16>
    %c0_2 = arith.constant 0 : index
    %c0_3 = arith.constant 0 : index
    %2 = vector.load %arg2[%c0_2, %c0_3] : memref<128x896xbf16, #tpu.memory_space<vmem>>, vector<128x896xbf16>
    %cst = arith.constant dense<0.000000e+00> : vector<48x896xf32>
    %3 = tpu.matmul %1, %2, %cst {dimension_numbers = #tpu.dot_dimension_numbers<[1], [0], [0], [1], [0, 0, 1, 1], [], []>} : vector<48x128xbf16>, vector<128x896xbf16>, vector<48x896xf32> -> vector<48x896xf32>
    %4 = vector.shape_cast %3 : vector<48x896xf32> to vector<1x48x896xf32>
    %cst_4 = arith.constant 0.000000e+00 : f32
    %5 = vector.broadcast %cst_4 : f32 to vector<1x48x128xf32>
    %c0_5 = arith.constant 0 : index
    %c0_6 = arith.constant 0 : index
    %c0_7 = arith.constant 0 : index
    %6 = vector.load %arg9[%c0_5, %c0_6, %c0_7] : memref<1x48x128xf32, #tpu.memory_space<vmem>>, vector<1x48x128xf32>
    tpu.vector_store %arg9[%c0_5, %c0_6, %c0_7], %5 {strides = array<i32>} : memref<1x48x128xf32, #tpu.memory_space<vmem>>, vector<1x48x128xf32>,
    %7 = vector.extract_strided_slice %4 {offsets = [0, 0, 0], sizes = [1, 28, 128], strides = [1, 1, 1]} : vector<1x48x896xf32> to vector<1x28x128xf32>
    %8 = vector.extract_strided_slice %4 {offsets = [0, 1, 128], sizes = [1, 28, 128], strides = [1, 1, 1]} : vector<1x48x896xf32> to vector<1x28x128xf32>
    %9 = arith.addf %7, %8 : vector<1x28x128xf32>
    %10 = vector.extract_strided_slice %4 {offsets = [0, 2, 256], sizes = [1, 28, 128], strides = [1, 1, 1]} : vector<1x48x896xf32> to vector<1x28x128xf32>
    %11 = arith.addf %9, %10 : vector<1x28x128xf32>
    %12 = vector.extract_strided_slice %4 {offsets = [0, 3, 384], sizes = [1, 28, 128], strides = [1, 1, 1]} : vector<1x48x896xf32> to vector<1x28x128xf32>
    %13 = arith.addf %11, %12 : vector<1x28x128xf32>
    %14 = vector.extract_strided_slice %4 {offsets = [0, 4, 512], sizes = [1, 28, 128], strides = [1, 1, 1]} : vector<1x48x896xf32> to vector<1x28x128xf32>
    %15 = arith.addf %13, %14 : vector<1x28x128xf32>
    %16 = vector.extract_strided_slice %4 {offsets = [0, 5, 640], sizes = [1, 28, 128], strides = [1, 1, 1]} : vector<1x48x896xf32> to vector<1x28x128xf32>
    %17 = arith.addf %15, %16 : vector<1x28x128xf32>
    %18 = vector.extract_strided_slice %4 {offsets = [0, 6, 768], sizes = [1, 28, 128], strides = [1, 1, 1]} : vector<1x48x896xf32> to vector<1x28x128xf32>
    %19 = arith.addf %17, %18 : vector<1x28x128xf32>
    %c0_8 = arith.constant 0 : index
    %c0_9 = arith.constant 0 : index
    %20 = vector.load %arg3[%c0_8, %c0_9] : memref<1x128xf32, #tpu.memory_space<vmem>>, vector<1x128xf32>
    %21 = vector.shape_cast %20 : vector<1x128xf32> to vector<1x1x128xf32>
    %22 = vector.broadcast %21 : vector<1x1x128xf32> to vector<1x28x128xf32>
    %23 = arith.addf %19, %22 : vector<1x28x128xf32>
    %c0_10 = arith.constant 0 : index
    %c0_11 = arith.constant 0 : index
    %c0_12 = arith.constant 0 : index
    %24 = vector.load %arg9[%c0_10, %c0_11, %c0_12] : memref<1x48x128xf32, #tpu.memory_space<vmem>>, vector<1x28x128xf32>
    tpu.vector_store %arg9[%c0_10, %c0_11, %c0_12], %23 {strides = array<i32>} : memref<1x48x128xf32, #tpu.memory_space<vmem>>, vector<1x28x128xf32>,
    %c0_13 = arith.constant 0 : index
    %c0_14 = arith.constant 0 : index
    %c0_15 = arith.constant 0 : index
    %25 = vector.load %arg9[%c0_13, %c0_14, %c0_15] : memref<1x48x128xf32, #tpu.memory_space<vmem>>, vector<1x48x128xf32>
    %cst_16 = arith.constant 0.000000e+00 : f32
    %26 = vector.broadcast %cst_16 : f32 to vector<1x48x128xf32>
    %27 = arith.cmpf ogt, %25, %26 : vector<1x48x128xf32>
    %cst_17 = arith.constant 1.000000e-01 : f32
    %28 = vector.broadcast %cst_17 : f32 to vector<1x48x128xf32>
    %29 = arith.mulf %28, %25 : vector<1x48x128xf32>
    %30 = arith.select %27, %25, %29 : vector<1x48x128xi1>, vector<1x48x128xf32>
    %31 = vector.shape_cast %30 : vector<1x48x128xf32> to vector<48x128xf32>
    %32 = arith.truncf %31 : vector<48x128xf32> to vector<48x128xbf16>
    %c0_18 = arith.constant 0 : index
    %c0_19 = arith.constant 0 : index
    %c0_20 = arith.constant 0 : index
    %33 = vector.load %arg4[%c0_18, %c0_19, %c0_20] : memref<2x128x384xbf16, #tpu.memory_space<vmem>>, vector<1x128x384xbf16>
    %34 = vector.shape_cast %33 : vector<1x128x384xbf16> to vector<128x384xbf16>
    %cst_21 = arith.constant dense<0.000000e+00> : vector<48x384xf32>
    %35 = tpu.matmul %32, %34, %cst_21 {dimension_numbers = #tpu.dot_dimension_numbers<[1], [0], [0], [1], [0, 0, 1, 1], [], []>} : vector<48x128xbf16>, vector<128x384xbf16>, vector<48x384xf32> -> vector<48x384xf32>
    %36 = vector.shape_cast %35 : vector<48x384xf32> to vector<1x48x384xf32>
    %37 = vector.extract_strided_slice %36 {offsets = [0, 0, 0], sizes = [1, 22, 128], strides = [1, 1, 1]} : vector<1x48x384xf32> to vector<1x22x128xf32>
    %38 = vector.extract_strided_slice %36 {offsets = [0, 3, 128], sizes = [1, 22, 128], strides = [1, 1, 1]} : vector<1x48x384xf32> to vector<1x22x128xf32>
    %39 = arith.addf %37, %38 : vector<1x22x128xf32>
    %40 = vector.extract_strided_slice %36 {offsets = [0, 6, 256], sizes = [1, 22, 128], strides = [1, 1, 1]} : vector<1x48x384xf32> to vector<1x22x128xf32>
    %41 = arith.addf %39, %40 : vector<1x22x128xf32>
    %c0_22 = arith.constant 0 : index
    %c0_23 = arith.constant 0 : index
    %c0_24 = arith.constant 0 : index
    %42 = vector.load %arg5[%c0_22, %c0_23, %c0_24] : memref<2x1x128xf32, #tpu.memory_space<vmem>>, vector<1x1x128xf32>
    %43 = vector.shape_cast %42 : vector<1x1x128xf32> to vector<1x128xf32>
    %44 = vector.shape_cast %43 : vector<1x128xf32> to vector<1x1x128xf32>
    %45 = vector.broadcast %44 : vector<1x1x128xf32> to vector<1x22x128xf32>
    %46 = arith.addf %41, %45 : vector<1x22x128xf32>
    %47 = vector.extract_strided_slice %25 {offsets = [0, 3, 0], sizes = [1, 22, 128], strides = [1, 1, 1]} : vector<1x48x128xf32> to vector<1x22x128xf32>
    %48 = arith.addf %46, %47 : vector<1x22x128xf32>
    %c0_25 = arith.constant 0 : index
    %c0_26 = arith.constant 0 : index
    %c0_27 = arith.constant 0 : index
    %49 = vector.load %arg9[%c0_25, %c0_26, %c0_27] : memref<1x48x128xf32, #tpu.memory_space<vmem>>, vector<1x22x128xf32>
    tpu.vector_store %arg9[%c0_25, %c0_26, %c0_27], %48 {strides = array<i32>} : memref<1x48x128xf32, #tpu.memory_space<vmem>>, vector<1x22x128xf32>,
    %c0_28 = arith.constant 0 : index
    %c0_29 = arith.constant 0 : index
    %c0_30 = arith.constant 0 : index
    %50 = vector.load %arg9[%c0_28, %c0_29, %c0_30] : memref<1x48x128xf32, #tpu.memory_space<vmem>>, vector<1x48x128xf32>
    %cst_31 = arith.constant 0.000000e+00 : f32
    %51 = vector.broadcast %cst_31 : f32 to vector<1x48x128xf32>
    %52 = arith.cmpf ogt, %50, %51 : vector<1x48x128xf32>
    %cst_32 = arith.constant 1.000000e-01 : f32
    %53 = vector.broadcast %cst_32 : f32 to vector<1x48x128xf32>
    %54 = arith.mulf %53, %50 : vector<1x48x128xf32>
    %55 = arith.select %52, %50, %54 : vector<1x48x128xi1>, vector<1x48x128xf32>
    %56 = vector.shape_cast %55 : vector<1x48x128xf32> to vector<48x128xf32>
    %57 = arith.truncf %56 : vector<48x128xf32> to vector<48x128xbf16>
    %c1 = arith.constant 1 : index
    %c0_33 = arith.constant 0 : index
    %c0_34 = arith.constant 0 : index
    %58 = vector.load %arg4[%c1, %c0_33, %c0_34] : memref<2x128x384xbf16, #tpu.memory_space<vmem>>, vector<1x128x384xbf16>
    %59 = vector.shape_cast %58 : vector<1x128x384xbf16> to vector<128x384xbf16>
    %cst_35 = arith.constant dense<0.000000e+00> : vector<48x384xf32>
    %60 = tpu.matmul %57, %59, %cst_35 {dimension_numbers = #tpu.dot_dimension_numbers<[1], [0], [0], [1], [0, 0, 1, 1], [], []>} : vector<48x128xbf16>, vector<128x384xbf16>, vector<48x384xf32> -> vector<48x384xf32>
    %61 = vector.shape_cast %60 : vector<48x384xf32> to vector<1x48x384xf32>
    %62 = vector.extract_strided_slice %61 {offsets = [0, 0, 0], sizes = [1, 16, 128], strides = [1, 1, 1]} : vector<1x48x384xf32> to vector<1x16x128xf32>
    %63 = vector.extract_strided_slice %61 {offsets = [0, 3, 128], sizes = [1, 16, 128], strides = [1, 1, 1]} : vector<1x48x384xf32> to vector<1x16x128xf32>
    %64 = arith.addf %62, %63 : vector<1x16x128xf32>
    %65 = vector.extract_strided_slice %61 {offsets = [0, 6, 256], sizes = [1, 16, 128], strides = [1, 1, 1]} : vector<1x48x384xf32> to vector<1x16x128xf32>
    %66 = arith.addf %64, %65 : vector<1x16x128xf32>
    %c1_36 = arith.constant 1 : index
    %c0_37 = arith.constant 0 : index
    %c0_38 = arith.constant 0 : index
    %67 = vector.load %arg5[%c1_36, %c0_37, %c0_38] : memref<2x1x128xf32, #tpu.memory_space<vmem>>, vector<1x1x128xf32>
    %68 = vector.shape_cast %67 : vector<1x1x128xf32> to vector<1x128xf32>
    %69 = vector.shape_cast %68 : vector<1x128xf32> to vector<1x1x128xf32>
    %70 = vector.broadcast %69 : vector<1x1x128xf32> to vector<1x16x128xf32>
    %71 = arith.addf %66, %70 : vector<1x16x128xf32>
    %72 = vector.extract_strided_slice %50 {offsets = [0, 3, 0], sizes = [1, 16, 128], strides = [1, 1, 1]} : vector<1x48x128xf32> to vector<1x16x128xf32>
    %73 = arith.addf %71, %72 : vector<1x16x128xf32>
    %c0_39 = arith.constant 0 : index
    %c0_40 = arith.constant 0 : index
    %c0_41 = arith.constant 0 : index
    %74 = vector.load %arg9[%c0_39, %c0_40, %c0_41] : memref<1x48x128xf32, #tpu.memory_space<vmem>>, vector<1x16x128xf32>
    tpu.vector_store %arg9[%c0_39, %c0_40, %c0_41], %73 {strides = array<i32>} : memref<1x48x128xf32, #tpu.memory_space<vmem>>, vector<1x16x128xf32>,
    %c0_42 = arith.constant 0 : index
    %c0_43 = arith.constant 0 : index
    %c0_44 = arith.constant 0 : index
    %75 = vector.load %arg9[%c0_42, %c0_43, %c0_44] : memref<1x48x128xf32, #tpu.memory_space<vmem>>, vector<1x16x128xf32>
    %cst_45 = arith.constant dense<0.000000e+00> : vector<1x128xf32>
    %76 = vector.multi_reduction <add>, %75, %cst_45 [1] : vector<1x16x128xf32> to vector<1x128xf32>
    %cst_46 = arith.constant 6.250000e-02 : f32
    %77 = vector.broadcast %cst_46 : f32 to vector<1x128xf32>
    %78 = arith.mulf %76, %77 : vector<1x128xf32>
    %79 = arith.truncf %78 : vector<1x128xf32> to vector<1x128xbf16>
    %c0_47 = arith.constant 0 : index
    %c0_48 = arith.constant 0 : index
    %80 = vector.load %arg6[%c0_47, %c0_48] : memref<128x128xbf16, #tpu.memory_space<vmem>>, vector<128x128xbf16>
    %cst_49 = arith.constant dense<0.000000e+00> : vector<1x128xf32>
    %81 = tpu.matmul %79, %80, %cst_49 {dimension_numbers = #tpu.dot_dimension_numbers<[1], [0], [0], [1], [0, 0, 1, 1], [], []>} : vector<1x128xbf16>, vector<128x128xbf16>, vector<1x128xf32> -> vector<1x128xf32>
    %c0_50 = arith.constant 0 : index
    %c0_51 = arith.constant 0 : index
    %82 = vector.load %arg7[%c0_50, %c0_51] : memref<1x128xf32, #tpu.memory_space<vmem>>, vector<1x128xf32>
    %83 = arith.addf %81, %82 : vector<1x128xf32>
    %c0_52 = arith.constant 0 : index
    %c0_53 = arith.constant 0 : index
    %c0_54 = arith.constant 0 : index
    %84 = vector.load %arg8[%c0_52, %c0_53, %c0_54] : memref<1x1x128xf32, #tpu.memory_space<vmem>>, vector<1x1x128xf32>
    %85 = vector.shape_cast %84 : vector<1x1x128xf32> to vector<1x128xf32>
    %86 = vector.shape_cast %83 : vector<1x128xf32> to vector<1x1x128xf32>
    tpu.vector_store %arg8[%c0_52, %c0_53, %c0_54], %86 {strides = array<i32>} : memref<1x1x128xf32, #tpu.memory_space<vmem>>, vector<1x1x128xf32>,
    return
  }
  func.func @transform_0(%arg0: i32) -> (i32, i32, i32) {
    %c0_i32 = arith.constant 0 : i32
    %c0_i32_0 = arith.constant 0 : i32
    %c0_i32_1 = arith.constant 0 : i32
    return %arg0, %c0_i32, %c0_i32_0 : i32, i32, i32
  }
  func.func @transform_1(%arg0: i32) -> (i32, i32) {
    %c0_i32 = arith.constant 0 : i32
    %c0_i32_0 = arith.constant 0 : i32
    %c0_i32_1 = arith.constant 0 : i32
    return %c0_i32, %c0_i32_0 : i32, i32
  }
  func.func @transform_2(%arg0: i32) -> (i32, i32) {
    %c0_i32 = arith.constant 0 : i32
    %c0_i32_0 = arith.constant 0 : i32
    %c0_i32_1 = arith.constant 0 : i32
    return %c0_i32, %c0_i32_0 : i32, i32
  }
  func.func @transform_3(%arg0: i32) -> (i32, i32, i32) {
    %c0_i32 = arith.constant 0 : i32
    %c0_i32_0 = arith.constant 0 : i32
    %c0_i32_1 = arith.constant 0 : i32
    %c0_i32_2 = arith.constant 0 : i32
    return %c0_i32, %c0_i32_0, %c0_i32_1 : i32, i32, i32
  }
  func.func @transform_4(%arg0: i32) -> (i32, i32, i32) {
    %c0_i32 = arith.constant 0 : i32
    %c0_i32_0 = arith.constant 0 : i32
    %c0_i32_1 = arith.constant 0 : i32
    %c0_i32_2 = arith.constant 0 : i32
    return %c0_i32, %c0_i32_0, %c0_i32_1 : i32, i32, i32
  }
  func.func @transform_5(%arg0: i32) -> (i32, i32) {
    %c0_i32 = arith.constant 0 : i32
    %c0_i32_0 = arith.constant 0 : i32
    %c0_i32_1 = arith.constant 0 : i32
    return %c0_i32, %c0_i32_0 : i32, i32
  }
  func.func @transform_6(%arg0: i32) -> (i32, i32) {
    %c0_i32 = arith.constant 0 : i32
    %c0_i32_0 = arith.constant 0 : i32
    %c0_i32_1 = arith.constant 0 : i32
    return %c0_i32, %c0_i32_0 : i32, i32
  }
  func.func @transform_7(%arg0: i32) -> (i32, i32, i32) {
    %c0_i32 = arith.constant 0 : i32
    %c0_i32_0 = arith.constant 0 : i32
    %c0_i32_1 = arith.constant 0 : i32
    return %arg0, %c0_i32, %c0_i32_0 : i32, i32, i32
  }
}

</mosaic_0001>

<llo_original>
// kernel: tpu_custom_call.1
$region0: #{tpu_custom_call.1}
  #allocation0 [shape = 'u32[]', space=smem, size = 0x4, offset = 0x4, fixed_abs, tag = 'smem constant byte address 0x4 - core index']
  #allocation1 [shape = 'u32[72,128]{1,0:T(1,128)}', space=vmem, size = 0x9000, scoped, tag = 'internal scratch']
  #allocation2 [shape = 'f32[1,48,128]{2,1,0:T(8,128)}', space=vmem, size = 0x6000, scoped, tag = 'scratch operand']
  %s0 = inlined_call_operand.hbm [shape: bf16[2,48,128], index: 0, kind: input, shape index: {}]
  %s1 = inlined_call_operand.hbm [shape: bf16[128,896], index: 1, kind: input, shape index: {}]
  %s2 = inlined_call_operand.vmem [shape: f32[1,128], index: 2, kind: input, shape index: {}]
  %s3 = inlined_call_operand.hbm [shape: bf16[2,128,384], index: 3, kind: input, shape index: {}]
  %s4 = inlined_call_operand.vmem [shape: f32[2,1,128], index: 4, kind: input, shape index: {}]
  %s5 = inlined_call_operand.hbm [shape: bf16[128,128], index: 5, kind: input, shape index: {}]
  %s6 = inlined_call_operand.vmem [shape: f32[1,128], index: 6, kind: input, shape index: {}]
  %s7 = inlined_call_operand.hbm [shape: f32[2,1,128], index: 7, kind: output, shape index: {}]
  %s8 = sld [smem:[#allocation0]]
  $region77: #{tpu_custom_call.1} parent=0
    _
  %s10 = ssub.s32 1, %s8
  %s11 = scalar_select 0, %s10, %s8
  $region1: #{tpu_custom_call.1} parent=0
    #allocation3 [shape = 'u8[24576]{0}', space=vmem, size = 0x6000, scoped, tag = 'input window, operand 0']
    #allocation4 [shape = 's32[2]{0}', space=sflag, size = 0x8, scoped, tag = 'scoped memory for tpu_custom_call.1']
    #allocation5 [shape = 's32[2]{0}', space=sflag, size = 0x8, scoped, tag = 'scoped memory for tpu_custom_call.1']
    #allocation6 [shape = 'u8[229376]{0}', space=vmem, size = 0x38000, scoped, tag = 'input window, operand 1, single buffered']
    #allocation7 [shape = 's32[1]{0}', space=sflag, size = 0x4, scoped, tag = 'scoped memory for tpu_custom_call.1']
    #allocation8 [shape = 'u8[196608]{0}', space=vmem, size = 0x30000, scoped, tag = 'input window, operand 3, single buffered']
    #allocation9 [shape = 'u8[32768]{0}', space=vmem, size = 0x8000, scoped, tag = 'input window, operand 5, single buffered']
    #allocation10 [shape = 's32[1]{0}', space=sflag, size = 0x4, scoped, tag = 'scoped memory for tpu_custom_call.1']
    #allocation11 [shape = 'u8[1024]{0}', space=vmem, size = 0x400, scoped, tag = 'output window, operand 0']
    %12 = vsyncpa [#allocation4], 0
    %s13 = scalar_lea.sflag [#allocation4], 1
    %14 = vsyncpa %s13, 0
    %15 = vsyncpa [#allocation7], 0
    %16 = vsyncpa [#allocation10], 0
    %17 = vsyncpa [#allocation5], 0
    %s18 = scalar_lea.sflag [#allocation5], 1
    %19 = vsyncpa %s18, 0
    loop: start=0, step=1, limit=4
    $region2: #{tpu_custom_call.1} parent=1 // loop_pre_header
      _
    $region3: #{tpu_custom_call.1} parent=1 // loop_header
      %s21 = sphi 0, %s25
      %p22 = scmp.ge.s32.totalorder %s21, 4
      %s31 = sphi 0, %s33
      %s34 = sphi 0, %s31
      %s35 = sphi 0, %s34
      %s51 = sphi 0, %s35
      %s55 = sphi 0, %s55
      %s57 = sphi 0, %s55
      %s58 = sphi 0, %s57
      %s72 = sphi 0, %s58
      %s76 = sphi 0, %s76
      %s78 = sphi 0, %s76
      %s79 = sphi 0, %s78
      %s93 = sphi 0, %s79
      %s97 = sphi 0, %s97
      %s99 = sphi 0, %s97
      %s100 = sphi 0, %s99
      %s114 = sphi 0, %s100
      %s118 = sphi 0, %s118
      %s120 = sphi 0, %s118
      %s121 = sphi 0, %s120
      %s135 = sphi 0, %s121
      %s139 = sphi 0, %s139
      %s141 = sphi 0, %s139
      %s142 = sphi 0, %s141
      %s156 = sphi 0, %s142
      %s160 = sphi 0, %s160
      %s162 = sphi 0, %s160
      %s163 = sphi 0, %s162
      %s177 = sphi 0, %s163
      %s183 = sphi 0, %s185
      %s186 = sphi 0, %s183
      %s187 = sphi 0, %s186
      %s203 = sphi 0, %s187
    $region4: #{tpu_custom_call.1} parent=1 // loop_header_branch
      %24 = sbr.rel (%p22) target = $region8
    $region5: #{tpu_custom_call.1} parent=1 // loop_body
      %s26 = ssub.s32 %s21, 1
      %s27 = ssub.s32 %s21, 2
      %s28 = sadd.s32 %s21, 1
      %s29 = ssub.s32 %s21, %s28
      %p30 = scmp.eq.s32.totalorder %s29, 0
      %s32 = sadd.s32 %s31, 1
      %s33 = scalar_select %p30, %s31, %s32
      %p36 = pneg %p30
      %p37 = scmp.eq.s32.totalorder %s21, 1
      %p38 = por %p36, %p37
      %p39 = scmp.ne.s32.totalorder %s31, %s34
      %p40 = scmp.eq.s32.totalorder %s21, 0
      %p41 = por %p39, %p40
      %p42 = scmp.ne.s32.totalorder %s31, %s34
      %p43 = scmp.eq.s32.totalorder %s26, 1
      %p44 = por %p42, %p43
      %p45 = scmp.ne.s32.totalorder %s34, %s35
      %p46 = scmp.eq.s32.totalorder %s26, 0
      %p47 = por %p45, %p46
      %p48 = scmp.ne.s32.totalorder %s34, %s35
      %p49 = scmp.eq.s32.totalorder %s27, 1
      %p50 = por %p48, %p49
      %p52 = scmp.ne.s32.totalorder %s35, %s51
      %p53 = scmp.eq.s32.totalorder %s27, 0
      %p54 = por %p52, %p53
      %s56 = sadd.s32 %s55, 1
      %p59 = scmp.eq.s32.totalorder %s21, 1
      %p60 = scmp.ne.s32.totalorder %s55, %s57
      %p61 = scmp.eq.s32.totalorder %s21, 0
      %p62 = por %p60, %p61
      %p63 = scmp.ne.s32.totalorder %s55, %s57
      %p64 = scmp.eq.s32.totalorder %s26, 1
      %p65 = por %p63, %p64
      %p66 = scmp.ne.s32.totalorder %s57, %s58
      %p67 = scmp.eq.s32.totalorder %s26, 0
      %p68 = por %p66, %p67
      %p69 = scmp.ne.s32.totalorder %s57, %s58
      %p70 = scmp.eq.s32.totalorder %s27, 1
      %p71 = por %p69, %p70
      %p73 = scmp.ne.s32.totalorder %s58, %s72
      %p74 = scmp.eq.s32.totalorder %s27, 0
      %p75 = por %p73, %p74
      %s77 = sadd.s32 %s76, 1
      %p80 = scmp.eq.s32.totalorder %s21, 1
      %p81 = scmp.ne.s32.totalorder %s76, %s78
      %p82 = scmp.eq.s32.totalorder %s21, 0
      %p83 = por %p81, %p82
      %p84 = scmp.ne.s32.totalorder %s76, %s78
      %p85 = scmp.eq.s32.totalorder %s26, 1
      %p86 = por %p84, %p85
      %p87 = scmp.ne.s32.totalorder %s78, %s79
      %p88 = scmp.eq.s32.totalorder %s26, 0
      %p89 = por %p87, %p88
      %p90 = scmp.ne.s32.totalorder %s78, %s79
      %p91 = scmp.eq.s32.totalorder %s27, 1
      %p92 = por %p90, %p91
      %p94 = scmp.ne.s32.totalorder %s79, %s93
      %p95 = scmp.eq.s32.totalorder %s27, 0
      %p96 = por %p94, %p95
      %s98 = sadd.s32 %s97, 1
      %p101 = scmp.eq.s32.totalorder %s21, 1
      %p102 = scmp.ne.s32.totalorder %s97, %s99
      %p103 = scmp.eq.s32.totalorder %s21, 0
      %p104 = por %p102, %p103
      %p105 = scmp.ne.s32.totalorder %s97, %s99
      %p106 = scmp.eq.s32.totalorder %s26, 1
      %p107 = por %p105, %p106
      %p108 = scmp.ne.s32.totalorder %s99, %s100
      %p109 = scmp.eq.s32.totalorder %s26, 0
      %p110 = por %p108, %p109
      %p111 = scmp.ne.s32.totalorder %s99, %s100
      %p112 = scmp.eq.s32.totalorder %s27, 1
      %p113 = por %p111, %p112
      %p115 = scmp.ne.s32.totalorder %s100, %s114
      %p116 = scmp.eq.s32.totalorder %s27, 0
      %p117 = por %p115, %p116
      %s119 = sadd.s32 %s118, 1
      %p122 = scmp.eq.s32.totalorder %s21, 1
      %p123 = scmp.ne.s32.totalorder %s118, %s120
      %p124 = scmp.eq.s32.totalorder %s21, 0
      %p125 = por %p123, %p124
      %p126 = scmp.ne.s32.totalorder %s118, %s120
      %p127 = scmp.eq.s32.totalorder %s26, 1
      %p128 = por %p126, %p127
      %p129 = scmp.ne.s32.totalorder %s120, %s121
      %p130 = scmp.eq.s32.totalorder %s26, 0
      %p131 = por %p129, %p130
      %p132 = scmp.ne.s32.totalorder %s120, %s121
      %p133 = scmp.eq.s32.totalorder %s27, 1
      %p134 = por %p132, %p133
      %p136 = scmp.ne.s32.totalorder %s121, %s135
      %p137 = scmp.eq.s32.totalorder %s27, 0
      %p138 = por %p136, %p137
      %s140 = sadd.s32 %s139, 1
      %p143 = scmp.eq.s32.totalorder %s21, 1
      %p144 = scmp.ne.s32.totalorder %s139, %s141
      %p145 = scmp.eq.s32.totalorder %s21, 0
      %p146 = por %p144, %p145
      %p147 = scmp.ne.s32.totalorder %s139, %s141
      %p148 = scmp.eq.s32.totalorder %s26, 1
      %p149 = por %p147, %p148
      %p150 = scmp.ne.s32.totalorder %s141, %s142
      %p151 = scmp.eq.s32.totalorder %s26, 0
      %p152 = por %p150, %p151
      %p153 = scmp.ne.s32.totalorder %s141, %s142
      %p154 = scmp.eq.s32.totalorder %s27, 1
      %p155 = por %p153, %p154
      %p157 = scmp.ne.s32.totalorder %s142, %s156
      %p158 = scmp.eq.s32.totalorder %s27, 0
      %p159 = por %p157, %p158
      %s161 = sadd.s32 %s160, 1
      %p164 = scmp.eq.s32.totalorder %s21, 1
      %p165 = scmp.ne.s32.totalorder %s160, %s162
      %p166 = scmp.eq.s32.totalorder %s21, 0
      %p167 = por %p165, %p166
      %p168 = scmp.ne.s32.totalorder %s160, %s162
      %p169 = scmp.eq.s32.totalorder %s26, 1
      %p170 = por %p168, %p169
      %p171 = scmp.ne.s32.totalorder %s162, %s163
      %p172 = scmp.eq.s32.totalorder %s26, 0
      %p173 = por %p171, %p172
      %p174 = scmp.ne.s32.totalorder %s162, %s163
      %p175 = scmp.eq.s32.totalorder %s27, 1
      %p176 = por %p174, %p175
      %p178 = scmp.ne.s32.totalorder %s163, %s177
      %p179 = scmp.eq.s32.totalorder %s27, 0
      %p180 = por %p178, %p179
      %s181 = ssub.s32 %s21, %s28
      %p182 = scmp.eq.s32.totalorder %s181, 0
      %s184 = sadd.s32 %s183, 1
      %s185 = scalar_select %p182, %s183, %s184
      %p188 = pneg %p182
      %p189 = scmp.eq.s32.totalorder %s21, 1
      %p190 = por %p188, %p189
      %p191 = scmp.ne.s32.totalorder %s183, %s186
      %p192 = scmp.eq.s32.totalorder %s21, 0
      %p193 = por %p191, %p192
      %p194 = scmp.ne.s32.totalorder %s183, %s186
      %p195 = scmp.eq.s32.totalorder %s26, 1
      %p196 = por %p194, %p195
      %p197 = scmp.ne.s32.totalorder %s186, %s187
      %p198 = scmp.eq.s32.totalorder %s26, 0
      %p199 = por %p197, %p198
      %p200 = scmp.ne.s32.totalorder %s186, %s187
      %p201 = scmp.eq.s32.totalorder %s27, 1
      %p202 = por %p200, %p201
      %p204 = scmp.ne.s32.totalorder %s187, %s203
      %p205 = scmp.eq.s32.totalorder %s27, 0
      %p206 = por %p204, %p205
      %p207 = scmp.le.s32.totalorder 1, %s21
      %p208 = scmp.lt.s32.totalorder %s21, 3
      %p209 = pnand %p207, %p208
      %p210 = pneg %p209
      // Predicated region
      $region9: #{tpu_custom_call.1} parent=5 // pred_check
        _
      $region10: #{tpu_custom_call.1} parent=5 // pred_check_branch
        %212 = sbr.rel (%p209) target = $region12
      $region11: #{tpu_custom_call.1} parent=5 // pred_region
        %s213 = ssub.s32 %s21, 1
        // Predicated region
        $region13: #{tpu_custom_call.1} parent=11 // pred_check
          %p214 = pneg %p68
        $region14: #{tpu_custom_call.1} parent=11 // pred_check_branch
          %216 = sbr.rel (%p214) target = $region16
        $region15: #{tpu_custom_call.1} parent=11 // pred_region
          %218 = vsyncadd [#allocation7], 0
          %s219 = sshll.u32 %s1, 4
          %s220 = int_to_ptr.hbm [resolvable:$true] %s219
          %s221 = sshll.u32 [#allocation6], 4
          %s222 = int_to_ptr.vmem [resolvable:$true] %s221
          %227 = dma.hbm_to_vmem [thread:$0]  %s220, 7168, %s222, [#allocation7], 448, 448, 28
        $region16: #{tpu_custom_call.1} parent=11 // pred_fallthru
          _
        // Predicated region
        $region17: #{tpu_custom_call.1} parent=11 // pred_check
          %p228 = pneg %p89
        $region18: #{tpu_custom_call.1} parent=11 // pred_check_branch
          %230 = sbr.rel (%p228) target = $region20
        $region19: #{tpu_custom_call.1} parent=11 // pred_region
          _
        $region20: #{tpu_custom_call.1} parent=11 // pred_fallthru
          _
        // Predicated region
        $region21: #{tpu_custom_call.1} parent=11 // pred_check
          %p231 = pneg %p110
        $region22: #{tpu_custom_call.1} parent=11 // pred_check_branch
          %233 = sbr.rel (%p231) target = $region24
        $region23: #{tpu_custom_call.1} parent=11 // pred_region
          %235 = vsyncadd [#allocation7], 0
          %s236 = sshll.u32 %s3, 4
          %s237 = int_to_ptr.hbm [resolvable:$true] %s236
          %s238 = sshll.u32 [#allocation8], 4
          %s239 = int_to_ptr.vmem [resolvable:$true] %s238
          %244 = dma.hbm_to_vmem [thread:$0]  %s237, 6144, %s239, [#allocation7], 192, 192, 12
        $region24: #{tpu_custom_call.1} parent=11 // pred_fallthru
          _
        // Predicated region
        $region25: #{tpu_custom_call.1} parent=11 // pred_check
          %p245 = pneg %p131
        $region26: #{tpu_custom_call.1} parent=11 // pred_check_branch
          %247 = sbr.rel (%p245) target = $region28
        $region27: #{tpu_custom_call.1} parent=11 // pred_region
          _
        $region28: #{tpu_custom_call.1} parent=11 // pred_fallthru
          _
        // Predicated region
        $region29: #{tpu_custom_call.1} parent=11 // pred_check
          %p248 = pneg %p152
        $region30: #{tpu_custom_call.1} parent=11 // pred_check_branch
          %250 = sbr.rel (%p248) target = $region32
        $region31: #{tpu_custom_call.1} parent=11 // pred_region
          %252 = vsyncadd [#allocation10], 0
          %s253 = sshll.u32 %s5, 4
          %s254 = int_to_ptr.hbm [resolvable:$true] %s253
          %s255 = sshll.u32 [#allocation9], 4
          %s256 = int_to_ptr.vmem [resolvable:$true] %s255
          %261 = dma.hbm_to_vmem [thread:$0]  %s254, 1024, %s256, [#allocation10], 64, 64, 4
        $region32: #{tpu_custom_call.1} parent=11 // pred_fallthru
          _
        // Predicated region
        $region33: #{tpu_custom_call.1} parent=11 // pred_check
          %p262 = pneg %p173
        $region34: #{tpu_custom_call.1} parent=11 // pred_check_branch
          %264 = sbr.rel (%p262) target = $region36
        $region35: #{tpu_custom_call.1} parent=11 // pred_region
          _
        $region36: #{tpu_custom_call.1} parent=11 // pred_fallthru
          _
      $region12: #{tpu_custom_call.1} parent=5 // pred_fallthru
        _
      %p265 = scmp.lt.s32.totalorder %s21, 2
      // Predicated region
      $region37: #{tpu_custom_call.1} parent=5 // pred_check
        %p266 = pneg %p265
      $region38: #{tpu_custom_call.1} parent=5 // pred_check_branch
        %268 = sbr.rel (%p266) target = $region40
      $region39: #{tpu_custom_call.1} parent=5 // pred_region
        // Predicated region
        $region41: #{tpu_custom_call.1} parent=39 // pred_check
          %p269 = pneg %p41
        $region42: #{tpu_custom_call.1} parent=39 // pred_check_branch
          %271 = sbr.rel (%p269) target = $region44
        $region43: #{tpu_custom_call.1} parent=39 // pred_region
          %s272 = sand.u32 %s31, 1
          %s273 = scalar_lea.sflag [#allocation4], %s272
          %s274 = sand.u32 %s31, 1
          %s275 = smul.addr %s274, 24
          %s276 = scalar_lea.vmem [#allocation3], %s275
          %278 = vsyncadd %s273, 0
          %s279 = smul.addr %s21, 6
          %s280 = smul.addr %s279, 4
          %s281 = scalar_lea.hbm %s0, %s280
          %s282 = sshll.u32 %s281, 4
          %s283 = int_to_ptr.hbm [resolvable:$true] %s282
          %s284 = sshll.u32 %s276, 4
          %s285 = int_to_ptr.vmem [resolvable:$true] %s284
          %290 = dma.hbm_to_vmem [thread:$0]  %s283, 384, %s285, %s273, 64, 64, 4
        $region44: #{tpu_custom_call.1} parent=39 // pred_fallthru
          _
      $region40: #{tpu_custom_call.1} parent=5 // pred_fallthru
        _
      %p291 = scmp.le.s32.totalorder 1, %s21
      %p292 = scmp.lt.s32.totalorder %s21, 3
      %p293 = pnand %p291, %p292
      %p294 = pneg %p293
      // Predicated region
      $region45: #{tpu_custom_call.1} parent=5 // pred_check
        _
      $region46: #{tpu_custom_call.1} parent=5 // pred_check_branch
        %296 = sbr.rel (%p293) target = $region48
      $region47: #{tpu_custom_call.1} parent=5 // pred_region
        %s297 = ssub.s32 %s21, 1
        %s298 = sand.u32 %s34, 1
        %s299 = scalar_lea.sflag [#allocation4], %s298
        %s300 = sand.u32 %s34, 1
        %s301 = smul.addr %s300, 24
        %s302 = scalar_lea.vmem [#allocation3], %s301
        // Predicated region
        $region49: #{tpu_custom_call.1} parent=47 // pred_check
          %p303 = pneg %p47
        $region50: #{tpu_custom_call.1} parent=47 // pred_check_branch
          %305 = sbr.rel (%p303) target = $region52
        $region51: #{tpu_custom_call.1} parent=47 // pred_region
          %307 = dma.done %s299, 384
        $region52: #{tpu_custom_call.1} parent=47 // pred_fallthru
          _
        // Predicated region
        $region53: #{tpu_custom_call.1} parent=47 // pred_check
          %p308 = pneg %p68
        $region54: #{tpu_custom_call.1} parent=47 // pred_check_branch
          %310 = sbr.rel (%p308) target = $region56
        $region55: #{tpu_custom_call.1} parent=47 // pred_region
          %312 = dma.done [#allocation7], 7168
        $region56: #{tpu_custom_call.1} parent=47 // pred_fallthru
          _
        // Predicated region
        $region57: #{tpu_custom_call.1} parent=47 // pred_check
          %p313 = pneg %p110
        $region58: #{tpu_custom_call.1} parent=47 // pred_check_branch
          %315 = sbr.rel (%p313) target = $region60
        $region59: #{tpu_custom_call.1} parent=47 // pred_region
          %317 = dma.done [#allocation7], 6144
        $region60: #{tpu_custom_call.1} parent=47 // pred_fallthru
          _
        // Predicated region
        $region61: #{tpu_custom_call.1} parent=47 // pred_check
          %p318 = pneg %p152
        $region62: #{tpu_custom_call.1} parent=47 // pred_check_branch
          %320 = sbr.rel (%p318) target = $region64
        $region63: #{tpu_custom_call.1} parent=47 // pred_region
          %322 = dma.done [#allocation10], 1024
        $region64: #{tpu_custom_call.1} parent=47 // pred_fallthru
          _
        %s323 = sand.u32 %s34, 1
        %s324 = scalar_lea.sflag [#allocation4], %s323
        %s325 = sand.u32 %s34, 1
        %s326 = smul.addr %s325, 24
        %s327 = scalar_lea.vmem [#allocation3], %s326
        %p328 = pneg %p47
        %p329 = pneg %p44
        %p330 = pneg %p68
        %p331 = pneg %p65
        %p332 = pneg %p89
        %p333 = pneg %p86
        %p334 = pneg %p110
        %p335 = pneg %p107
        %p336 = pneg %p131
        %p337 = pneg %p128
        %p338 = pneg %p152
        %p339 = pneg %p149
        %p340 = pneg %p173
        %p341 = pneg %p170
        %p342 = pneg %p199
        %p343 = pneg %p196
        %s344 = sand.u32 %s186, 1
        %s345 = scalar_lea.sflag [#allocation5], %s344
        %s346 = sand.u32 %s186, 1
        %s347 = scalar_lea.vmem [#allocation11], %s346
        %v348 = vld [vmem:[%s302] sm:$0xf]
        %v349 = vld [vmem:[%s302 + $0x4] sm:$0xf]
        %v350 = vld [vmem:[%s302 + $0x8] sm:$0xf]
        %v351 = vld [vmem:[%s302 + $0xc] sm:$0xf]
        %v352 = vld [vmem:[%s302 + $0x10] sm:$0xf]
        %v353 = vld [vmem:[%s302 + $0x14] sm:$0xf]
        %v354 = vld [vmem:[#allocation6] sm:$0xff]
        %v355 = vld [vmem:[#allocation6 + $0x8] sm:$0xff]
        %v356 = vld [vmem:[#allocation6 + $0x10] sm:$0xff]
        %v357 = vld [vmem:[#allocation6 + $0x18] sm:$0xf]
        %v358 = vld [vmem:[#allocation6 + $0x1c] sm:$0xff]
        %v359 = vld [vmem:[#allocation6 + $0x24] sm:$0xff]
        %v360 = vld [vmem:[#allocation6 + $0x2c] sm:$0xff]
        %v361 = vld [vmem:[#allocation6 + $0x34] sm:$0xf]
        %v362 = vld [vmem:[#allocation6 + $0x38] sm:$0xff]
        %v363 = vld [vmem:[#allocation6 + $0x40] sm:$0xff]
        %v364 = vld [vmem:[#allocation6 + $0x48] sm:$0xff]
        %v365 = vld [vmem:[#allocation6 + $0x50] sm:$0xf]
        %v366 = vld [vmem:[#allocation6 + $0x54] sm:$0xff]
        %v367 = vld [vmem:[#allocation6 + $0x5c] sm:$0xff]
        %v368 = vld [vmem:[#allocation6 + $0x64] sm:$0xff]
        %v369 = vld [vmem:[#allocation6 + $0x6c] sm:$0xf]
        %v370 = vld [vmem:[#allocation6 + $0x70] sm:$0xff]
        %v371 = vld [vmem:[#allocation6 + $0x78] sm:$0xff]
        %v372 = vld [vmem:[#allocation6 + $0x80] sm:$0xff]
        %v373 = vld [vmem:[#allocation6 + $0x88] sm:$0xf]
        %v374 = vld [vmem:[#allocation6 + $0x8c] sm:$0xff]
        %v375 = vld [vmem:[#allocation6 + $0x94] sm:$0xff]
        %v376 = vld [vmem:[#allocation6 + $0x9c] sm:$0xff]
        %v377 = vld [vmem:[#allocation6 + $0xa4] sm:$0xf]
        %v378 = vld [vmem:[#allocation6 + $0xa8] sm:$0xff]
        %v379 = vld [vmem:[#allocation6 + $0xb0] sm:$0xff]
        %v380 = vld [vmem:[#allocation6 + $0xb8] sm:$0xff]
        %v381 = vld [vmem:[#allocation6 + $0xc0] sm:$0xf]
        %v382 = vld [vmem:[#allocation6 + $0xc4] sm:$0xff]
        %v383 = vld [vmem:[#allocation6 + $0xcc] sm:$0xff]
        %v384 = vld [vmem:[#allocation6 + $0xd4] sm:$0xff]
        %v385 = vld [vmem:[#allocation6 + $0xdc] sm:$0xf]
        %v386 = vld [vmem:[#allocation6 + $0xe0] sm:$0xff]
        %v387 = vld [vmem:[#allocation6 + $0xe8] sm:$0xff]
        %v388 = vld [vmem:[#allocation6 + $0xf0] sm:$0xff]
        %v389 = vld [vmem:[#allocation6 + $0xf8] sm:$0xf]
        %v390 = vld [vmem:[#allocation6 + $0xfc] sm:$0xff]
        %v391 = vld [vmem:[#allocation6 + $0x104] sm:$0xff]
        %v392 = vld [vmem:[#allocation6 + $0x10c] sm:$0xff]
        %v393 = vld [vmem:[#allocation6 + $0x114] sm:$0xf]
        %v394 = vld [vmem:[#allocation6 + $0x118] sm:$0xff]
        %v395 = vld [vmem:[#allocation6 + $0x120] sm:$0xff]
        %v396 = vld [vmem:[#allocation6 + $0x128] sm:$0xff]
        %v397 = vld [vmem:[#allocation6 + $0x130] sm:$0xf]
        %v398 = vld [vmem:[#allocation6 + $0x134] sm:$0xff]
        %v399 = vld [vmem:[#allocation6 + $0x13c] sm:$0xff]
        %v400 = vld [vmem:[#allocation6 + $0x144] sm:$0xff]
        %v401 = vld [vmem:[#allocation6 + $0x14c] sm:$0xf]
        %v402 = vld [vmem:[#allocation6 + $0x150] sm:$0xff]
        %v403 = vld [vmem:[#allocation6 + $0x158] sm:$0xff]
        %v404 = vld [vmem:[#allocation6 + $0x160] sm:$0xff]
        %v405 = vld [vmem:[#allocation6 + $0x168] sm:$0xf]
        %v406 = vld [vmem:[#allocation6 + $0x16c] sm:$0xff]
        %v407 = vld [vmem:[#allocation6 + $0x174] sm:$0xff]
        %v408 = vld [vmem:[#allocation6 + $0x17c] sm:$0xff]
        %v409 = vld [vmem:[#allocation6 + $0x184] sm:$0xf]
        %v410 = vld [vmem:[#allocation6 + $0x188] sm:$0xff]
        %v411 = vld [vmem:[#allocation6 + $0x190] sm:$0xff]
        %v412 = vld [vmem:[#allocation6 + $0x198] sm:$0xff]
        %v413 = vld [vmem:[#allocation6 + $0x1a0] sm:$0xf]
        %v414 = vld [vmem:[#allocation6 + $0x1a4] sm:$0xff]
        %v415 = vld [vmem:[#allocation6 + $0x1ac] sm:$0xff]
        %v416 = vld [vmem:[#allocation6 + $0x1b4] sm:$0xff]
        %v417 = vld [vmem:[#allocation6 + $0x1bc] sm:$0xf]
        %v424 = vunpack.c.l.b16 %v348
        %v425 = vunpack.c.l.b16 %v349
        %v426 = vunpack.c.l.b16 %v350
        %v427 = vunpack.c.l.b16 %v351
        %v428 = vunpack.c.l.b16 %v352
        %v429 = vunpack.c.l.b16 %v353
        %v430 = vpack.c.b16 %v425, %v424
        %v431 = vpack.c.b16 %v427, %v426
        %v432 = vpack.c.b16 %v429, %v428
        %v500 = vunpack.c.l.b16 %v354
        %v501 = vunpack.c.h.b16 %v354
        %v502 = vunpack.c.l.b16 %v355
        %v503 = vunpack.c.h.b16 %v355
        %v504 = vunpack.c.l.b16 %v356
        %v505 = vunpack.c.h.b16 %v356
        %v506 = vunpack.c.l.b16 %v357
        %v507 = vunpack.c.l.b16 %v358
        %v508 = vunpack.c.h.b16 %v358
        %v509 = vunpack.c.l.b16 %v359
        %v510 = vunpack.c.h.b16 %v359
        %v511 = vunpack.c.l.b16 %v360
        %v512 = vunpack.c.h.b16 %v360
        %v513 = vunpack.c.l.b16 %v361
        %v514 = vunpack.c.l.b16 %v362
        %v515 = vunpack.c.h.b16 %v362
        %v516 = vunpack.c.l.b16 %v363
        %v517 = vunpack.c.h.b16 %v363
        %v518 = vunpack.c.l.b16 %v364
        %v519 = vunpack.c.h.b16 %v364
        %v520 = vunpack.c.l.b16 %v365
        %v521 = vunpack.c.l.b16 %v366
        %v522 = vunpack.c.h.b16 %v366
        %v523 = vunpack.c.l.b16 %v367
        %v524 = vunpack.c.h.b16 %v367
        %v525 = vunpack.c.l.b16 %v368
        %v526 = vunpack.c.h.b16 %v368
        %v527 = vunpack.c.l.b16 %v369
        %v528 = vunpack.c.l.b16 %v370
        %v529 = vunpack.c.h.b16 %v370
        %v530 = vunpack.c.l.b16 %v371
        %v531 = vunpack.c.h.b16 %v371
        %v532 = vunpack.c.l.b16 %v372
        %v533 = vunpack.c.h.b16 %v372
        %v534 = vunpack.c.l.b16 %v373
        %v535 = vunpack.c.l.b16 %v374
        %v536 = vunpack.c.h.b16 %v374
        %v537 = vunpack.c.l.b16 %v375
        %v538 = vunpack.c.h.b16 %v375
        %v539 = vunpack.c.l.b16 %v376
        %v540 = vunpack.c.h.b16 %v376
        %v541 = vunpack.c.l.b16 %v377
        %v542 = vunpack.c.l.b16 %v378
        %v543 = vunpack.c.h.b16 %v378
        %v544 = vunpack.c.l.b16 %v379
        %v545 = vunpack.c.h.b16 %v379
        %v546 = vunpack.c.l.b16 %v380
        %v547 = vunpack.c.h.b16 %v380
        %v548 = vunpack.c.l.b16 %v381
        %v549 = vunpack.c.l.b16 %v382
        %v550 = vunpack.c.h.b16 %v382
        %v551 = vunpack.c.l.b16 %v383
        %v552 = vunpack.c.h.b16 %v383
        %v553 = vunpack.c.l.b16 %v384
        %v554 = vunpack.c.h.b16 %v384
        %v555 = vunpack.c.l.b16 %v385
        %v556 = vunpack.c.l.b16 %v386
        %v557 = vunpack.c.h.b16 %v386
        %v558 = vunpack.c.l.b16 %v387
        %v559 = vunpack.c.h.b16 %v387
        %v560 = vunpack.c.l.b16 %v388
        %v561 = vunpack.c.h.b16 %v388
        %v562 = vunpack.c.l.b16 %v389
        %v563 = vunpack.c.l.b16 %v390
        %v564 = vunpack.c.h.b16 %v390
        %v565 = vunpack.c.l.b16 %v391
        %v566 = vunpack.c.h.b16 %v391
        %v567 = vunpack.c.l.b16 %v392
        %v568 = vunpack.c.h.b16 %v392
        %v569 = vunpack.c.l.b16 %v393
        %v570 = vunpack.c.l.b16 %v394
        %v571 = vunpack.c.h.b16 %v394
        %v572 = vunpack.c.l.b16 %v395
        %v573 = vunpack.c.h.b16 %v395
        %v574 = vunpack.c.l.b16 %v396
        %v575 = vunpack.c.h.b16 %v396
        %v576 = vunpack.c.l.b16 %v397
        %v577 = vunpack.c.l.b16 %v398
        %v578 = vunpack.c.h.b16 %v398
        %v579 = vunpack.c.l.b16 %v399
        %v580 = vunpack.c.h.b16 %v399
        %v581 = vunpack.c.l.b16 %v400
        %v582 = vunpack.c.h.b16 %v400
        %v583 = vunpack.c.l.b16 %v401
        %v584 = vunpack.c.l.b16 %v402
        %v585 = vunpack.c.h.b16 %v402
        %v586 = vunpack.c.l.b16 %v403
        %v587 = vunpack.c.h.b16 %v403
        %v588 = vunpack.c.l.b16 %v404
        %v589 = vunpack.c.h.b16 %v404
        %v590 = vunpack.c.l.b16 %v405
        %v591 = vunpack.c.l.b16 %v406
        %v592 = vunpack.c.h.b16 %v406
        %v593 = vunpack.c.l.b16 %v407
        %v594 = vunpack.c.h.b16 %v407
        %v595 = vunpack.c.l.b16 %v408
        %v596 = vunpack.c.h.b16 %v408
        %v597 = vunpack.c.l.b16 %v409
        %v598 = vunpack.c.l.b16 %v410
        %v599 = vunpack.c.h.b16 %v410
        %v600 = vunpack.c.l.b16 %v411
        %v601 = vunpack.c.h.b16 %v411
        %v602 = vunpack.c.l.b16 %v412
        %v603 = vunpack.c.h.b16 %v412
        %v604 = vunpack.c.l.b16 %v413
        %v605 = vunpack.c.l.b16 %v414
        %v606 = vunpack.c.h.b16 %v414
        %v607 = vunpack.c.l.b16 %v415
        %v608 = vunpack.c.h.b16 %v415
        %v609 = vunpack.c.l.b16 %v416
        %v610 = vunpack.c.h.b16 %v416
        %v611 = vunpack.c.l.b16 %v417
        %v612 = vpack.c.b16 %v507, %v500
        %v613 = vpack.c.b16 %v508, %v501
        %v614 = vpack.c.b16 %v509, %v502
        %v615 = vpack.c.b16 %v510, %v503
        %v616 = vpack.c.b16 %v511, %v504
        %v617 = vpack.c.b16 %v512, %v505
        %v618 = vpack.c.b16 %v513, %v506
        %v619 = vpack.c.b16 %v521, %v514
        %v620 = vpack.c.b16 %v522, %v515
        %v621 = vpack.c.b16 %v523, %v516
        %v622 = vpack.c.b16 %v524, %v517
        %v623 = vpack.c.b16 %v525, %v518
        %v624 = vpack.c.b16 %v526, %v519
        %v625 = vpack.c.b16 %v527, %v520
        %v626 = vpack.c.b16 %v535, %v528
        %v627 = vpack.c.b16 %v536, %v529
        %v628 = vpack.c.b16 %v537, %v530
        %v629 = vpack.c.b16 %v538, %v531
        %v630 = vpack.c.b16 %v539, %v532
        %v631 = vpack.c.b16 %v540, %v533
        %v632 = vpack.c.b16 %v541, %v534
        %v633 = vpack.c.b16 %v549, %v542
        %v634 = vpack.c.b16 %v550, %v543
        %v635 = vpack.c.b16 %v551, %v544
        %v636 = vpack.c.b16 %v552, %v545
        %v637 = vpack.c.b16 %v553, %v546
        %v638 = vpack.c.b16 %v554, %v547
        %v639 = vpack.c.b16 %v555, %v548
        %v640 = vpack.c.b16 %v563, %v556
        %v641 = vpack.c.b16 %v564, %v557
        %v642 = vpack.c.b16 %v565, %v558
        %v643 = vpack.c.b16 %v566, %v559
        %v644 = vpack.c.b16 %v567, %v560
        %v645 = vpack.c.b16 %v568, %v561
        %v646 = vpack.c.b16 %v569, %v562
        %v647 = vpack.c.b16 %v577, %v570
        %v648 = vpack.c.b16 %v578, %v571
        %v649 = vpack.c.b16 %v579, %v572
        %v650 = vpack.c.b16 %v580, %v573
        %v651 = vpack.c.b16 %v581, %v574
        %v652 = vpack.c.b16 %v582, %v575
        %v653 = vpack.c.b16 %v583, %v576
        %v654 = vpack.c.b16 %v591, %v584
        %v655 = vpack.c.b16 %v592, %v585
        %v656 = vpack.c.b16 %v593, %v586
        %v657 = vpack.c.b16 %v594, %v587
        %v658 = vpack.c.b16 %v595, %v588
        %v659 = vpack.c.b16 %v596, %v589
        %v660 = vpack.c.b16 %v597, %v590
        %v661 = vpack.c.b16 %v605, %v598
        %v662 = vpack.c.b16 %v606, %v599
        %v663 = vpack.c.b16 %v607, %v600
        %v664 = vpack.c.b16 %v608, %v601
        %v665 = vpack.c.b16 %v609, %v602
        %v666 = vpack.c.b16 %v610, %v603
        %v667 = vpack.c.b16 %v611, %v604
        %724 = vmatpush.bf16.msra.mxu0 %v661
        %725 = vmatpush.bf16.msra.mxu0 %v654
        %726 = vmatpush.bf16.msra.mxu0 %v647
        %727 = vmatpush.bf16.msra.mxu0 %v640
        %728 = vmatpush.bf16.msra.mxu0 %v633
        %729 = vmatpush.bf16.msra.mxu0 %v626
        %730 = vmatpush.bf16.msra.mxu0 %v619
        %731 = vmatpush.bf16.msra.mxu0 %v612
        %732 = vmatmul.bf16.gmra.mxu0 %v430
        %v733 = vpop.f32.mrf.mxu0
        %v734 = vadd.f32 0.0, %v733
        %v735 = vpop.f32.mrf.mxu0
        %v736 = vadd.f32 0.0, %v735
        %737 = vmatmul.bf16.gmra.mxu0 %v431
        %v738 = vpop.f32.mrf.mxu0
        %v739 = vadd.f32 0.0, %v738
        %v740 = vpop.f32.mrf.mxu0
        %v741 = vadd.f32 0.0, %v740
        %742 = vmatmul.bf16.gmra.mxu0 %v432
        %v743 = vpop.f32.mrf.mxu0
        %v744 = vpop.f32.mrf.mxu0
        %745 = vdwg.mxu0
        %746 = vmatpush.bf16.msra.mxu0 %v662
        %747 = vmatpush.bf16.msra.mxu0 %v655
        %748 = vmatpush.bf16.msra.mxu0 %v648
        %749 = vmatpush.bf16.msra.mxu0 %v641
        %750 = vmatpush.bf16.msra.mxu0 %v634
        %751 = vmatpush.bf16.msra.mxu0 %v627
        %752 = vmatpush.bf16.msra.mxu0 %v620
        %753 = vmatpush.bf16.msra.mxu0 %v613
        %754 = vmatmul.bf16.gmra.mxu0 %v430
        %v755 = vpop.f32.mrf.mxu0
        %v756 = vadd.f32 0.0, %v755
        %v757 = vpop.f32.mrf.mxu0
        %v758 = vadd.f32 0.0, %v757
        %759 = vmatmul.bf16.gmra.mxu0 %v431
        %v760 = vpop.f32.mrf.mxu0
        %v761 = vadd.f32 0.0, %v760
        %v762 = vpop.f32.mrf.mxu0
        %v763 = vadd.f32 0.0, %v762
        %764 = vmatmul.bf16.gmra.mxu0 %v432
        %v765 = vpop.f32.mrf.mxu0
        %v766 = vpop.f32.mrf.mxu0
        %767 = vdwg.mxu0
        %768 = vmatpush.bf16.msra.mxu0 %v663
        %769 = vmatpush.bf16.msra.mxu0 %v656
        %770 = vmatpush.bf16.msra.mxu0 %v649
        %771 = vmatpush.bf16.msra.mxu0 %v642
        %772 = vmatpush.bf16.msra.mxu0 %v635
        %773 = vmatpush.bf16.msra.mxu0 %v628
        %774 = vmatpush.bf16.msra.mxu0 %v621
        %775 = vmatpush.bf16.msra.mxu0 %v614
        %776 = vmatmul.bf16.gmra.mxu0 %v430
        %v777 = vpop.f32.mrf.mxu0
        %v778 = vadd.f32 0.0, %v777
        %v779 = vpop.f32.mrf.mxu0
        %v780 = vadd.f32 0.0, %v779
        %781 = vmatmul.bf16.gmra.mxu0 %v431
        %v782 = vpop.f32.mrf.mxu0
        %v783 = vadd.f32 0.0, %v782
        %v784 = vpop.f32.mrf.mxu0
        %v785 = vadd.f32 0.0, %v784
        %786 = vmatmul.bf16.gmra.mxu0 %v432
        %v787 = vpop.f32.mrf.mxu0
        %v788 = vpop.f32.mrf.mxu0
        %789 = vdwg.mxu0
        %790 = vmatpush.bf16.msra.mxu0 %v664
        %791 = vmatpush.bf16.msra.mxu0 %v657
        %792 = vmatpush.bf16.msra.mxu0 %v650
        %793 = vmatpush.bf16.msra.mxu0 %v643
        %794 = vmatpush.bf16.msra.mxu0 %v636
        %795 = vmatpush.bf16.msra.mxu0 %v629
        %796 = vmatpush.bf16.msra.mxu0 %v622
        %797 = vmatpush.bf16.msra.mxu0 %v615
        %798 = vmatmul.bf16.gmra.mxu0 %v430
        %v799 = vpop.f32.mrf.mxu0
        %v800 = vadd.f32 0.0, %v799
        %v801 = vpop.f32.mrf.mxu0
        %v802 = vadd.f32 0.0, %v801
        %803 = vmatmul.bf16.gmra.mxu0 %v431
        %v804 = vpop.f32.mrf.mxu0
        %v805 = vadd.f32 0.0, %v804
        %v806 = vpop.f32.mrf.mxu0
        %v807 = vadd.f32 0.0, %v806
        %808 = vmatmul.bf16.gmra.mxu0 %v432
        %v809 = vpop.f32.mrf.mxu0
        %v810 = vpop.f32.mrf.mxu0
        %811 = vdwg.mxu0
        %812 = vmatpush.bf16.msra.mxu0 %v665
        %813 = vmatpush.bf16.msra.mxu0 %v658
        %814 = vmatpush.bf16.msra.mxu0 %v651
        %815 = vmatpush.bf16.msra.mxu0 %v644
        %816 = vmatpush.bf16.msra.mxu0 %v637
        %817 = vmatpush.bf16.msra.mxu0 %v630
        %818 = vmatpush.bf16.msra.mxu0 %v623
        %819 = vmatpush.bf16.msra.mxu0 %v616
        %820 = vmatmul.bf16.gmra.mxu0 %v430
        %v821 = vpop.f32.mrf.mxu0
        %v822 = vadd.f32 0.0, %v821
        %v823 = vpop.f32.mrf.mxu0
        %v824 = vadd.f32 0.0, %v823
        %825 = vmatmul.bf16.gmra.mxu0 %v431
        %v826 = vpop.f32.mrf.mxu0
        %v827 = vadd.f32 0.0, %v826
        %v828 = vpop.f32.mrf.mxu0
        %v829 = vadd.f32 0.0, %v828
        %830 = vmatmul.bf16.gmra.mxu0 %v432
        %v831 = vpop.f32.mrf.mxu0
        %v832 = vpop.f32.mrf.mxu0
        %833 = vdwg.mxu0
        %834 = vmatpush.bf16.msra.mxu0 %v666
        %835 = vmatpush.bf16.msra.mxu0 %v659
        %836 = vmatpush.bf16.msra.mxu0 %v652
        %837 = vmatpush.bf16.msra.mxu0 %v645
        %838 = vmatpush.bf16.msra.mxu0 %v638
        %839 = vmatpush.bf16.msra.mxu0 %v631
        %840 = vmatpush.bf16.msra.mxu0 %v624
        %841 = vmatpush.bf16.msra.mxu0 %v617
        %842 = vmatmul.bf16.gmra.mxu0 %v430
        %v843 = vpop.f32.mrf.mxu0
        %v844 = vadd.f32 0.0, %v843
        %v845 = vpop.f32.mrf.mxu0
        %v846 = vadd.f32 0.0, %v845
        %847 = vmatmul.bf16.gmra.mxu0 %v431
        %v848 = vpop.f32.mrf.mxu0
        %v849 = vadd.f32 0.0, %v848
        %v850 = vpop.f32.mrf.mxu0
        %v851 = vadd.f32 0.0, %v850
        %852 = vmatmul.bf16.gmra.mxu0 %v432
        %v853 = vpop.f32.mrf.mxu0
        %v854 = vadd.f32 0.0, %v853
        %v855 = vpop.f32.mrf.mxu0
        %856 = vdwg.mxu0
        %857 = vmatpush.bf16.msra.mxu0 %v667
        %858 = vmatpush.bf16.msra.mxu0 %v660
        %859 = vmatpush.bf16.msra.mxu0 %v653
        %860 = vmatpush.bf16.msra.mxu0 %v646
        %861 = vmatpush.bf16.msra.mxu0 %v639
        %862 = vmatpush.bf16.msra.mxu0 %v632
        %863 = vmatpush.bf16.msra.mxu0 %v625
        %864 = vmatpush.bf16.msra.mxu0 %v618
        %865 = vmatmul.bf16.gmra.mxu0 %v430
        %v866 = vpop.f32.mrf.mxu0
        %v867 = vadd.f32 0.0, %v866
        %v868 = vpop.f32.mrf.mxu0
        %v869 = vadd.f32 0.0, %v868
        %870 = vmatmul.bf16.gmra.mxu0 %v431
        %v871 = vpop.f32.mrf.mxu0
        %v872 = vadd.f32 0.0, %v871
        %v873 = vpop.f32.mrf.mxu0
        %v874 = vadd.f32 0.0, %v873
        %875 = vmatmul.bf16.gmra.mxu0 %v432
        %v876 = vpop.f32.mrf.mxu0
        %v877 = vadd.f32 0.0, %v876
        %v878 = vpop.f32.mrf.mxu0
        %879 = vdwg.mxu0
        %880 = vst [vmem:[#allocation2] sm:$0xff] 0.0
        %881 = vst [vmem:[#allocation2 + $0x8] sm:$0xff] 0.0
        %882 = vst [vmem:[#allocation2 + $0x10] sm:$0xff] 0.0
        %883 = vst [vmem:[#allocation2 + $0x18] sm:$0xff] 0.0
        %884 = vst [vmem:[#allocation2 + $0x20] sm:$0xff] 0.0
        %885 = vst [vmem:[#allocation2 + $0x28] sm:$0xff] 0.0
        %vm890 = vcmask 1046528
        %v891 = vrot.slane %v756, 1
        %v892 = vrot.slane %v758, 1
        %v893 = vsel %vm890, %v891, %v892
        %v894 = vrot.slane %v761, 1
        %v895 = vsel %vm890, %v892, %v894
        %v896 = vrot.slane %v763, 1
        %v897 = vsel %vm890, %v894, %v896
        %v902 = vadd.f32 %v734, %v893
        %v903 = vadd.f32 %v736, %v895
        %v904 = vadd.f32 %v739, %v897
        %v905 = vadd.f32 %v741, %v896
        %vm910 = vcmask 1045504
        %v911 = vrot.slane %v778, 2
        %v912 = vrot.slane %v780, 2
        %v913 = vsel %vm910, %v911, %v912
        %v914 = vrot.slane %v783, 2
        %v915 = vsel %vm910, %v912, %v914
        %v916 = vrot.slane %v785, 2
        %v917 = vsel %vm910, %v914, %v916
        %v922 = vadd.f32 %v902, %v913
        %v923 = vadd.f32 %v903, %v915
        %v924 = vadd.f32 %v904, %v917
        %v925 = vadd.f32 %v905, %v916
        %vm930 = vcmask 1044480
        %v931 = vrot.slane %v800, 3
        %v932 = vrot.slane %v802, 3
        %v933 = vsel %vm930, %v931, %v932
        %v934 = vrot.slane %v805, 3
        %v935 = vsel %vm930, %v932, %v934
        %v936 = vrot.slane %v807, 3
        %v937 = vsel %vm930, %v934, %v936
        %v942 = vadd.f32 %v922, %v933
        %v943 = vadd.f32 %v923, %v935
        %v944 = vadd.f32 %v924, %v937
        %v945 = vadd.f32 %v925, %v936
        %vm950 = vcmask 1043456
        %v951 = vrot.slane %v822, 4
        %v952 = vrot.slane %v824, 4
        %v953 = vsel %vm950, %v951, %v952
        %v954 = vrot.slane %v827, 4
        %v955 = vsel %vm950, %v952, %v954
        %v956 = vrot.slane %v829, 4
        %v957 = vsel %vm950, %v954, %v956
        %v962 = vadd.f32 %v942, %v953
        %v963 = vadd.f32 %v943, %v955
        %v964 = vadd.f32 %v944, %v957
        %v965 = vadd.f32 %v945, %v956
        %vm971 = vcmask 1042432
        %v972 = vrot.slane %v844, 5
        %v973 = vrot.slane %v846, 5
        %v974 = vsel %vm971, %v972, %v973
        %v975 = vrot.slane %v849, 5
        %v976 = vsel %vm971, %v973, %v975
        %v977 = vrot.slane %v851, 5
        %v978 = vsel %vm971, %v975, %v977
        %v979 = vrot.slane %v854, 5
        %v980 = vsel %vm971, %v977, %v979
        %v985 = vadd.f32 %v962, %v974
        %v986 = vadd.f32 %v963, %v976
        %v987 = vadd.f32 %v964, %v978
        %v988 = vadd.f32 %v965, %v980
        %vm994 = vcmask 1041408
        %v995 = vrot.slane %v867, 6
        %v996 = vrot.slane %v869, 6
        %v997 = vsel %vm994, %v995, %v996
        %v998 = vrot.slane %v872, 6
        %v999 = vsel %vm994, %v996, %v998
        %v1000 = vrot.slane %v874, 6
        %v1001 = vsel %vm994, %v998, %v1000
        %v1002 = vrot.slane %v877, 6
        %v1003 = vsel %vm994, %v1000, %v1002
        %v1008 = vadd.f32 %v985, %v997
        %v1009 = vadd.f32 %v986, %v999
        %v1010 = vadd.f32 %v987, %v1001
        %v1011 = vadd.f32 %v988, %v1003
        %v1012 = vld [vmem:[%s2] sm:$0x1]
        %v1014 = vperm.slane %v1012, 0
        %v1016 = vadd.f32 %v1008, %v1014
        %v1017 = vadd.f32 %v1009, %v1014
        %v1018 = vadd.f32 %v1010, %v1014
        %v1019 = vadd.f32 %v1011, %v1014
        %1020 = vst [vmem:[#allocation2] sm:$0xff] %v1016
        %1021 = vst [vmem:[#allocation2 + $0x8] sm:$0xff] %v1017
        %1022 = vst [vmem:[#allocation2 + $0x10] sm:$0xff] %v1018
        %1023 = vst [vmem:[#allocation2 + $0x18] sm:$0xf] %v1019
        %v1024 = vld [vmem:[#allocation2] sm:$0xff]
        %v1025 = vld [vmem:[#allocation2 + $0x8] sm:$0xff]
        %v1026 = vld [vmem:[#allocation2 + $0x10] sm:$0xff]
        %v1027 = vld [vmem:[#allocation2 + $0x18] sm:$0xff]
        %v1028 = vld [vmem:[#allocation2 + $0x20] sm:$0xff]
        %v1029 = vld [vmem:[#allocation2 + $0x28] sm:$0xff]
        %vm1030 = vcmp.gt.f32.partialorder %v1024, 0.0
        %vm1031 = vcmp.gt.f32.partialorder %v1025, 0.0
        %vm1032 = vcmp.gt.f32.partialorder %v1026, 0.0
        %vm1033 = vcmp.gt.f32.partialorder %v1027, 0.0
        %vm1034 = vcmp.gt.f32.partialorder %v1028, 0.0
        %vm1035 = vcmp.gt.f32.partialorder %v1029, 0.0
        %v1036 = vmul.f32 %v1024, 0.1
        %v1037 = vmul.f32 %v1025, 0.1
        %v1038 = vmul.f32 %v1026, 0.1
        %v1039 = vmul.f32 %v1027, 0.1
        %v1040 = vmul.f32 %v1028, 0.1
        %v1041 = vmul.f32 %v1029, 0.1
        %v1042 = vsel %vm1030, %v1024, %v1036
        %v1043 = vsel %vm1031, %v1025, %v1037
        %v1044 = vsel %vm1032, %v1026, %v1038
        %v1045 = vsel %vm1033, %v1027, %v1039
        %v1046 = vsel %vm1034, %v1028, %v1040
        %v1047 = vsel %vm1035, %v1029, %v1041
        %v1048 = vpack.c.bf16 %v1043, %v1042
        %v1049 = vpack.c.bf16 %v1045, %v1044
        %v1050 = vpack.c.bf16 %v1047, %v1046
        %v1051 = vld [vmem:[#allocation8] sm:$0xff]
        %v1052 = vld [vmem:[#allocation8 + $0x8] sm:$0xf]
        %v1053 = vld [vmem:[#allocation8 + $0xc] sm:$0xff]
        %v1054 = vld [vmem:[#allocation8 + $0x14] sm:$0xf]
        %v1055 = vld [vmem:[#allocation8 + $0x18] sm:$0xff]
        %v1056 = vld [vmem:[#allocation8 + $0x20] sm:$0xf]
        %v1057 = vld [vmem:[#allocation8 + $0x24] sm:$0xff]
        %v1058 = vld [vmem:[#allocation8 + $0x2c] sm:$0xf]
        %v1059 = vld [vmem:[#allocation8 + $0x30] sm:$0xff]
        %v1060 = vld [vmem:[#allocation8 + $0x38] sm:$0xf]
        %v1061 = vld [vmem:[#allocation8 + $0x3c] sm:$0xff]
        %v1062 = vld [vmem:[#allocation8 + $0x44] sm:$0xf]
        %v1063 = vld [vmem:[#allocation8 + $0x48] sm:$0xff]
        %v1064 = vld [vmem:[#allocation8 + $0x50] sm:$0xf]
        %v1065 = vld [vmem:[#allocation8 + $0x54] sm:$0xff]
        %v1066 = vld [vmem:[#allocation8 + $0x5c] sm:$0xf]
        %v1067 = vld [vmem:[#allocation8 + $0x60] sm:$0xff]
        %v1068 = vld [vmem:[#allocation8 + $0x68] sm:$0xf]
        %v1069 = vld [vmem:[#allocation8 + $0x6c] sm:$0xff]
        %v1070 = vld [vmem:[#allocation8 + $0x74] sm:$0xf]
        %v1071 = vld [vmem:[#allocation8 + $0x78] sm:$0xff]
        %v1072 = vld [vmem:[#allocation8 + $0x80] sm:$0xf]
        %v1073 = vld [vmem:[#allocation8 + $0x84] sm:$0xff]
        %v1074 = vld [vmem:[#allocation8 + $0x8c] sm:$0xf]
        %v1075 = vld [vmem:[#allocation8 + $0x90] sm:$0xff]
        %v1076 = vld [vmem:[#allocation8 + $0x98] sm:$0xf]
        %v1077 = vld [vmem:[#allocation8 + $0x9c] sm:$0xff]
        %v1078 = vld [vmem:[#allocation8 + $0xa4] sm:$0xf]
        %v1079 = vld [vmem:[#allocation8 + $0xa8] sm:$0xff]
        %v1080 = vld [vmem:[#allocation8 + $0xb0] sm:$0xf]
        %v1081 = vld [vmem:[#allocation8 + $0xb4] sm:$0xff]
        %v1082 = vld [vmem:[#allocation8 + $0xbc] sm:$0xf]
        %v1115 = vunpack.c.l.b16 %v1051
        %v1116 = vunpack.c.h.b16 %v1051
        %v1117 = vunpack.c.l.b16 %v1052
        %v1118 = vunpack.c.l.b16 %v1053
        %v1119 = vunpack.c.h.b16 %v1053
        %v1120 = vunpack.c.l.b16 %v1054
        %v1121 = vunpack.c.l.b16 %v1055
        %v1122 = vunpack.c.h.b16 %v1055
        %v1123 = vunpack.c.l.b16 %v1056
        %v1124 = vunpack.c.l.b16 %v1057
        %v1125 = vunpack.c.h.b16 %v1057
        %v1126 = vunpack.c.l.b16 %v1058
        %v1127 = vunpack.c.l.b16 %v1059
        %v1128 = vunpack.c.h.b16 %v1059
        %v1129 = vunpack.c.l.b16 %v1060
        %v1130 = vunpack.c.l.b16 %v1061
        %v1131 = vunpack.c.h.b16 %v1061
        %v1132 = vunpack.c.l.b16 %v1062
        %v1133 = vunpack.c.l.b16 %v1063
        %v1134 = vunpack.c.h.b16 %v1063
        %v1135 = vunpack.c.l.b16 %v1064
        %v1136 = vunpack.c.l.b16 %v1065
        %v1137 = vunpack.c.h.b16 %v1065
        %v1138 = vunpack.c.l.b16 %v1066
        %v1139 = vunpack.c.l.b16 %v1067
        %v1140 = vunpack.c.h.b16 %v1067
        %v1141 = vunpack.c.l.b16 %v1068
        %v1142 = vunpack.c.l.b16 %v1069
        %v1143 = vunpack.c.h.b16 %v1069
        %v1144 = vunpack.c.l.b16 %v1070
        %v1145 = vunpack.c.l.b16 %v1071
        %v1146 = vunpack.c.h.b16 %v1071
        %v1147 = vunpack.c.l.b16 %v1072
        %v1148 = vunpack.c.l.b16 %v1073
        %v1149 = vunpack.c.h.b16 %v1073
        %v1150 = vunpack.c.l.b16 %v1074
        %v1151 = vunpack.c.l.b16 %v1075
        %v1152 = vunpack.c.h.b16 %v1075
        %v1153 = vunpack.c.l.b16 %v1076
        %v1154 = vunpack.c.l.b16 %v1077
        %v1155 = vunpack.c.h.b16 %v1077
        %v1156 = vunpack.c.l.b16 %v1078
        %v1157 = vunpack.c.l.b16 %v1079
        %v1158 = vunpack.c.h.b16 %v1079
        %v1159 = vunpack.c.l.b16 %v1080
        %v1160 = vunpack.c.l.b16 %v1081
        %v1161 = vunpack.c.h.b16 %v1081
        %v1162 = vunpack.c.l.b16 %v1082
        %v1163 = vpack.c.b16 %v1118, %v1115
        %v1164 = vpack.c.b16 %v1119, %v1116
        %v1165 = vpack.c.b16 %v1120, %v1117
        %v1166 = vpack.c.b16 %v1124, %v1121
        %v1167 = vpack.c.b16 %v1125, %v1122
        %v1168 = vpack.c.b16 %v1126, %v1123
        %v1169 = vpack.c.b16 %v1130, %v1127
        %v1170 = vpack.c.b16 %v1131, %v1128
        %v1171 = vpack.c.b16 %v1132, %v1129
        %v1172 = vpack.c.b16 %v1136, %v1133
        %v1173 = vpack.c.b16 %v1137, %v1134
        %v1174 = vpack.c.b16 %v1138, %v1135
        %v1175 = vpack.c.b16 %v1142, %v1139
        %v1176 = vpack.c.b16 %v1143, %v1140
        %v1177 = vpack.c.b16 %v1144, %v1141
        %v1178 = vpack.c.b16 %v1148, %v1145
        %v1179 = vpack.c.b16 %v1149, %v1146
        %v1180 = vpack.c.b16 %v1150, %v1147
        %v1181 = vpack.c.b16 %v1154, %v1151
        %v1182 = vpack.c.b16 %v1155, %v1152
        %v1183 = vpack.c.b16 %v1156, %v1153
        %v1184 = vpack.c.b16 %v1160, %v1157
        %v1185 = vpack.c.b16 %v1161, %v1158
        %v1186 = vpack.c.b16 %v1162, %v1159
        %1211 = vmatpush.bf16.msra.mxu0 %v1184
        %1212 = vmatpush.bf16.msra.mxu0 %v1181
        %1213 = vmatpush.bf16.msra.mxu0 %v1178
        %1214 = vmatpush.bf16.msra.mxu0 %v1175
        %1215 = vmatpush.bf16.msra.mxu0 %v1172
        %1216 = vmatpush.bf16.msra.mxu0 %v1169
        %1217 = vmatpush.bf16.msra.mxu0 %v1166
        %1218 = vmatpush.bf16.msra.mxu0 %v1163
        %1219 = vmatmul.bf16.gmra.mxu0 %v1048
        %v1220 = vpop.f32.mrf.mxu0
        %v1221 = vadd.f32 0.0, %v1220
        %v1222 = vpop.f32.mrf.mxu0
        %v1223 = vadd.f32 0.0, %v1222
        %1224 = vmatmul.bf16.gmra.mxu0 %v1049
        %v1225 = vpop.f32.mrf.mxu0
        %v1226 = vadd.f32 0.0, %v1225
        %v1227 = vpop.f32.mrf.mxu0
        %1228 = vmatmul.bf16.gmra.mxu0 %v1050
        %v1229 = vpop.f32.mrf.mxu0
        %v1230 = vpop.f32.mrf.mxu0
        %1231 = vdwg.mxu0
        %1232 = vmatpush.bf16.msra.mxu0 %v1185
        %1233 = vmatpush.bf16.msra.mxu0 %v1182
        %1234 = vmatpush.bf16.msra.mxu0 %v1179
        %1235 = vmatpush.bf16.msra.mxu0 %v1176
        %1236 = vmatpush.bf16.msra.mxu0 %v1173
        %1237 = vmatpush.bf16.msra.mxu0 %v1170
        %1238 = vmatpush.bf16.msra.mxu0 %v1167
        %1239 = vmatpush.bf16.msra.mxu0 %v1164
        %1240 = vmatmul.bf16.gmra.mxu0 %v1048
        %v1241 = vpop.f32.mrf.mxu0
        %v1242 = vadd.f32 0.0, %v1241
        %v1243 = vpop.f32.mrf.mxu0
        %v1244 = vadd.f32 0.0, %v1243
        %1245 = vmatmul.bf16.gmra.mxu0 %v1049
        %v1246 = vpop.f32.mrf.mxu0
        %v1247 = vadd.f32 0.0, %v1246
        %v1248 = vpop.f32.mrf.mxu0
        %v1249 = vadd.f32 0.0, %v1248
        %1250 = vmatmul.bf16.gmra.mxu0 %v1050
        %v1251 = vpop.f32.mrf.mxu0
        %v1252 = vpop.f32.mrf.mxu0
        %1253 = vdwg.mxu0
        %1254 = vmatpush.bf16.msra.mxu0 %v1186
        %1255 = vmatpush.bf16.msra.mxu0 %v1183
        %1256 = vmatpush.bf16.msra.mxu0 %v1180
        %1257 = vmatpush.bf16.msra.mxu0 %v1177
        %1258 = vmatpush.bf16.msra.mxu0 %v1174
        %1259 = vmatpush.bf16.msra.mxu0 %v1171
        %1260 = vmatpush.bf16.msra.mxu0 %v1168
        %1261 = vmatpush.bf16.msra.mxu0 %v1165
        %1262 = vmatmul.bf16.gmra.mxu0 %v1048
        %v1263 = vpop.f32.mrf.mxu0
        %v1264 = vadd.f32 0.0, %v1263
        %v1265 = vpop.f32.mrf.mxu0
        %v1266 = vadd.f32 0.0, %v1265
        %1267 = vmatmul.bf16.gmra.mxu0 %v1049
        %v1268 = vpop.f32.mrf.mxu0
        %v1269 = vadd.f32 0.0, %v1268
        %v1270 = vpop.f32.mrf.mxu0
        %v1271 = vadd.f32 0.0, %v1270
        %1272 = vmatmul.bf16.gmra.mxu0 %v1050
        %v1273 = vpop.f32.mrf.mxu0
        %v1274 = vpop.f32.mrf.mxu0
        %1275 = vdwg.mxu0
        %v1280 = vrot.slane %v1242, 3
        %v1281 = vrot.slane %v1244, 3
        %v1282 = vsel %vm930, %v1280, %v1281
        %v1283 = vrot.slane %v1247, 3
        %v1284 = vsel %vm930, %v1281, %v1283
        %v1285 = vrot.slane %v1249, 3
        %v1286 = vsel %vm930, %v1283, %v1285
        %v1290 = vadd.f32 %v1221, %v1282
        %v1291 = vadd.f32 %v1223, %v1284
        %v1292 = vadd.f32 %v1226, %v1286
        %v1297 = vrot.slane %v1264, 6
        %v1298 = vrot.slane %v1266, 6
        %v1299 = vsel %vm994, %v1297, %v1298
        %v1300 = vrot.slane %v1269, 6
        %v1301 = vsel %vm994, %v1298, %v1300
        %v1302 = vrot.slane %v1271, 6
        %v1303 = vsel %vm994, %v1300, %v1302
        %v1307 = vadd.f32 %v1290, %v1299
        %v1308 = vadd.f32 %v1291, %v1301
        %v1309 = vadd.f32 %v1292, %v1303
        %v1310 = vld [vmem:[%s4] sm:$0x1]
        %v1312 = vperm.slane %v1310, 0
        %v1314 = vadd.f32 %v1307, %v1312
        %v1315 = vadd.f32 %v1308, %v1312
        %v1316 = vadd.f32 %v1309, %v1312
        %v1321 = vrot.slane %v1024, 3
        %v1322 = vrot.slane %v1025, 3
        %v1323 = vsel %vm930, %v1321, %v1322
        %v1324 = vrot.slane %v1026, 3
        %v1325 = vsel %vm930, %v1322, %v1324
        %v1326 = vrot.slane %v1027, 3
        %v1327 = vsel %vm930, %v1324, %v1326
        %v1331 = vadd.f32 %v1314, %v1323
        %v1332 = vadd.f32 %v1315, %v1325
        %v1333 = vadd.f32 %v1316, %v1327
        %1334 = vst [vmem:[#allocation2] sm:$0xff] %v1331
        %1335 = vst [vmem:[#allocation2 + $0x8] sm:$0xff] %v1332
        %1336 = vst [vmem:[#allocation2 + $0x10] sm:$0x3f] %v1333
        %v1337 = vld [vmem:[#allocation2] sm:$0xff]
        %v1338 = vld [vmem:[#allocation2 + $0x8] sm:$0xff]
        %v1339 = vld [vmem:[#allocation2 + $0x10] sm:$0xff]
        %v1340 = vld [vmem:[#allocation2 + $0x18] sm:$0xff]
        %v1341 = vld [vmem:[#allocation2 + $0x20] sm:$0xff]
        %v1342 = vld [vmem:[#allocation2 + $0x28] sm:$0xff]
        %vm1343 = vcmp.gt.f32.partialorder %v1337, 0.0
        %vm1344 = vcmp.gt.f32.partialorder %v1338, 0.0
        %vm1345 = vcmp.gt.f32.partialorder %v1339, 0.0
        %vm1346 = vcmp.gt.f32.partialorder %v1340, 0.0
        %vm1347 = vcmp.gt.f32.partialorder %v1341, 0.0
        %vm1348 = vcmp.gt.f32.partialorder %v1342, 0.0
        %v1349 = vmul.f32 %v1337, 0.1
        %v1350 = vmul.f32 %v1338, 0.1
        %v1351 = vmul.f32 %v1339, 0.1
        %v1352 = vmul.f32 %v1340, 0.1
        %v1353 = vmul.f32 %v1341, 0.1
        %v1354 = vmul.f32 %v1342, 0.1
        %v1355 = vsel %vm1343, %v1337, %v1349
        %v1356 = vsel %vm1344, %v1338, %v1350
        %v1357 = vsel %vm1345, %v1339, %v1351
        %v1358 = vsel %vm1346, %v1340, %v1352
        %v1359 = vsel %vm1347, %v1341, %v1353
        %v1360 = vsel %vm1348, %v1342, %v1354
        %v1361 = vpack.c.bf16 %v1356, %v1355
        %v1362 = vpack.c.bf16 %v1358, %v1357
        %v1363 = vpack.c.bf16 %v1360, %v1359
        %s1364 = scalar_lea.vmem [#allocation8], 192
        %v1365 = vld [vmem:[%s1364] sm:$0xff]
        %v1366 = vld [vmem:[%s1364 + $0x8] sm:$0xf]
        %v1367 = vld [vmem:[%s1364 + $0xc] sm:$0xff]
        %v1368 = vld [vmem:[%s1364 + $0x14] sm:$0xf]
        %v1369 = vld [vmem:[%s1364 + $0x18] sm:$0xff]
        %v1370 = vld [vmem:[%s1364 + $0x20] sm:$0xf]
        %v1371 = vld [vmem:[%s1364 + $0x24] sm:$0xff]
        %v1372 = vld [vmem:[%s1364 + $0x2c] sm:$0xf]
        %v1373 = vld [vmem:[%s1364 + $0x30] sm:$0xff]
        %v1374 = vld [vmem:[%s1364 + $0x38] sm:$0xf]
        %v1375 = vld [vmem:[%s1364 + $0x3c] sm:$0xff]
        %v1376 = vld [vmem:[%s1364 + $0x44] sm:$0xf]
        %v1377 = vld [vmem:[%s1364 + $0x48] sm:$0xff]
        %v1378 = vld [vmem:[%s1364 + $0x50] sm:$0xf]
        %v1379 = vld [vmem:[%s1364 + $0x54] sm:$0xff]
        %v1380 = vld [vmem:[%s1364 + $0x5c] sm:$0xf]
        %v1381 = vld [vmem:[%s1364 + $0x60] sm:$0xff]
        %v1382 = vld [vmem:[%s1364 + $0x68] sm:$0xf]
        %v1383 = vld [vmem:[%s1364 + $0x6c] sm:$0xff]
        %v1384 = vld [vmem:[%s1364 + $0x74] sm:$0xf]
        %v1385 = vld [vmem:[%s1364 + $0x78] sm:$0xff]
        %v1386 = vld [vmem:[%s1364 + $0x80] sm:$0xf]
        %v1387 = vld [vmem:[%s1364 + $0x84] sm:$0xff]
        %v1388 = vld [vmem:[%s1364 + $0x8c] sm:$0xf]
        %v1389 = vld [vmem:[%s1364 + $0x90] sm:$0xff]
        %v1390 = vld [vmem:[%s1364 + $0x98] sm:$0xf]
        %v1391 = vld [vmem:[%s1364 + $0x9c] sm:$0xff]
        %v1392 = vld [vmem:[%s1364 + $0xa4] sm:$0xf]
        %v1393 = vld [vmem:[%s1364 + $0xa8] sm:$0xff]
        %v1394 = vld [vmem:[%s1364 + $0xb0] sm:$0xf]
        %v1395 = vld [vmem:[%s1364 + $0xb4] sm:$0xff]
        %v1396 = vld [vmem:[%s1364 + $0xbc] sm:$0xf]
        %v1429 = vunpack.c.l.b16 %v1365
        %v1430 = vunpack.c.h.b16 %v1365
        %v1431 = vunpack.c.l.b16 %v1366
        %v1432 = vunpack.c.l.b16 %v1367
        %v1433 = vunpack.c.h.b16 %v1367
        %v1434 = vunpack.c.l.b16 %v1368
        %v1435 = vunpack.c.l.b16 %v1369
        %v1436 = vunpack.c.h.b16 %v1369
        %v1437 = vunpack.c.l.b16 %v1370
        %v1438 = vunpack.c.l.b16 %v1371
        %v1439 = vunpack.c.h.b16 %v1371
        %v1440 = vunpack.c.l.b16 %v1372
        %v1441 = vunpack.c.l.b16 %v1373
        %v1442 = vunpack.c.h.b16 %v1373
        %v1443 = vunpack.c.l.b16 %v1374
        %v1444 = vunpack.c.l.b16 %v1375
        %v1445 = vunpack.c.h.b16 %v1375
        %v1446 = vunpack.c.l.b16 %v1376
        %v1447 = vunpack.c.l.b16 %v1377
        %v1448 = vunpack.c.h.b16 %v1377
        %v1449 = vunpack.c.l.b16 %v1378
        %v1450 = vunpack.c.l.b16 %v1379
        %v1451 = vunpack.c.h.b16 %v1379
        %v1452 = vunpack.c.l.b16 %v1380
        %v1453 = vunpack.c.l.b16 %v1381
        %v1454 = vunpack.c.h.b16 %v1381
        %v1455 = vunpack.c.l.b16 %v1382
        %v1456 = vunpack.c.l.b16 %v1383
        %v1457 = vunpack.c.h.b16 %v1383
        %v1458 = vunpack.c.l.b16 %v1384
        %v1459 = vunpack.c.l.b16 %v1385
        %v1460 = vunpack.c.h.b16 %v1385
        %v1461 = vunpack.c.l.b16 %v1386
        %v1462 = vunpack.c.l.b16 %v1387
        %v1463 = vunpack.c.h.b16 %v1387
        %v1464 = vunpack.c.l.b16 %v1388
        %v1465 = vunpack.c.l.b16 %v1389
        %v1466 = vunpack.c.h.b16 %v1389
        %v1467 = vunpack.c.l.b16 %v1390
        %v1468 = vunpack.c.l.b16 %v1391
        %v1469 = vunpack.c.h.b16 %v1391
        %v1470 = vunpack.c.l.b16 %v1392
        %v1471 = vunpack.c.l.b16 %v1393
        %v1472 = vunpack.c.h.b16 %v1393
        %v1473 = vunpack.c.l.b16 %v1394
        %v1474 = vunpack.c.l.b16 %v1395
        %v1475 = vunpack.c.h.b16 %v1395
        %v1476 = vunpack.c.l.b16 %v1396
        %v1477 = vpack.c.b16 %v1432, %v1429
        %v1478 = vpack.c.b16 %v1433, %v1430
        %v1479 = vpack.c.b16 %v1434, %v1431
        %v1480 = vpack.c.b16 %v1438, %v1435
        %v1481 = vpack.c.b16 %v1439, %v1436
        %v1482 = vpack.c.b16 %v1440, %v1437
        %v1483 = vpack.c.b16 %v1444, %v1441
        %v1484 = vpack.c.b16 %v1445, %v1442
        %v1485 = vpack.c.b16 %v1446, %v1443
        %v1486 = vpack.c.b16 %v1450, %v1447
        %v1487 = vpack.c.b16 %v1451, %v1448
        %v1488 = vpack.c.b16 %v1452, %v1449
        %v1489 = vpack.c.b16 %v1456, %v1453
        %v1490 = vpack.c.b16 %v1457, %v1454
        %v1491 = vpack.c.b16 %v1458, %v1455
        %v1492 = vpack.c.b16 %v1462, %v1459
        %v1493 = vpack.c.b16 %v1463, %v1460
        %v1494 = vpack.c.b16 %v1464, %v1461
        %v1495 = vpack.c.b16 %v1468, %v1465
        %v1496 = vpack.c.b16 %v1469, %v1466
        %v1497 = vpack.c.b16 %v1470, %v1467
        %v1498 = vpack.c.b16 %v1474, %v1471
        %v1499 = vpack.c.b16 %v1475, %v1472
        %v1500 = vpack.c.b16 %v1476, %v1473
        %1525 = vmatpush.bf16.msra.mxu0 %v1498
        %1526 = vmatpush.bf16.msra.mxu0 %v1495
        %1527 = vmatpush.bf16.msra.mxu0 %v1492
        %1528 = vmatpush.bf16.msra.mxu0 %v1489
        %1529 = vmatpush.bf16.msra.mxu0 %v1486
        %1530 = vmatpush.bf16.msra.mxu0 %v1483
        %1531 = vmatpush.bf16.msra.mxu0 %v1480
        %1532 = vmatpush.bf16.msra.mxu0 %v1477
        %1533 = vmatmul.bf16.gmra.mxu0 %v1361
        %v1534 = vpop.f32.mrf.mxu0
        %v1535 = vadd.f32 0.0, %v1534
        %v1536 = vpop.f32.mrf.mxu0
        %v1537 = vadd.f32 0.0, %v1536
        %1538 = vmatmul.bf16.gmra.mxu0 %v1362
        %v1539 = vpop.f32.mrf.mxu0
        %v1540 = vpop.f32.mrf.mxu0
        %1541 = vmatmul.bf16.gmra.mxu0 %v1363
        %v1542 = vpop.f32.mrf.mxu0
        %v1543 = vpop.f32.mrf.mxu0
        %1544 = vdwg.mxu0
        %1545 = vmatpush.bf16.msra.mxu0 %v1499
        %1546 = vmatpush.bf16.msra.mxu0 %v1496
        %1547 = vmatpush.bf16.msra.mxu0 %v1493
        %1548 = vmatpush.bf16.msra.mxu0 %v1490
        %1549 = vmatpush.bf16.msra.mxu0 %v1487
        %1550 = vmatpush.bf16.msra.mxu0 %v1484
        %1551 = vmatpush.bf16.msra.mxu0 %v1481
        %1552 = vmatpush.bf16.msra.mxu0 %v1478
        %1553 = vmatmul.bf16.gmra.mxu0 %v1361
        %v1554 = vpop.f32.mrf.mxu0
        %v1555 = vadd.f32 0.0, %v1554
        %v1556 = vpop.f32.mrf.mxu0
        %v1557 = vadd.f32 0.0, %v1556
        %1558 = vmatmul.bf16.gmra.mxu0 %v1362
        %v1559 = vpop.f32.mrf.mxu0
        %v1560 = vadd.f32 0.0, %v1559
        %v1561 = vpop.f32.mrf.mxu0
        %1562 = vmatmul.bf16.gmra.mxu0 %v1363
        %v1563 = vpop.f32.mrf.mxu0
        %v1564 = vpop.f32.mrf.mxu0
        %1565 = vdwg.mxu0
        %1566 = vmatpush.bf16.msra.mxu0 %v1500
        %1567 = vmatpush.bf16.msra.mxu0 %v1497
        %1568 = vmatpush.bf16.msra.mxu0 %v1494
        %1569 = vmatpush.bf16.msra.mxu0 %v1491
        %1570 = vmatpush.bf16.msra.mxu0 %v1488
        %1571 = vmatpush.bf16.msra.mxu0 %v1485
        %1572 = vmatpush.bf16.msra.mxu0 %v1482
        %1573 = vmatpush.bf16.msra.mxu0 %v1479
        %1574 = vmatmul.bf16.gmra.mxu0 %v1361
        %v1575 = vpop.f32.mrf.mxu0
        %v1576 = vadd.f32 0.0, %v1575
        %v1577 = vpop.f32.mrf.mxu0
        %v1578 = vadd.f32 0.0, %v1577
        %1579 = vmatmul.bf16.gmra.mxu0 %v1362
        %v1580 = vpop.f32.mrf.mxu0
        %v1581 = vadd.f32 0.0, %v1580
        %v1582 = vpop.f32.mrf.mxu0
        %1583 = vmatmul.bf16.gmra.mxu0 %v1363
        %v1584 = vpop.f32.mrf.mxu0
        %v1585 = vpop.f32.mrf.mxu0
        %1586 = vdwg.mxu0
        %v1590 = vrot.slane %v1555, 3
        %v1591 = vrot.slane %v1557, 3
        %v1592 = vsel %vm930, %v1590, %v1591
        %v1593 = vrot.slane %v1560, 3
        %v1594 = vsel %vm930, %v1591, %v1593
        %v1597 = vadd.f32 %v1535, %v1592
        %v1598 = vadd.f32 %v1537, %v1594
        %v1602 = vrot.slane %v1576, 6
        %v1603 = vrot.slane %v1578, 6
        %v1604 = vsel %vm994, %v1602, %v1603
        %v1605 = vrot.slane %v1581, 6
        %v1606 = vsel %vm994, %v1603, %v1605
        %v1609 = vadd.f32 %v1597, %v1604
        %v1610 = vadd.f32 %v1598, %v1606
        %s1611 = scalar_lea.vmem %s4, 1
        %v1612 = vld [vmem:[%s1611] sm:$0x1]
        %v1614 = vperm.slane %v1612, 0
        %v1616 = vadd.f32 %v1609, %v1614
        %v1617 = vadd.f32 %v1610, %v1614
        %v1621 = vrot.slane %v1337, 3
        %v1622 = vrot.slane %v1338, 3
        %v1623 = vsel %vm930, %v1621, %v1622
        %v1624 = vrot.slane %v1339, 3
        %v1625 = vsel %vm930, %v1622, %v1624
        %v1628 = vadd.f32 %v1616, %v1623
        %v1629 = vadd.f32 %v1617, %v1625
        %1630 = vst [vmem:[#allocation2] sm:$0xff] %v1628
        %1631 = vst [vmem:[#allocation2 + $0x8] sm:$0xff] %v1629
        %v1632 = vld [vmem:[#allocation2] sm:$0xff]
        %v1633 = vld [vmem:[#allocation2 + $0x8] sm:$0xff]
        %v1634 = vadd.f32 %v1632, %v1633
        %v1635 = vrot.slane %v1634, 4
        %v1636 = vadd.f32 %v1634, %v1635
        %v1637 = vrot.slane %v1636, 2
        %v1638 = vadd.f32 %v1636, %v1637
        %v1639 = vrot.slane %v1638, 1
        %v1640 = vadd.f32 %v1638, %v1639
        %v1641 = vmul.f32 %v1640, 0.0625
        %v1642 = vpack.c.bf16 %v1641, %v1641
        %v1643 = vld [vmem:[#allocation9] sm:$0xf]
        %v1644 = vld [vmem:[#allocation9 + $0x4] sm:$0xf]
        %v1645 = vld [vmem:[#allocation9 + $0x8] sm:$0xf]
        %v1646 = vld [vmem:[#allocation9 + $0xc] sm:$0xf]
        %v1647 = vld [vmem:[#allocation9 + $0x10] sm:$0xf]
        %v1648 = vld [vmem:[#allocation9 + $0x14] sm:$0xf]
        %v1649 = vld [vmem:[#allocation9 + $0x18] sm:$0xf]
        %v1650 = vld [vmem:[#allocation9 + $0x1c] sm:$0xf]
        %v1651 = vld [vmem:[#allocation9 + $0x20] sm:$0xf]
        %v1652 = vld [vmem:[#allocation9 + $0x24] sm:$0xf]
        %v1653 = vld [vmem:[#allocation9 + $0x28] sm:$0xf]
        %v1654 = vld [vmem:[#allocation9 + $0x2c] sm:$0xf]
        %v1655 = vld [vmem:[#allocation9 + $0x30] sm:$0xf]
        %v1656 = vld [vmem:[#allocation9 + $0x34] sm:$0xf]
        %v1657 = vld [vmem:[#allocation9 + $0x38] sm:$0xf]
        %v1658 = vld [vmem:[#allocation9 + $0x3c] sm:$0xf]
        %v1659 = vld [vmem:[%s6] sm:$0x1]
        %v1676 = vunpack.c.l.b16 %v1643
        %v1677 = vunpack.c.l.b16 %v1644
        %v1678 = vunpack.c.l.b16 %v1645
        %v1679 = vunpack.c.l.b16 %v1646
        %v1680 = vunpack.c.l.b16 %v1647
        %v1681 = vunpack.c.l.b16 %v1648
        %v1682 = vunpack.c.l.b16 %v1649
        %v1683 = vunpack.c.l.b16 %v1650
        %v1684 = vunpack.c.l.b16 %v1651
        %v1685 = vunpack.c.l.b16 %v1652
        %v1686 = vunpack.c.l.b16 %v1653
        %v1687 = vunpack.c.l.b16 %v1654
        %v1688 = vunpack.c.l.b16 %v1655
        %v1689 = vunpack.c.l.b16 %v1656
        %v1690 = vunpack.c.l.b16 %v1657
        %v1691 = vunpack.c.l.b16 %v1658
        %v1692 = vpack.c.b16 %v1677, %v1676
        %v1693 = vpack.c.b16 %v1679, %v1678
        %v1694 = vpack.c.b16 %v1681, %v1680
        %v1695 = vpack.c.b16 %v1683, %v1682
        %v1696 = vpack.c.b16 %v1685, %v1684
        %v1697 = vpack.c.b16 %v1687, %v1686
        %v1698 = vpack.c.b16 %v1689, %v1688
        %v1699 = vpack.c.b16 %v1691, %v1690
        %1708 = vmatpush.bf16.msra.mxu0 %v1699
        %1709 = vmatpush.bf16.msra.mxu0 %v1698
        %1710 = vmatpush.bf16.msra.mxu0 %v1697
        %1711 = vmatpush.bf16.msra.mxu0 %v1696
        %1712 = vmatpush.bf16.msra.mxu0 %v1695
        %1713 = vmatpush.bf16.msra.mxu0 %v1694
        %1714 = vmatpush.bf16.msra.mxu0 %v1693
        %1715 = vmatpush.bf16.msra.mxu0 %v1692
        %1716 = vmatmul.bf16.gmra.mxu0 %v1642
        %v1717 = vpop.f32.mrf.mxu0
        %v1718 = vadd.f32 %v1659, %v1717
        %v1719 = vpop.f32.mrf.mxu0
        %1720 = vdwg.mxu0
        %1721 = vst [vmem:[%s347] sm:$0x1] %v1718
        %s1722 = sand.u32 %s186, 1
        %s1723 = scalar_lea.sflag [#allocation5], %s1722
        %s1724 = sand.u32 %s186, 1
        %s1725 = scalar_lea.vmem [#allocation11], %s1724
        // Predicated region
        $region65: #{tpu_custom_call.1} parent=47 // pred_check
          %p1726 = pneg %p196
        $region66: #{tpu_custom_call.1} parent=47 // pred_check_branch
          %1728 = sbr.rel (%p1726) target = $region68
        $region67: #{tpu_custom_call.1} parent=47 // pred_region
          %1730 = vsyncadd %s1723, 0
          %s1731 = scalar_lea.hbm %s7, %s26
          %s1733 = sshll.u32 %s1725, 4
          %s1734 = int_to_ptr.vmem [resolvable:$true] %s1733
          %s1735 = sshll.u32 %s1731, 4
          %s1736 = int_to_ptr.hbm [resolvable:$true] %s1735
          %1738 = dma.vmem_to_hbm [thread:$0]  %s1734, 16, %s1736, %s1723
        $region68: #{tpu_custom_call.1} parent=47 // pred_fallthru
          _
      $region48: #{tpu_custom_call.1} parent=5 // pred_fallthru
        _
      %p1739 = scmp.le.s32.totalorder 2, %s21
      // Predicated region
      $region69: #{tpu_custom_call.1} parent=5 // pred_check
        %p1740 = pneg %p1739
      $region70: #{tpu_custom_call.1} parent=5 // pred_check_branch
        %1742 = sbr.rel (%p1740) target = $region72
      $region71: #{tpu_custom_call.1} parent=5 // pred_region
        %s1743 = ssub.s32 %s21, 2
        // Predicated region
        $region73: #{tpu_custom_call.1} parent=71 // pred_check
          %p1744 = pneg %p202
        $region74: #{tpu_custom_call.1} parent=71 // pred_check_branch
          %1746 = sbr.rel (%p1744) target = $region76
        $region75: #{tpu_custom_call.1} parent=71 // pred_region
          %s1747 = sand.u32 %s187, 1
          %s1748 = scalar_lea.sflag [#allocation5], %s1747
          %s1749 = sand.u32 %s187, 1
          %s1750 = scalar_lea.vmem [#allocation11], %s1749
          %1752 = dma.done %s1748, 16
        $region76: #{tpu_custom_call.1} parent=71 // pred_fallthru
          _
      $region72: #{tpu_custom_call.1} parent=5 // pred_fallthru
        _
    $region6: #{tpu_custom_call.1} parent=1 // loop_footer
      %s25 = sadd.s32 1, %s21
    $region7: #{tpu_custom_call.1} parent=1 // loop_footer_branch
      %20 = sbr.rel target = $region3
    $region8: #{tpu_custom_call.1} parent=1 // loop_exit
      _
    %1753 = vsyncpa [#allocation4], 1
    %s1754 = scalar_lea.sflag [#allocation4], 1
    %1755 = vsyncpa %s1754, 1
    %1756 = vsyncpa [#allocation7], 1
    %1757 = vsyncpa [#allocation10], 1
    %1758 = vsyncpa [#allocation5], 1
    %s1759 = scalar_lea.sflag [#allocation5], 1
    %1760 = vsyncpa %s1759, 1

// kernel: tpu_custom_call.1
$region0: #{tpu_custom_call.1}
  #allocation0 [shape = 'u32[]', space=smem, size = 0x4, offset = 0x4, fixed_abs, tag = 'smem constant byte address 0x4 - core index']
  #allocation1 [shape = 'u32[72,128]{1,0:T(1,128)}', space=vmem, size = 0x9000, scoped, tag = 'internal scratch']
  #allocation2 [shape = 'f32[1,48,128]{2,1,0:T(8,128)}', space=vmem, size = 0x6000, scoped, tag = 'scratch operand']
  %s0 = inlined_call_operand.hbm [shape: bf16[2,48,128], index: 0, kind: input, shape index: {}]
  %s1 = inlined_call_operand.hbm [shape: bf16[128,896], index: 1, kind: input, shape index: {}]
  %s2 = inlined_call_operand.vmem [shape: f32[1,128], index: 2, kind: input, shape index: {}]
  %s3 = inlined_call_operand.hbm [shape: bf16[2,128,384], index: 3, kind: input, shape index: {}]
  %s4 = inlined_call_operand.vmem [shape: f32[2,1,128], index: 4, kind: input, shape index: {}]
  %s5 = inlined_call_operand.hbm [shape: bf16[128,128], index: 5, kind: input, shape index: {}]
  %s6 = inlined_call_operand.vmem [shape: f32[1,128], index: 6, kind: input, shape index: {}]
  %s7 = inlined_call_operand.hbm [shape: f32[2,1,128], index: 7, kind: output, shape index: {}]
  %s8 = sld [smem:[#allocation0]]
  $region77: #{tpu_custom_call.1} parent=0
    _
  %s10 = ssub.s32 1, %s8
  %s11 = scalar_select 0, %s10, %s8
  $region1: #{tpu_custom_call.1} parent=0
    #allocation3 [shape = 'u8[24576]{0}', space=vmem, size = 0x6000, scoped, tag = 'input window, operand 0']
    #allocation4 [shape = 's32[2]{0}', space=sflag, size = 0x8, scoped, tag = 'scoped memory for tpu_custom_call.1']
    #allocation5 [shape = 's32[2]{0}', space=sflag, size = 0x8, scoped, tag = 'scoped memory for tpu_custom_call.1']
    #allocation6 [shape = 'u8[229376]{0}', space=vmem, size = 0x38000, scoped, tag = 'input window, operand 1, single buffered']
    #allocation7 [shape = 's32[1]{0}', space=sflag, size = 0x4, scoped, tag = 'scoped memory for tpu_custom_call.1']
    #allocation8 [shape = 'u8[196608]{0}', space=vmem, size = 0x30000, scoped, tag = 'input window, operand 3, single buffered']
    #allocation9 [shape = 'u8[32768]{0}', space=vmem, size = 0x8000, scoped, tag = 'input window, operand 5, single buffered']
    #allocation10 [shape = 's32[1]{0}', space=sflag, size = 0x4, scoped, tag = 'scoped memory for tpu_custom_call.1']
    #allocation11 [shape = 'u8[1024]{0}', space=vmem, size = 0x400, scoped, tag = 'output window, operand 0']
    %12 = vsyncpa [#allocation4], 0
    %s13 = scalar_lea.sflag [#allocation4], 1
    %14 = vsyncpa %s13, 0
    %15 = vsyncpa [#allocation7], 0
    %16 = vsyncpa [#allocation10], 0
    %17 = vsyncpa [#allocation5], 0
    %s18 = scalar_lea.sflag [#allocation5], 1
    %19 = vsyncpa %s18, 0
    loop: start=0, step=1, limit=4
    $region2: #{tpu_custom_call.1} parent=1 // loop_pre_header
      _
    $region3: #{tpu_custom_call.1} parent=1 // loop_header
      %s21 = sphi 0, %s25
      %p22 = scmp.ge.s32.totalorder %s21, 4
      %s31 = sphi 0, %s33
      %s34 = sphi 0, %s31
      %s35 = sphi 0, %s34
      %s51 = sphi 0, %s35
      %s55 = sphi 0, %s55
      %s57 = sphi 0, %s55
      %s58 = sphi 0, %s57
      %s72 = sphi 0, %s58
      %s76 = sphi 0, %s76
      %s78 = sphi 0, %s76
      %s79 = sphi 0, %s78
      %s93 = sphi 0, %s79
      %s97 = sphi 0, %s97
      %s99 = sphi 0, %s97
      %s100 = sphi 0, %s99
      %s114 = sphi 0, %s100
      %s118 = sphi 0, %s118
      %s120 = sphi 0, %s118
      %s121 = sphi 0, %s120
      %s135 = sphi 0, %s121
      %s139 = sphi 0, %s139
      %s141 = sphi 0, %s139
      %s142 = sphi 0, %s141
      %s156 = sphi 0, %s142
      %s160 = sphi 0, %s160
      %s162 = sphi 0, %s160
      %s163 = sphi 0, %s162
      %s177 = sphi 0, %s163
      %s183 = sphi 0, %s185
      %s186 = sphi 0, %s183
      %s187 = sphi 0, %s186
      %s203 = sphi 0, %s187
    $region4: #{tpu_custom_call.1} parent=1 // loop_header_branch
      %24 = sbr.rel (%p22) target = $region8
    $region5: #{tpu_custom_call.1} parent=1 // loop_body
      %s26 = ssub.s32 %s21, 1
      %s27 = ssub.s32 %s21, 2
      %s28 = sadd.s32 %s21, 1
      %s29 = ssub.s32 %s21, %s28
      %p30 = scmp.eq.s32.totalorder %s29, 0
      %s32 = sadd.s32 %s31, 1
      %s33 = scalar_select %p30, %s31, %s32
      %p36 = pneg %p30
      %p37 = scmp.eq.s32.totalorder %s21, 1
      %p38 = por %p36, %p37
      %p39 = scmp.ne.s32.totalorder %s31, %s34
      %p40 = scmp.eq.s32.totalorder %s21, 0
      %p41 = por %p39, %p40
      %p42 = scmp.ne.s32.totalorder %s31, %s34
      %p43 = scmp.eq.s32.totalorder %s26, 1
      %p44 = por %p42, %p43
      %p45 = scmp.ne.s32.totalorder %s34, %s35
      %p46 = scmp.eq.s32.totalorder %s26, 0
      %p47 = por %p45, %p46
      %p48 = scmp.ne.s32.totalorder %s34, %s35
      %p49 = scmp.eq.s32.totalorder %s27, 1
      %p50 = por %p48, %p49
      %p52 = scmp.ne.s32.totalorder %s35, %s51
      %p53 = scmp.eq.s32.totalorder %s27, 0
      %p54 = por %p52, %p53
      %s56 = sadd.s32 %s55, 1
      %p59 = scmp.eq.s32.totalorder %s21, 1
      %p60 = scmp.ne.s32.totalorder %s55, %s57
      %p61 = scmp.eq.s32.totalorder %s21, 0
      %p62 = por %p60, %p61
      %p63 = scmp.ne.s32.totalorder %s55, %s57
      %p64 = scmp.eq.s32.totalorder %s26, 1
      %p65 = por %p63, %p64
      %p66 = scmp.ne.s32.totalorder %s57, %s58
      %p67 = scmp.eq.s32.totalorder %s26, 0
      %p68 = por %p66, %p67
      %p69 = scmp.ne.s32.totalorder %s57, %s58
      %p70 = scmp.eq.s32.totalorder %s27, 1
      %p71 = por %p69, %p70
      %p73 = scmp.ne.s32.totalorder %s58, %s72
      %p74 = scmp.eq.s32.totalorder %s27, 0
      %p75 = por %p73, %p74
      %s77 = sadd.s32 %s76, 1
      %p80 = scmp.eq.s32.totalorder %s21, 1
      %p81 = scmp.ne.s32.totalorder %s76, %s78
      %p82 = scmp.eq.s32.totalorder %s21, 0
      %p83 = por %p81, %p82
      %p84 = scmp.ne.s32.totalorder %s76, %s78
      %p85 = scmp.eq.s32.totalorder %s26, 1
      %p86 = por %p84, %p85
      %p87 = scmp.ne.s32.totalorder %s78, %s79
      %p88 = scmp.eq.s32.totalorder %s26, 0
      %p89 = por %p87, %p88
      %p90 = scmp.ne.s32.totalorder %s78, %s79
      %p91 = scmp.eq.s32.totalorder %s27, 1
      %p92 = por %p90, %p91
      %p94 = scmp.ne.s32.totalorder %s79, %s93
      %p95 = scmp.eq.s32.totalorder %s27, 0
      %p96 = por %p94, %p95
      %s98 = sadd.s32 %s97, 1
      %p101 = scmp.eq.s32.totalorder %s21, 1
      %p102 = scmp.ne.s32.totalorder %s97, %s99
      %p103 = scmp.eq.s32.totalorder %s21, 0
      %p104 = por %p102, %p103
      %p105 = scmp.ne.s32.totalorder %s97, %s99
      %p106 = scmp.eq.s32.totalorder %s26, 1
      %p107 = por %p105, %p106
      %p108 = scmp.ne.s32.totalorder %s99, %s100
      %p109 = scmp.eq.s32.totalorder %s26, 0
      %p110 = por %p108, %p109
      %p111 = scmp.ne.s32.totalorder %s99, %s100
      %p112 = scmp.eq.s32.totalorder %s27, 1
      %p113 = por %p111, %p112
      %p115 = scmp.ne.s32.totalorder %s100, %s114
      %p116 = scmp.eq.s32.totalorder %s27, 0
      %p117 = por %p115, %p116
      %s119 = sadd.s32 %s118, 1
      %p122 = scmp.eq.s32.totalorder %s21, 1
      %p123 = scmp.ne.s32.totalorder %s118, %s120
      %p124 = scmp.eq.s32.totalorder %s21, 0
      %p125 = por %p123, %p124
      %p126 = scmp.ne.s32.totalorder %s118, %s120
      %p127 = scmp.eq.s32.totalorder %s26, 1
      %p128 = por %p126, %p127
      %p129 = scmp.ne.s32.totalorder %s120, %s121
      %p130 = scmp.eq.s32.totalorder %s26, 0
      %p131 = por %p129, %p130
      %p132 = scmp.ne.s32.totalorder %s120, %s121
      %p133 = scmp.eq.s32.totalorder %s27, 1
      %p134 = por %p132, %p133
      %p136 = scmp.ne.s32.totalorder %s121, %s135
      %p137 = scmp.eq.s32.totalorder %s27, 0
      %p138 = por %p136, %p137
      %s140 = sadd.s32 %s139, 1
      %p143 = scmp.eq.s32.totalorder %s21, 1
      %p144 = scmp.ne.s32.totalorder %s139, %s141
      %p145 = scmp.eq.s32.totalorder %s21, 0
      %p146 = por %p144, %p145
      %p147 = scmp.ne.s32.totalorder %s139, %s141
      %p148 = scmp.eq.s32.totalorder %s26, 1
      %p149 = por %p147, %p148
      %p150 = scmp.ne.s32.totalorder %s141, %s142
      %p151 = scmp.eq.s32.totalorder %s26, 0
      %p152 = por %p150, %p151
      %p153 = scmp.ne.s32.totalorder %s141, %s142
      %p154 = scmp.eq.s32.totalorder %s27, 1
      %p155 = por %p153, %p154
      %p157 = scmp.ne.s32.totalorder %s142, %s156
      %p158 = scmp.eq.s32.totalorder %s27, 0
      %p159 = por %p157, %p158
      %s161 = sadd.s32 %s160, 1
      %p164 = scmp.eq.s32.totalorder %s21, 1
      %p165 = scmp.ne.s32.totalorder %s160, %s162
      %p166 = scmp.eq.s32.totalorder %s21, 0
      %p167 = por %p165, %p166
      %p168 = scmp.ne.s32.totalorder %s160, %s162
      %p169 = scmp.eq.s32.totalorder %s26, 1
      %p170 = por %p168, %p169
      %p171 = scmp.ne.s32.totalorder %s162, %s163
      %p172 = scmp.eq.s32.totalorder %s26, 0
      %p173 = por %p171, %p172
      %p174 = scmp.ne.s32.totalorder %s162, %s163
      %p175 = scmp.eq.s32.totalorder %s27, 1
      %p176 = por %p174, %p175
      %p178 = scmp.ne.s32.totalorder %s163, %s177
      %p179 = scmp.eq.s32.totalorder %s27, 0
      %p180 = por %p178, %p179
      %s181 = ssub.s32 %s21, %s28
      %p182 = scmp.eq.s32.totalorder %s181, 0
      %s184 = sadd.s32 %s183, 1
      %s185 = scalar_select %p182, %s183, %s184
      %p188 = pneg %p182
      %p189 = scmp.eq.s32.totalorder %s21, 1
      %p190 = por %p188, %p189
      %p191 = scmp.ne.s32.totalorder %s183, %s186
      %p192 = scmp.eq.s32.totalorder %s21, 0
      %p193 = por %p191, %p192
      %p194 = scmp.ne.s32.totalorder %s183, %s186
      %p195 = scmp.eq.s32.totalorder %s26, 1
      %p196 = por %p194, %p195
      %p197 = scmp.ne.s32.totalorder %s186, %s187
      %p198 = scmp.eq.s32.totalorder %s26, 0
      %p199 = por %p197, %p198
      %p200 = scmp.ne.s32.totalorder %s186, %s187
      %p201 = scmp.eq.s32.totalorder %s27, 1
      %p202 = por %p200, %p201
      %p204 = scmp.ne.s32.totalorder %s187, %s203
      %p205 = scmp.eq.s32.totalorder %s27, 0
      %p206 = por %p204, %p205
      %p207 = scmp.le.s32.totalorder 1, %s21
      %p208 = scmp.lt.s32.totalorder %s21, 3
      %p209 = pnand %p207, %p208
      %p210 = pneg %p209
      // Predicated region
      $region9: #{tpu_custom_call.1} parent=5 // pred_check
        _
      $region10: #{tpu_custom_call.1} parent=5 // pred_check_branch
        %212 = sbr.rel (%p209) target = $region12
      $region11: #{tpu_custom_call.1} parent=5 // pred_region
        %s213 = ssub.s32 %s21, 1
        // Predicated region
        $region13: #{tpu_custom_call.1} parent=11 // pred_check
          %p214 = pneg %p68
        $region14: #{tpu_custom_call.1} parent=11 // pred_check_branch
          %216 = sbr.rel (%p214) target = $region16
        $region15: #{tpu_custom_call.1} parent=11 // pred_region
          %218 = vsyncadd [#allocation7], 0
          %s219 = sshll.u32 %s1, 4
          %s220 = int_to_ptr.hbm [resolvable:$true] %s219
          %s221 = sshll.u32 [#allocation6], 4
          %s222 = int_to_ptr.vmem [resolvable:$true] %s221
          %227 = dma.hbm_to_vmem [thread:$0]  %s220, 7168, %s222, [#allocation7], 448, 448, 28
        $region16: #{tpu_custom_call.1} parent=11 // pred_fallthru
          _
        // Predicated region
        $region17: #{tpu_custom_call.1} parent=11 // pred_check
          %p228 = pneg %p89
        $region18: #{tpu_custom_call.1} parent=11 // pred_check_branch
          %230 = sbr.rel (%p228) target = $region20
        $region19: #{tpu_custom_call.1} parent=11 // pred_region
          _
        $region20: #{tpu_custom_call.1} parent=11 // pred_fallthru
          _
        // Predicated region
        $region21: #{tpu_custom_call.1} parent=11 // pred_check
          %p231 = pneg %p110
        $region22: #{tpu_custom_call.1} parent=11 // pred_check_branch
          %233 = sbr.rel (%p231) target = $region24
        $region23: #{tpu_custom_call.1} parent=11 // pred_region
          %235 = vsyncadd [#allocation7], 0
          %s236 = sshll.u32 %s3, 4
          %s237 = int_to_ptr.hbm [resolvable:$true] %s236
          %s238 = sshll.u32 [#allocation8], 4
          %s239 = int_to_ptr.vmem [resolvable:$true] %s238
          %244 = dma.hbm_to_vmem [thread:$0]  %s237, 6144, %s239, [#allocation7], 192, 192, 12
        $region24: #{tpu_custom_call.1} parent=11 // pred_fallthru
          _
        // Predicated region
        $region25: #{tpu_custom_call.1} parent=11 // pred_check
          %p245 = pneg %p131
        $region26: #{tpu_custom_call.1} parent=11 // pred_check_branch
          %247 = sbr.rel (%p245) target = $region28
        $region27: #{tpu_custom_call.1} parent=11 // pred_region
          _
        $region28: #{tpu_custom_call.1} parent=11 // pred_fallthru
          _
        // Predicated region
        $region29: #{tpu_custom_call.1} parent=11 // pred_check
          %p248 = pneg %p152
        $region30: #{tpu_custom_call.1} parent=11 // pred_check_branch
          %250 = sbr.rel (%p248) target = $region32
        $region31: #{tpu_custom_call.1} parent=11 // pred_region
          %252 = vsyncadd [#allocation10], 0
          %s253 = sshll.u32 %s5, 4
          %s254 = int_to_ptr.hbm [resolvable:$true] %s253
          %s255 = sshll.u32 [#allocation9], 4
          %s256 = int_to_ptr.vmem [resolvable:$true] %s255
          %261 = dma.hbm_to_vmem [thread:$0]  %s254, 1024, %s256, [#allocation10], 64, 64, 4
        $region32: #{tpu_custom_call.1} parent=11 // pred_fallthru
          _
        // Predicated region
        $region33: #{tpu_custom_call.1} parent=11 // pred_check
          %p262 = pneg %p173
        $region34: #{tpu_custom_call.1} parent=11 // pred_check_branch
          %264 = sbr.rel (%p262) target = $region36
        $region35: #{tpu_custom_call.1} parent=11 // pred_region
          _
        $region36: #{tpu_custom_call.1} parent=11 // pred_fallthru
          _
      $region12: #{tpu_custom_call.1} parent=5 // pred_fallthru
        _
      %p265 = scmp.lt.s32.totalorder %s21, 2
      // Predicated region
      $region37: #{tpu_custom_call.1} parent=5 // pred_check
        %p266 = pneg %p265
      $region38: #{tpu_custom_call.1} parent=5 // pred_check_branch
        %268 = sbr.rel (%p266) target = $region40
      $region39: #{tpu_custom_call.1} parent=5 // pred_region
        // Predicated region
        $region41: #{tpu_custom_call.1} parent=39 // pred_check
          %p269 = pneg %p41
        $region42: #{tpu_custom_call.1} parent=39 // pred_check_branch
          %271 = sbr.rel (%p269) target = $region44
        $region43: #{tpu_custom_call.1} parent=39 // pred_region
          %s272 = sand.u32 %s31, 1
          %s273 = scalar_lea.sflag [#allocation4], %s272
          %s274 = sand.u32 %s31, 1
          %s275 = smul.addr %s274, 24
          %s276 = scalar_lea.vmem [#allocation3], %s275
          %278 = vsyncadd %s273, 0
          %s279 = smul.addr %s21, 6
          %s280 = smul.addr %s279, 4
          %s281 = scalar_lea.hbm %s0, %s280
          %s282 = sshll.u32 %s281, 4
          %s283 = int_to_ptr.hbm [resolvable:$true] %s282
          %s284 = sshll.u32 %s276, 4
          %s285 = int_to_ptr.vmem [resolvable:$true] %s284
          %290 = dma.hbm_to_vmem [thread:$0]  %s283, 384, %s285, %s273, 64, 64, 4
        $region44: #{tpu_custom_call.1} parent=39 // pred_fallthru
          _
      $region40: #{tpu_custom_call.1} parent=5 // pred_fallthru
        _
      %p291 = scmp.le.s32.totalorder 1, %s21
      %p292 = scmp.lt.s32.totalorder %s21, 3
      %p293 = pnand %p291, %p292
      %p294 = pneg %p293
      // Predicated region
      $region45: #{tpu_custom_call.1} parent=5 // pred_check
        _
      $region46: #{tpu_custom_call.1} parent=5 // pred_check_branch
        %296 = sbr.rel (%p293) target = $region48
      $region47: #{tpu_custom_call.1} parent=5 // pred_region
        %s297 = ssub.s32 %s21, 1
        %s298 = sand.u32 %s34, 1
        %s299 = scalar_lea.sflag [#allocation4], %s298
        %s300 = sand.u32 %s34, 1
        %s301 = smul.addr %s300, 24
        %s302 = scalar_lea.vmem [#allocation3], %s301
        // Predicated region
        $region49: #{tpu_custom_call.1} parent=47 // pred_check
          %p303 = pneg %p47
        $region50: #{tpu_custom_call.1} parent=47 // pred_check_branch
          %305 = sbr.rel (%p303) target = $region52
        $region51: #{tpu_custom_call.1} parent=47 // pred_region
          %307 = dma.done %s299, 384
        $region52: #{tpu_custom_call.1} parent=47 // pred_fallthru
          _
        // Predicated region
        $region53: #{tpu_custom_call.1} parent=47 // pred_check
          %p308 = pneg %p68
        $region54: #{tpu_custom_call.1} parent=47 // pred_check_branch
          %310 = sbr.rel (%p308) target = $region56
        $region55: #{tpu_custom_call.1} parent=47 // pred_region
          %312 = dma.done [#allocation7], 7168
        $region56: #{tpu_custom_call.1} parent=47 // pred_fallthru
          _
        // Predicated region
        $region57: #{tpu_custom_call.1} parent=47 // pred_check
          %p313 = pneg %p110
        $region58: #{tpu_custom_call.1} parent=47 // pred_check_branch
          %315 = sbr.rel (%p313) target = $region60
        $region59: #{tpu_custom_call.1} parent=47 // pred_region
          %317 = dma.done [#allocation7], 6144
        $region60: #{tpu_custom_call.1} parent=47 // pred_fallthru
          _
        // Predicated region
        $region61: #{tpu_custom_call.1} parent=47 // pred_check
          %p318 = pneg %p152
        $region62: #{tpu_custom_call.1} parent=47 // pred_check_branch
          %320 = sbr.rel (%p318) target = $region64
        $region63: #{tpu_custom_call.1} parent=47 // pred_region
          %322 = dma.done [#allocation10], 1024
        $region64: #{tpu_custom_call.1} parent=47 // pred_fallthru
          _
        %s323 = sand.u32 %s34, 1
        %s324 = scalar_lea.sflag [#allocation4], %s323
        %s325 = sand.u32 %s34, 1
        %s326 = smul.addr %s325, 24
        %s327 = scalar_lea.vmem [#allocation3], %s326
        %p328 = pneg %p47
        %p329 = pneg %p44
        %p330 = pneg %p68
        %p331 = pneg %p65
        %p332 = pneg %p89
        %p333 = pneg %p86
        %p334 = pneg %p110
        %p335 = pneg %p107
        %p336 = pneg %p131
        %p337 = pneg %p128
        %p338 = pneg %p152
        %p339 = pneg %p149
        %p340 = pneg %p173
        %p341 = pneg %p170
        %p342 = pneg %p199
        %p343 = pneg %p196
        %s344 = sand.u32 %s186, 1
        %s345 = scalar_lea.sflag [#allocation5], %s344
        %s346 = sand.u32 %s186, 1
        %s347 = scalar_lea.vmem [#allocation11], %s346
        %v348 = vld [vmem:[%s302] sm:$0xf]
        %v349 = vld [vmem:[%s302 + $0x4] sm:$0xf]
        %v350 = vld [vmem:[%s302 + $0x8] sm:$0xf]
        %v351 = vld [vmem:[%s302 + $0xc] sm:$0xf]
        %v352 = vld [vmem:[%s302 + $0x10] sm:$0xf]
        %v353 = vld [vmem:[%s302 + $0x14] sm:$0xf]
        %v354 = vld [vmem:[#allocation6] sm:$0xff]
        %v355 = vld [vmem:[#allocation6 + $0x8] sm:$0xff]
        %v356 = vld [vmem:[#allocation6 + $0x10] sm:$0xff]
        %v357 = vld [vmem:[#allocation6 + $0x18] sm:$0xf]
        %v358 = vld [vmem:[#allocation6 + $0x1c] sm:$0xff]
        %v359 = vld [vmem:[#allocation6 + $0x24] sm:$0xff]
        %v360 = vld [vmem:[#allocation6 + $0x2c] sm:$0xff]
        %v361 = vld [vmem:[#allocation6 + $0x34] sm:$0xf]
        %v362 = vld [vmem:[#allocation6 + $0x38] sm:$0xff]
        %v363 = vld [vmem:[#allocation6 + $0x40] sm:$0xff]
        %v364 = vld [vmem:[#allocation6 + $0x48] sm:$0xff]
        %v365 = vld [vmem:[#allocation6 + $0x50] sm:$0xf]
        %v366 = vld [vmem:[#allocation6 + $0x54] sm:$0xff]
        %v367 = vld [vmem:[#allocation6 + $0x5c] sm:$0xff]
        %v368 = vld [vmem:[#allocation6 + $0x64] sm:$0xff]
        %v369 = vld [vmem:[#allocation6 + $0x6c] sm:$0xf]
        %v370 = vld [vmem:[#allocation6 + $0x70] sm:$0xff]
        %v371 = vld [vmem:[#allocation6 + $0x78] sm:$0xff]
        %v372 = vld [vmem:[#allocation6 + $0x80] sm:$0xff]
        %v373 = vld [vmem:[#allocation6 + $0x88] sm:$0xf]
        %v374 = vld [vmem:[#allocation6 + $0x8c] sm:$0xff]
        %v375 = vld [vmem:[#allocation6 + $0x94] sm:$0xff]
        %v376 = vld [vmem:[#allocation6 + $0x9c] sm:$0xff]
        %v377 = vld [vmem:[#allocation6 + $0xa4] sm:$0xf]
        %v378 = vld [vmem:[#allocation6 + $0xa8] sm:$0xff]
        %v379 = vld [vmem:[#allocation6 + $0xb0] sm:$0xff]
        %v380 = vld [vmem:[#allocation6 + $0xb8] sm:$0xff]
        %v381 = vld [vmem:[#allocation6 + $0xc0] sm:$0xf]
        %v382 = vld [vmem:[#allocation6 + $0xc4] sm:$0xff]
        %v383 = vld [vmem:[#allocation6 + $0xcc] sm:$0xff]
        %v384 = vld [vmem:[#allocation6 + $0xd4] sm:$0xff]
        %v385 = vld [vmem:[#allocation6 + $0xdc] sm:$0xf]
        %v386 = vld [vmem:[#allocation6 + $0xe0] sm:$0xff]
        %v387 = vld [vmem:[#allocation6 + $0xe8] sm:$0xff]
        %v388 = vld [vmem:[#allocation6 + $0xf0] sm:$0xff]
        %v389 = vld [vmem:[#allocation6 + $0xf8] sm:$0xf]
        %v390 = vld [vmem:[#allocation6 + $0xfc] sm:$0xff]
        %v391 = vld [vmem:[#allocation6 + $0x104] sm:$0xff]
        %v392 = vld [vmem:[#allocation6 + $0x10c] sm:$0xff]
        %v393 = vld [vmem:[#allocation6 + $0x114] sm:$0xf]
        %v394 = vld [vmem:[#allocation6 + $0x118] sm:$0xff]
        %v395 = vld [vmem:[#allocation6 + $0x120] sm:$0xff]
        %v396 = vld [vmem:[#allocation6 + $0x128] sm:$0xff]
        %v397 = vld [vmem:[#allocation6 + $0x130] sm:$0xf]
        %v398 = vld [vmem:[#allocation6 + $0x134] sm:$0xff]
        %v399 = vld [vmem:[#allocation6 + $0x13c] sm:$0xff]
        %v400 = vld [vmem:[#allocation6 + $0x144] sm:$0xff]
        %v401 = vld [vmem:[#allocation6 + $0x14c] sm:$0xf]
        %v402 = vld [vmem:[#allocation6 + $0x150] sm:$0xff]
        %v403 = vld [vmem:[#allocation6 + $0x158] sm:$0xff]
        %v404 = vld [vmem:[#allocation6 + $0x160] sm:$0xff]
        %v405 = vld [vmem:[#allocation6 + $0x168] sm:$0xf]
        %v406 = vld [vmem:[#allocation6 + $0x16c] sm:$0xff]
        %v407 = vld [vmem:[#allocation6 + $0x174] sm:$0xff]
        %v408 = vld [vmem:[#allocation6 + $0x17c] sm:$0xff]
        %v409 = vld [vmem:[#allocation6 + $0x184] sm:$0xf]
        %v410 = vld [vmem:[#allocation6 + $0x188] sm:$0xff]
        %v411 = vld [vmem:[#allocation6 + $0x190] sm:$0xff]
        %v412 = vld [vmem:[#allocation6 + $0x198] sm:$0xff]
        %v413 = vld [vmem:[#allocation6 + $0x1a0] sm:$0xf]
        %v414 = vld [vmem:[#allocation6 + $0x1a4] sm:$0xff]
        %v415 = vld [vmem:[#allocation6 + $0x1ac] sm:$0xff]
        %v416 = vld [vmem:[#allocation6 + $0x1b4] sm:$0xff]
        %v417 = vld [vmem:[#allocation6 + $0x1bc] sm:$0xf]
        %v424 = vunpack.c.l.b16 %v348
        %v425 = vunpack.c.l.b16 %v349
        %v426 = vunpack.c.l.b16 %v350
        %v427 = vunpack.c.l.b16 %v351
        %v428 = vunpack.c.l.b16 %v352
        %v429 = vunpack.c.l.b16 %v353
        %v430 = vpack.c.b16 %v425, %v424
        %v431 = vpack.c.b16 %v427, %v426
        %v432 = vpack.c.b16 %v429, %v428
        %v500 = vunpack.c.l.b16 %v354
        %v501 = vunpack.c.h.b16 %v354
        %v502 = vunpack.c.l.b16 %v355
        %v503 = vunpack.c.h.b16 %v355
        %v504 = vunpack.c.l.b16 %v356
        %v505 = vunpack.c.h.b16 %v356
        %v506 = vunpack.c.l.b16 %v357
        %v507 = vunpack.c.l.b16 %v358
        %v508 = vunpack.c.h.b16 %v358
        %v509 = vunpack.c.l.b16 %v359
        %v510 = vunpack.c.h.b16 %v359
        %v511 = vunpack.c.l.b16 %v360
        %v512 = vunpack.c.h.b16 %v360
        %v513 = vunpack.c.l.b16 %v361
        %v514 = vunpack.c.l.b16 %v362
        %v515 = vunpack.c.h.b16 %v362
        %v516 = vunpack.c.l.b16 %v363
        %v517 = vunpack.c.h.b16 %v363
        %v518 = vunpack.c.l.b16 %v364
        %v519 = vunpack.c.h.b16 %v364
        %v520 = vunpack.c.l.b16 %v365
        %v521 = vunpack.c.l.b16 %v366
        %v522 = vunpack.c.h.b16 %v366
        %v523 = vunpack.c.l.b16 %v367
        %v524 = vunpack.c.h.b16 %v367
        %v525 = vunpack.c.l.b16 %v368
        %v526 = vunpack.c.h.b16 %v368
        %v527 = vunpack.c.l.b16 %v369
        %v528 = vunpack.c.l.b16 %v370
        %v529 = vunpack.c.h.b16 %v370
        %v530 = vunpack.c.l.b16 %v371
        %v531 = vunpack.c.h.b16 %v371
        %v532 = vunpack.c.l.b16 %v372
        %v533 = vunpack.c.h.b16 %v372
        %v534 = vunpack.c.l.b16 %v373
        %v535 = vunpack.c.l.b16 %v374
        %v536 = vunpack.c.h.b16 %v374
        %v537 = vunpack.c.l.b16 %v375
        %v538 = vunpack.c.h.b16 %v375
        %v539 = vunpack.c.l.b16 %v376
        %v540 = vunpack.c.h.b16 %v376
        %v541 = vunpack.c.l.b16 %v377
        %v542 = vunpack.c.l.b16 %v378
        %v543 = vunpack.c.h.b16 %v378
        %v544 = vunpack.c.l.b16 %v379
        %v545 = vunpack.c.h.b16 %v379
        %v546 = vunpack.c.l.b16 %v380
        %v547 = vunpack.c.h.b16 %v380
        %v548 = vunpack.c.l.b16 %v381
        %v549 = vunpack.c.l.b16 %v382
        %v550 = vunpack.c.h.b16 %v382
        %v551 = vunpack.c.l.b16 %v383
        %v552 = vunpack.c.h.b16 %v383
        %v553 = vunpack.c.l.b16 %v384
        %v554 = vunpack.c.h.b16 %v384
        %v555 = vunpack.c.l.b16 %v385
        %v556 = vunpack.c.l.b16 %v386
        %v557 = vunpack.c.h.b16 %v386
        %v558 = vunpack.c.l.b16 %v387
        %v559 = vunpack.c.h.b16 %v387
        %v560 = vunpack.c.l.b16 %v388
        %v561 = vunpack.c.h.b16 %v388
        %v562 = vunpack.c.l.b16 %v389
        %v563 = vunpack.c.l.b16 %v390
        %v564 = vunpack.c.h.b16 %v390
        %v565 = vunpack.c.l.b16 %v391
        %v566 = vunpack.c.h.b16 %v391
        %v567 = vunpack.c.l.b16 %v392
        %v568 = vunpack.c.h.b16 %v392
        %v569 = vunpack.c.l.b16 %v393
        %v570 = vunpack.c.l.b16 %v394
        %v571 = vunpack.c.h.b16 %v394
        %v572 = vunpack.c.l.b16 %v395
        %v573 = vunpack.c.h.b16 %v395
        %v574 = vunpack.c.l.b16 %v396
        %v575 = vunpack.c.h.b16 %v396
        %v576 = vunpack.c.l.b16 %v397
        %v577 = vunpack.c.l.b16 %v398
        %v578 = vunpack.c.h.b16 %v398
        %v579 = vunpack.c.l.b16 %v399
        %v580 = vunpack.c.h.b16 %v399
        %v581 = vunpack.c.l.b16 %v400
        %v582 = vunpack.c.h.b16 %v400
        %v583 = vunpack.c.l.b16 %v401
        %v584 = vunpack.c.l.b16 %v402
        %v585 = vunpack.c.h.b16 %v402
        %v586 = vunpack.c.l.b16 %v403
        %v587 = vunpack.c.h.b16 %v403
        %v588 = vunpack.c.l.b16 %v404
        %v589 = vunpack.c.h.b16 %v404
        %v590 = vunpack.c.l.b16 %v405
        %v591 = vunpack.c.l.b16 %v406
        %v592 = vunpack.c.h.b16 %v406
        %v593 = vunpack.c.l.b16 %v407
        %v594 = vunpack.c.h.b16 %v407
        %v595 = vunpack.c.l.b16 %v408
        %v596 = vunpack.c.h.b16 %v408
        %v597 = vunpack.c.l.b16 %v409
        %v598 = vunpack.c.l.b16 %v410
        %v599 = vunpack.c.h.b16 %v410
        %v600 = vunpack.c.l.b16 %v411
        %v601 = vunpack.c.h.b16 %v411
        %v602 = vunpack.c.l.b16 %v412
        %v603 = vunpack.c.h.b16 %v412
        %v604 = vunpack.c.l.b16 %v413
        %v605 = vunpack.c.l.b16 %v414
        %v606 = vunpack.c.h.b16 %v414
        %v607 = vunpack.c.l.b16 %v415
        %v608 = vunpack.c.h.b16 %v415
        %v609 = vunpack.c.l.b16 %v416
        %v610 = vunpack.c.h.b16 %v416
        %v611 = vunpack.c.l.b16 %v417
        %v612 = vpack.c.b16 %v507, %v500
        %v613 = vpack.c.b16 %v508, %v501
        %v614 = vpack.c.b16 %v509, %v502
        %v615 = vpack.c.b16 %v510, %v503
        %v616 = vpack.c.b16 %v511, %v504
        %v617 = vpack.c.b16 %v512, %v505
        %v618 = vpack.c.b16 %v513, %v506
        %v619 = vpack.c.b16 %v521, %v514
        %v620 = vpack.c.b16 %v522, %v515
        %v621 = vpack.c.b16 %v523, %v516
        %v622 = vpack.c.b16 %v524, %v517
        %v623 = vpack.c.b16 %v525, %v518
        %v624 = vpack.c.b16 %v526, %v519
        %v625 = vpack.c.b16 %v527, %v520
        %v626 = vpack.c.b16 %v535, %v528
        %v627 = vpack.c.b16 %v536, %v529
        %v628 = vpack.c.b16 %v537, %v530
        %v629 = vpack.c.b16 %v538, %v531
        %v630 = vpack.c.b16 %v539, %v532
        %v631 = vpack.c.b16 %v540, %v533
        %v632 = vpack.c.b16 %v541, %v534
        %v633 = vpack.c.b16 %v549, %v542
        %v634 = vpack.c.b16 %v550, %v543
        %v635 = vpack.c.b16 %v551, %v544
        %v636 = vpack.c.b16 %v552, %v545
        %v637 = vpack.c.b16 %v553, %v546
        %v638 = vpack.c.b16 %v554, %v547
        %v639 = vpack.c.b16 %v555, %v548
        %v640 = vpack.c.b16 %v563, %v556
        %v641 = vpack.c.b16 %v564, %v557
        %v642 = vpack.c.b16 %v565, %v558
        %v643 = vpack.c.b16 %v566, %v559
        %v644 = vpack.c.b16 %v567, %v560
        %v645 = vpack.c.b16 %v568, %v561
        %v646 = vpack.c.b16 %v569, %v562
        %v647 = vpack.c.b16 %v577, %v570
        %v648 = vpack.c.b16 %v578, %v571
        %v649 = vpack.c.b16 %v579, %v572
        %v650 = vpack.c.b16 %v580, %v573
        %v651 = vpack.c.b16 %v581, %v574
        %v652 = vpack.c.b16 %v582, %v575
        %v653 = vpack.c.b16 %v583, %v576
        %v654 = vpack.c.b16 %v591, %v584
        %v655 = vpack.c.b16 %v592, %v585
        %v656 = vpack.c.b16 %v593, %v586
        %v657 = vpack.c.b16 %v594, %v587
        %v658 = vpack.c.b16 %v595, %v588
        %v659 = vpack.c.b16 %v596, %v589
        %v660 = vpack.c.b16 %v597, %v590
        %v661 = vpack.c.b16 %v605, %v598
        %v662 = vpack.c.b16 %v606, %v599
        %v663 = vpack.c.b16 %v607, %v600
        %v664 = vpack.c.b16 %v608, %v601
        %v665 = vpack.c.b16 %v609, %v602
        %v666 = vpack.c.b16 %v610, %v603
        %v667 = vpack.c.b16 %v611, %v604
        %724 = vmatpush.bf16.msra.mxu0 %v661
        %725 = vmatpush.bf16.msra.mxu0 %v654
        %726 = vmatpush.bf16.msra.mxu0 %v647
        %727 = vmatpush.bf16.msra.mxu0 %v640
        %728 = vmatpush.bf16.msra.mxu0 %v633
        %729 = vmatpush.bf16.msra.mxu0 %v626
        %730 = vmatpush.bf16.msra.mxu0 %v619
        %731 = vmatpush.bf16.msra.mxu0 %v612
        %732 = vmatmul.bf16.gmra.mxu0 %v430
        %v733 = vpop.f32.mrf.mxu0
        %v734 = vadd.f32 0.0, %v733
        %v735 = vpop.f32.mrf.mxu0
        %v736 = vadd.f32 0.0, %v735
        %737 = vmatmul.bf16.gmra.mxu0 %v431
        %v738 = vpop.f32.mrf.mxu0
        %v739 = vadd.f32 0.0, %v738
        %v740 = vpop.f32.mrf.mxu0
        %v741 = vadd.f32 0.0, %v740
        %742 = vmatmul.bf16.gmra.mxu0 %v432
        %v743 = vpop.f32.mrf.mxu0
        %v744 = vpop.f32.mrf.mxu0
        %745 = vdwg.mxu0
        %746 = vmatpush.bf16.msra.mxu0 %v662
        %747 = vmatpush.bf16.msra.mxu0 %v655
        %748 = vmatpush.bf16.msra.mxu0 %v648
        %749 = vmatpush.bf16.msra.mxu0 %v641
        %750 = vmatpush.bf16.msra.mxu0 %v634
        %751 = vmatpush.bf16.msra.mxu0 %v627
        %752 = vmatpush.bf16.msra.mxu0 %v620
        %753 = vmatpush.bf16.msra.mxu0 %v613
        %754 = vmatmul.bf16.gmra.mxu0 %v430
        %v755 = vpop.f32.mrf.mxu0
        %v756 = vadd.f32 0.0, %v755
        %v757 = vpop.f32.mrf.mxu0
        %v758 = vadd.f32 0.0, %v757
        %759 = vmatmul.bf16.gmra.mxu0 %v431
        %v760 = vpop.f32.mrf.mxu0
        %v761 = vadd.f32 0.0, %v760
        %v762 = vpop.f32.mrf.mxu0
        %v763 = vadd.f32 0.0, %v762
        %764 = vmatmul.bf16.gmra.mxu0 %v432
        %v765 = vpop.f32.mrf.mxu0
        %v766 = vpop.f32.mrf.mxu0
        %767 = vdwg.mxu0
        %768 = vmatpush.bf16.msra.mxu0 %v663
        %769 = vmatpush.bf16.msra.mxu0 %v656
        %770 = vmatpush.bf16.msra.mxu0 %v649
        %771 = vmatpush.bf16.msra.mxu0 %v642
        %772 = vmatpush.bf16.msra.mxu0 %v635
        %773 = vmatpush.bf16.msra.mxu0 %v628
        %774 = vmatpush.bf16.msra.mxu0 %v621
        %775 = vmatpush.bf16.msra.mxu0 %v614
        %776 = vmatmul.bf16.gmra.mxu0 %v430
        %v777 = vpop.f32.mrf.mxu0
        %v778 = vadd.f32 0.0, %v777
        %v779 = vpop.f32.mrf.mxu0
        %v780 = vadd.f32 0.0, %v779
        %781 = vmatmul.bf16.gmra.mxu0 %v431
        %v782 = vpop.f32.mrf.mxu0
        %v783 = vadd.f32 0.0, %v782
        %v784 = vpop.f32.mrf.mxu0
        %v785 = vadd.f32 0.0, %v784
        %786 = vmatmul.bf16.gmra.mxu0 %v432
        %v787 = vpop.f32.mrf.mxu0
        %v788 = vpop.f32.mrf.mxu0
        %789 = vdwg.mxu0
        %790 = vmatpush.bf16.msra.mxu0 %v664
        %791 = vmatpush.bf16.msra.mxu0 %v657
        %792 = vmatpush.bf16.msra.mxu0 %v650
        %793 = vmatpush.bf16.msra.mxu0 %v643
        %794 = vmatpush.bf16.msra.mxu0 %v636
        %795 = vmatpush.bf16.msra.mxu0 %v629
        %796 = vmatpush.bf16.msra.mxu0 %v622
        %797 = vmatpush.bf16.msra.mxu0 %v615
        %798 = vmatmul.bf16.gmra.mxu0 %v430
        %v799 = vpop.f32.mrf.mxu0
        %v800 = vadd.f32 0.0, %v799
        %v801 = vpop.f32.mrf.mxu0
        %v802 = vadd.f32 0.0, %v801
        %803 = vmatmul.bf16.gmra.mxu0 %v431
        %v804 = vpop.f32.mrf.mxu0
        %v805 = vadd.f32 0.0, %v804
        %v806 = vpop.f32.mrf.mxu0
        %v807 = vadd.f32 0.0, %v806
        %808 = vmatmul.bf16.gmra.mxu0 %v432
        %v809 = vpop.f32.mrf.mxu0
        %v810 = vpop.f32.mrf.mxu0
        %811 = vdwg.mxu0
        %812 = vmatpush.bf16.msra.mxu0 %v665
        %813 = vmatpush.bf16.msra.mxu0 %v658
        %814 = vmatpush.bf16.msra.mxu0 %v651
        %815 = vmatpush.bf16.msra.mxu0 %v644
        %816 = vmatpush.bf16.msra.mxu0 %v637
        %817 = vmatpush.bf16.msra.mxu0 %v630
        %818 = vmatpush.bf16.msra.mxu0 %v623
        %819 = vmatpush.bf16.msra.mxu0 %v616
        %820 = vmatmul.bf16.gmra.mxu0 %v430
        %v821 = vpop.f32.mrf.mxu0
        %v822 = vadd.f32 0.0, %v821
        %v823 = vpop.f32.mrf.mxu0
        %v824 = vadd.f32 0.0, %v823
        %825 = vmatmul.bf16.gmra.mxu0 %v431
        %v826 = vpop.f32.mrf.mxu0
        %v827 = vadd.f32 0.0, %v826
        %v828 = vpop.f32.mrf.mxu0
        %v829 = vadd.f32 0.0, %v828
        %830 = vmatmul.bf16.gmra.mxu0 %v432
        %v831 = vpop.f32.mrf.mxu0
        %v832 = vpop.f32.mrf.mxu0
        %833 = vdwg.mxu0
        %834 = vmatpush.bf16.msra.mxu0 %v666
        %835 = vmatpush.bf16.msra.mxu0 %v659
        %836 = vmatpush.bf16.msra.mxu0 %v652
        %837 = vmatpush.bf16.msra.mxu0 %v645
        %838 = vmatpush.bf16.msra.mxu0 %v638
        %839 = vmatpush.bf16.msra.mxu0 %v631
        %840 = vmatpush.bf16.msra.mxu0 %v624
        %841 = vmatpush.bf16.msra.mxu0 %v617
        %842 = vmatmul.bf16.gmra.mxu0 %v430
        %v843 = vpop.f32.mrf.mxu0
        %v844 = vadd.f32 0.0, %v843
        %v845 = vpop.f32.mrf.mxu0
        %v846 = vadd.f32 0.0, %v845
        %847 = vmatmul.bf16.gmra.mxu0 %v431
        %v848 = vpop.f32.mrf.mxu0
        %v849 = vadd.f32 0.0, %v848
        %v850 = vpop.f32.mrf.mxu0
        %v851 = vadd.f32 0.0, %v850
        %852 = vmatmul.bf16.gmra.mxu0 %v432
        %v853 = vpop.f32.mrf.mxu0
        %v854 = vadd.f32 0.0, %v853
        %v855 = vpop.f32.mrf.mxu0
        %856 = vdwg.mxu0
        %857 = vmatpush.bf16.msra.mxu0 %v667
        %858 = vmatpush.bf16.msra.mxu0 %v660
        %859 = vmatpush.bf16.msra.mxu0 %v653
        %860 = vmatpush.bf16.msra.mxu0 %v646
        %861 = vmatpush.bf16.msra.mxu0 %v639
        %862 = vmatpush.bf16.msra.mxu0 %v632
        %863 = vmatpush.bf16.msra.mxu0 %v625
        %864 = vmatpush.bf16.msra.mxu0 %v618
        %865 = vmatmul.bf16.gmra.mxu0 %v430
        %v866 = vpop.f32.mrf.mxu0
        %v867 = vadd.f32 0.0, %v866
        %v868 = vpop.f32.mrf.mxu0
        %v869 = vadd.f32 0.0, %v868
        %870 = vmatmul.bf16.gmra.mxu0 %v431
        %v871 = vpop.f32.mrf.mxu0
        %v872 = vadd.f32 0.0, %v871
        %v873 = vpop.f32.mrf.mxu0
        %v874 = vadd.f32 0.0, %v873
        %875 = vmatmul.bf16.gmra.mxu0 %v432
        %v876 = vpop.f32.mrf.mxu0
        %v877 = vadd.f32 0.0, %v876
        %v878 = vpop.f32.mrf.mxu0
        %879 = vdwg.mxu0
        %880 = vst [vmem:[#allocation2] sm:$0xff] 0.0
        %881 = vst [vmem:[#allocation2 + $0x8] sm:$0xff] 0.0
        %882 = vst [vmem:[#allocation2 + $0x10] sm:$0xff] 0.0
        %883 = vst [vmem:[#allocation2 + $0x18] sm:$0xff] 0.0
        %884 = vst [vmem:[#allocation2 + $0x20] sm:$0xff] 0.0
        %885 = vst [vmem:[#allocation2 + $0x28] sm:$0xff] 0.0
        %vm890 = vcmask 1046528
        %v891 = vrot.slane %v756, 1
        %v892 = vrot.slane %v758, 1
        %v893 = vsel %vm890, %v891, %v892
        %v894 = vrot.slane %v761, 1
        %v895 = vsel %vm890, %v892, %v894
        %v896 = vrot.slane %v763, 1
        %v897 = vsel %vm890, %v894, %v896
        %v902 = vadd.f32 %v734, %v893
        %v903 = vadd.f32 %v736, %v895
        %v904 = vadd.f32 %v739, %v897
        %v905 = vadd.f32 %v741, %v896
        %vm910 = vcmask 1045504
        %v911 = vrot.slane %v778, 2
        %v912 = vrot.slane %v780, 2
        %v913 = vsel %vm910, %v911, %v912
        %v914 = vrot.slane %v783, 2
        %v915 = vsel %vm910, %v912, %v914
        %v916 = vrot.slane %v785, 2
        %v917 = vsel %vm910, %v914, %v916
        %v922 = vadd.f32 %v902, %v913
        %v923 = vadd.f32 %v903, %v915
        %v924 = vadd.f32 %v904, %v917
        %v925 = vadd.f32 %v905, %v916
        %vm930 = vcmask 1044480
        %v931 = vrot.slane %v800, 3
        %v932 = vrot.slane %v802, 3
        %v933 = vsel %vm930, %v931, %v932
        %v934 = vrot.slane %v805, 3
        %v935 = vsel %vm930, %v932, %v934
        %v936 = vrot.slane %v807, 3
        %v937 = vsel %vm930, %v934, %v936
        %v942 = vadd.f32 %v922, %v933
        %v943 = vadd.f32 %v923, %v935
        %v944 = vadd.f32 %v924, %v937
        %v945 = vadd.f32 %v925, %v936
        %vm950 = vcmask 1043456
        %v951 = vrot.slane %v822, 4
        %v952 = vrot.slane %v824, 4
        %v953 = vsel %vm950, %v951, %v952
        %v954 = vrot.slane %v827, 4
        %v955 = vsel %vm950, %v952, %v954
        %v956 = vrot.slane %v829, 4
        %v957 = vsel %vm950, %v954, %v956
        %v962 = vadd.f32 %v942, %v953
        %v963 = vadd.f32 %v943, %v955
        %v964 = vadd.f32 %v944, %v957
        %v965 = vadd.f32 %v945, %v956
        %vm971 = vcmask 1042432
        %v972 = vrot.slane %v844, 5
        %v973 = vrot.slane %v846, 5
        %v974 = vsel %vm971, %v972, %v973
        %v975 = vrot.slane %v849, 5
        %v976 = vsel %vm971, %v973, %v975
        %v977 = vrot.slane %v851, 5
        %v978 = vsel %vm971, %v975, %v977
        %v979 = vrot.slane %v854, 5
        %v980 = vsel %vm971, %v977, %v979
        %v985 = vadd.f32 %v962, %v974
        %v986 = vadd.f32 %v963, %v976
        %v987 = vadd.f32 %v964, %v978
        %v988 = vadd.f32 %v965, %v980
        %vm994 = vcmask 1041408
        %v995 = vrot.slane %v867, 6
        %v996 = vrot.slane %v869, 6
        %v997 = vsel %vm994, %v995, %v996
        %v998 = vrot.slane %v872, 6
        %v999 = vsel %vm994, %v996, %v998
        %v1000 = vrot.slane %v874, 6
        %v1001 = vsel %vm994, %v998, %v1000
        %v1002 = vrot.slane %v877, 6
        %v1003 = vsel %vm994, %v1000, %v1002
        %v1008 = vadd.f32 %v985, %v997
        %v1009 = vadd.f32 %v986, %v999
        %v1010 = vadd.f32 %v987, %v1001
        %v1011 = vadd.f32 %v988, %v1003
        %v1012 = vld [vmem:[%s2] sm:$0x1]
        %v1014 = vperm.slane %v1012, 0
        %v1016 = vadd.f32 %v1008, %v1014
        %v1017 = vadd.f32 %v1009, %v1014
        %v1018 = vadd.f32 %v1010, %v1014
        %v1019 = vadd.f32 %v1011, %v1014
        %1020 = vst [vmem:[#allocation2] sm:$0xff] %v1016
        %1021 = vst [vmem:[#allocation2 + $0x8] sm:$0xff] %v1017
        %1022 = vst [vmem:[#allocation2 + $0x10] sm:$0xff] %v1018
        %1023 = vst [vmem:[#allocation2 + $0x18] sm:$0xf] %v1019
        %v1024 = vld [vmem:[#allocation2] sm:$0xff]
        %v1025 = vld [vmem:[#allocation2 + $0x8] sm:$0xff]
        %v1026 = vld [vmem:[#allocation2 + $0x10] sm:$0xff]
        %v1027 = vld [vmem:[#allocation2 + $0x18] sm:$0xff]
        %v1028 = vld [vmem:[#allocation2 + $0x20] sm:$0xff]
        %v1029 = vld [vmem:[#allocation2 + $0x28] sm:$0xff]
        %vm1030 = vcmp.gt.f32.partialorder %v1024, 0.0
        %vm1031 = vcmp.gt.f32.partialorder %v1025, 0.0
        %vm1032 = vcmp.gt.f32.partialorder %v1026, 0.0
        %vm1033 = vcmp.gt.f32.partialorder %v1027, 0.0
        %vm1034 = vcmp.gt.f32.partialorder %v1028, 0.0
        %vm1035 = vcmp.gt.f32.partialorder %v1029, 0.0
        %v1036 = vmul.f32 %v1024, 0.1
        %v1037 = vmul.f32 %v1025, 0.1
        %v1038 = vmul.f32 %v1026, 0.1
        %v1039 = vmul.f32 %v1027, 0.1
        %v1040 = vmul.f32 %v1028, 0.1
        %v1041 = vmul.f32 %v1029, 0.1
        %v1042 = vsel %vm1030, %v1024, %v1036
        %v1043 = vsel %vm1031, %v1025, %v1037
        %v1044 = vsel %vm1032, %v1026, %v1038
        %v1045 = vsel %vm1033, %v1027, %v1039
        %v1046 = vsel %vm1034, %v1028, %v1040
        %v1047 = vsel %vm1035, %v1029, %v1041
        %v1048 = vpack.c.bf16 %v1043, %v1042
        %v1049 = vpack.c.bf16 %v1045, %v1044
        %v1050 = vpack.c.bf16 %v1047, %v1046
        %v1051 = vld [vmem:[#allocation8] sm:$0xff]
        %v1052 = vld [vmem:[#allocation8 + $0x8] sm:$0xf]
        %v1053 = vld [vmem:[#allocation8 + $0xc] sm:$0xff]
        %v1054 = vld [vmem:[#allocation8 + $0x14] sm:$0xf]
        %v1055 = vld [vmem:[#allocation8 + $0x18] sm:$0xff]
        %v1056 = vld [vmem:[#allocation8 + $0x20] sm:$0xf]
        %v1057 = vld [vmem:[#allocation8 + $0x24] sm:$0xff]
        %v1058 = vld [vmem:[#allocation8 + $0x2c] sm:$0xf]
        %v1059 = vld [vmem:[#allocation8 + $0x30] sm:$0xff]
        %v1060 = vld [vmem:[#allocation8 + $0x38] sm:$0xf]
        %v1061 = vld [vmem:[#allocation8 + $0x3c] sm:$0xff]
        %v1062 = vld [vmem:[#allocation8 + $0x44] sm:$0xf]
        %v1063 = vld [vmem:[#allocation8 + $0x48] sm:$0xff]
        %v1064 = vld [vmem:[#allocation8 + $0x50] sm:$0xf]
        %v1065 = vld [vmem:[#allocation8 + $0x54] sm:$0xff]
        %v1066 = vld [vmem:[#allocation8 + $0x5c] sm:$0xf]
        %v1067 = vld [vmem:[#allocation8 + $0x60] sm:$0xff]
        %v1068 = vld [vmem:[#allocation8 + $0x68] sm:$0xf]
        %v1069 = vld [vmem:[#allocation8 + $0x6c] sm:$0xff]
        %v1070 = vld [vmem:[#allocation8 + $0x74] sm:$0xf]
        %v1071 = vld [vmem:[#allocation8 + $0x78] sm:$0xff]
        %v1072 = vld [vmem:[#allocation8 + $0x80] sm:$0xf]
        %v1073 = vld [vmem:[#allocation8 + $0x84] sm:$0xff]
        %v1074 = vld [vmem:[#allocation8 + $0x8c] sm:$0xf]
        %v1075 = vld [vmem:[#allocation8 + $0x90] sm:$0xff]
        %v1076 = vld [vmem:[#allocation8 + $0x98] sm:$0xf]
        %v1077 = vld [vmem:[#allocation8 + $0x9c] sm:$0xff]
        %v1078 = vld [vmem:[#allocation8 + $0xa4] sm:$0xf]
        %v1079 = vld [vmem:[#allocation8 + $0xa8] sm:$0xff]
        %v1080 = vld [vmem:[#allocation8 + $0xb0] sm:$0xf]
        %v1081 = vld [vmem:[#allocation8 + $0xb4] sm:$0xff]
        %v1082 = vld [vmem:[#allocation8 + $0xbc] sm:$0xf]
        %v1115 = vunpack.c.l.b16 %v1051
        %v1116 = vunpack.c.h.b16 %v1051
        %v1117 = vunpack.c.l.b16 %v1052
        %v1118 = vunpack.c.l.b16 %v1053
        %v1119 = vunpack.c.h.b16 %v1053
        %v1120 = vunpack.c.l.b16 %v1054
        %v1121 = vunpack.c.l.b16 %v1055
        %v1122 = vunpack.c.h.b16 %v1055
        %v1123 = vunpack.c.l.b16 %v1056
        %v1124 = vunpack.c.l.b16 %v1057
        %v1125 = vunpack.c.h.b16 %v1057
        %v1126 = vunpack.c.l.b16 %v1058
        %v1127 = vunpack.c.l.b16 %v1059
        %v1128 = vunpack.c.h.b16 %v1059
        %v1129 = vunpack.c.l.b16 %v1060
        %v1130 = vunpack.c.l.b16 %v1061
        %v1131 = vunpack.c.h.b16 %v1061
        %v1132 = vunpack.c.l.b16 %v1062
        %v1133 = vunpack.c.l.b16 %v1063
        %v1134 = vunpack.c.h.b16 %v1063
        %v1135 = vunpack.c.l.b16 %v1064
        %v1136 = vunpack.c.l.b16 %v1065
        %v1137 = vunpack.c.h.b16 %v1065
        %v1138 = vunpack.c.l.b16 %v1066
        %v1139 = vunpack.c.l.b16 %v1067
        %v1140 = vunpack.c.h.b16 %v1067
        %v1141 = vunpack.c.l.b16 %v1068
        %v1142 = vunpack.c.l.b16 %v1069
        %v1143 = vunpack.c.h.b16 %v1069
        %v1144 = vunpack.c.l.b16 %v1070
        %v1145 = vunpack.c.l.b16 %v1071
        %v1146 = vunpack.c.h.b16 %v1071
        %v1147 = vunpack.c.l.b16 %v1072
        %v1148 = vunpack.c.l.b16 %v1073
        %v1149 = vunpack.c.h.b16 %v1073
        %v1150 = vunpack.c.l.b16 %v1074
        %v1151 = vunpack.c.l.b16 %v1075
        %v1152 = vunpack.c.h.b16 %v1075
        %v1153 = vunpack.c.l.b16 %v1076
        %v1154 = vunpack.c.l.b16 %v1077
        %v1155 = vunpack.c.h.b16 %v1077
        %v1156 = vunpack.c.l.b16 %v1078
        %v1157 = vunpack.c.l.b16 %v1079
        %v1158 = vunpack.c.h.b16 %v1079
        %v1159 = vunpack.c.l.b16 %v1080
        %v1160 = vunpack.c.l.b16 %v1081
        %v1161 = vunpack.c.h.b16 %v1081
        %v1162 = vunpack.c.l.b16 %v1082
        %v1163 = vpack.c.b16 %v1118, %v1115
        %v1164 = vpack.c.b16 %v1119, %v1116
        %v1165 = vpack.c.b16 %v1120, %v1117
        %v1166 = vpack.c.b16 %v1124, %v1121
        %v1167 = vpack.c.b16 %v1125, %v1122
        %v1168 = vpack.c.b16 %v1126, %v1123
        %v1169 = vpack.c.b16 %v1130, %v1127
        %v1170 = vpack.c.b16 %v1131, %v1128
        %v1171 = vpack.c.b16 %v1132, %v1129
        %v1172 = vpack.c.b16 %v1136, %v1133
        %v1173 = vpack.c.b16 %v1137, %v1134
        %v1174 = vpack.c.b16 %v1138, %v1135
        %v1175 = vpack.c.b16 %v1142, %v1139
        %v1176 = vpack.c.b16 %v1143, %v1140
        %v1177 = vpack.c.b16 %v1144, %v1141
        %v1178 = vpack.c.b16 %v1148, %v1145
        %v1179 = vpack.c.b16 %v1149, %v1146
        %v1180 = vpack.c.b16 %v1150, %v1147
        %v1181 = vpack.c.b16 %v1154, %v1151
        %v1182 = vpack.c.b16 %v1155, %v1152
        %v1183 = vpack.c.b16 %v1156, %v1153
        %v1184 = vpack.c.b16 %v1160, %v1157
        %v1185 = vpack.c.b16 %v1161, %v1158
        %v1186 = vpack.c.b16 %v1162, %v1159
        %1211 = vmatpush.bf16.msra.mxu0 %v1184
        %1212 = vmatpush.bf16.msra.mxu0 %v1181
        %1213 = vmatpush.bf16.msra.mxu0 %v1178
        %1214 = vmatpush.bf16.msra.mxu0 %v1175
        %1215 = vmatpush.bf16.msra.mxu0 %v1172
        %1216 = vmatpush.bf16.msra.mxu0 %v1169
        %1217 = vmatpush.bf16.msra.mxu0 %v1166
        %1218 = vmatpush.bf16.msra.mxu0 %v1163
        %1219 = vmatmul.bf16.gmra.mxu0 %v1048
        %v1220 = vpop.f32.mrf.mxu0
        %v1221 = vadd.f32 0.0, %v1220
        %v1222 = vpop.f32.mrf.mxu0
        %v1223 = vadd.f32 0.0, %v1222
        %1224 = vmatmul.bf16.gmra.mxu0 %v1049
        %v1225 = vpop.f32.mrf.mxu0
        %v1226 = vadd.f32 0.0, %v1225
        %v1227 = vpop.f32.mrf.mxu0
        %1228 = vmatmul.bf16.gmra.mxu0 %v1050
        %v1229 = vpop.f32.mrf.mxu0
        %v1230 = vpop.f32.mrf.mxu0
        %1231 = vdwg.mxu0
        %1232 = vmatpush.bf16.msra.mxu0 %v1185
        %1233 = vmatpush.bf16.msra.mxu0 %v1182
        %1234 = vmatpush.bf16.msra.mxu0 %v1179
        %1235 = vmatpush.bf16.msra.mxu0 %v1176
        %1236 = vmatpush.bf16.msra.mxu0 %v1173
        %1237 = vmatpush.bf16.msra.mxu0 %v1170
        %1238 = vmatpush.bf16.msra.mxu0 %v1167
        %1239 = vmatpush.bf16.msra.mxu0 %v1164
        %1240 = vmatmul.bf16.gmra.mxu0 %v1048
        %v1241 = vpop.f32.mrf.mxu0
        %v1242 = vadd.f32 0.0, %v1241
        %v1243 = vpop.f32.mrf.mxu0
        %v1244 = vadd.f32 0.0, %v1243
        %1245 = vmatmul.bf16.gmra.mxu0 %v1049
        %v1246 = vpop.f32.mrf.mxu0
        %v1247 = vadd.f32 0.0, %v1246
        %v1248 = vpop.f32.mrf.mxu0
        %v1249 = vadd.f32 0.0, %v1248
        %1250 = vmatmul.bf16.gmra.mxu0 %v1050
        %v1251 = vpop.f32.mrf.mxu0
        %v1252 = vpop.f32.mrf.mxu0
        %1253 = vdwg.mxu0
        %1254 = vmatpush.bf16.msra.mxu0 %v1186
        %1255 = vmatpush.bf16.msra.mxu0 %v1183
        %1256 = vmatpush.bf16.msra.mxu0 %v1180
        %1257 = vmatpush.bf16.msra.mxu0 %v1177
        %1258 = vmatpush.bf16.msra.mxu0 %v1174
        %1259 = vmatpush.bf16.msra.mxu0 %v1171
        %1260 = vmatpush.bf16.msra.mxu0 %v1168
        %1261 = vmatpush.bf16.msra.mxu0 %v1165
        %1262 = vmatmul.bf16.gmra.mxu0 %v1048
        %v1263 = vpop.f32.mrf.mxu0
        %v1264 = vadd.f32 0.0, %v1263
        %v1265 = vpop.f32.mrf.mxu0
        %v1266 = vadd.f32 0.0, %v1265
        %1267 = vmatmul.bf16.gmra.mxu0 %v1049
        %v1268 = vpop.f32.mrf.mxu0
        %v1269 = vadd.f32 0.0, %v1268
        %v1270 = vpop.f32.mrf.mxu0
        %v1271 = vadd.f32 0.0, %v1270
        %1272 = vmatmul.bf16.gmra.mxu0 %v1050
        %v1273 = vpop.f32.mrf.mxu0
        %v1274 = vpop.f32.mrf.mxu0
        %1275 = vdwg.mxu0
        %v1280 = vrot.slane %v1242, 3
        %v1281 = vrot.slane %v1244, 3
        %v1282 = vsel %vm930, %v1280, %v1281
        %v1283 = vrot.slane %v1247, 3
        %v1284 = vsel %vm930, %v1281, %v1283
        %v1285 = vrot.slane %v1249, 3
        %v1286 = vsel %vm930, %v1283, %v1285
        %v1290 = vadd.f32 %v1221, %v1282
        %v1291 = vadd.f32 %v1223, %v1284
        %v1292 = vadd.f32 %v1226, %v1286
        %v1297 = vrot.slane %v1264, 6
        %v1298 = vrot.slane %v1266, 6
        %v1299 = vsel %vm994, %v1297, %v1298
        %v1300 = vrot.slane %v1269, 6
        %v1301 = vsel %vm994, %v1298, %v1300
        %v1302 = vrot.slane %v1271, 6
        %v1303 = vsel %vm994, %v1300, %v1302
        %v1307 = vadd.f32 %v1290, %v1299
        %v1308 = vadd.f32 %v1291, %v1301
        %v1309 = vadd.f32 %v1292, %v1303
        %v1310 = vld [vmem:[%s4] sm:$0x1]
        %v1312 = vperm.slane %v1310, 0
        %v1314 = vadd.f32 %v1307, %v1312
        %v1315 = vadd.f32 %v1308, %v1312
        %v1316 = vadd.f32 %v1309, %v1312
        %v1321 = vrot.slane %v1024, 3
        %v1322 = vrot.slane %v1025, 3
        %v1323 = vsel %vm930, %v1321, %v1322
        %v1324 = vrot.slane %v1026, 3
        %v1325 = vsel %vm930, %v1322, %v1324
        %v1326 = vrot.slane %v1027, 3
        %v1327 = vsel %vm930, %v1324, %v1326
        %v1331 = vadd.f32 %v1314, %v1323
        %v1332 = vadd.f32 %v1315, %v1325
        %v1333 = vadd.f32 %v1316, %v1327
        %1334 = vst [vmem:[#allocation2] sm:$0xff] %v1331
        %1335 = vst [vmem:[#allocation2 + $0x8] sm:$0xff] %v1332
        %1336 = vst [vmem:[#allocation2 + $0x10] sm:$0x3f] %v1333
        %v1337 = vld [vmem:[#allocation2] sm:$0xff]
        %v1338 = vld [vmem:[#allocation2 + $0x8] sm:$0xff]
        %v1339 = vld [vmem:[#allocation2 + $0x10] sm:$0xff]
        %v1340 = vld [vmem:[#allocation2 + $0x18] sm:$0xff]
        %v1341 = vld [vmem:[#allocation2 + $0x20] sm:$0xff]
        %v1342 = vld [vmem:[#allocation2 + $0x28] sm:$0xff]
        %vm1343 = vcmp.gt.f32.partialorder %v1337, 0.0
        %vm1344 = vcmp.gt.f32.partialorder %v1338, 0.0
        %vm1345 = vcmp.gt.f32.partialorder %v1339, 0.0
        %vm1346 = vcmp.gt.f32.partialorder %v1340, 0.0
        %vm1347 = vcmp.gt.f32.partialorder %v1341, 0.0
        %vm1348 = vcmp.gt.f32.partialorder %v1342, 0.0
        %v1349 = vmul.f32 %v1337, 0.1
        %v1350 = vmul.f32 %v1338, 0.1
        %v1351 = vmul.f32 %v1339, 0.1
        %v1352 = vmul.f32 %v1340, 0.1
        %v1353 = vmul.f32 %v1341, 0.1
        %v1354 = vmul.f32 %v1342, 0.1
        %v1355 = vsel %vm1343, %v1337, %v1349
        %v1356 = vsel %vm1344, %v1338, %v1350
        %v1357 = vsel %vm1345, %v1339, %v1351
        %v1358 = vsel %vm1346, %v1340, %v1352
        %v1359 = vsel %vm1347, %v1341, %v1353
        %v1360 = vsel %vm1348, %v1342, %v1354
        %v1361 = vpack.c.bf16 %v1356, %v1355
        %v1362 = vpack.c.bf16 %v1358, %v1357
        %v1363 = vpack.c.bf16 %v1360, %v1359
        %s1364 = scalar_lea.vmem [#allocation8], 192
        %v1365 = vld [vmem:[%s1364] sm:$0xff]
        %v1366 = vld [vmem:[%s1364 + $0x8] sm:$0xf]
        %v1367 = vld [vmem:[%s1364 + $0xc] sm:$0xff]
        %v1368 = vld [vmem:[%s1364 + $0x14] sm:$0xf]
        %v1369 = vld [vmem:[%s1364 + $0x18] sm:$0xff]
        %v1370 = vld [vmem:[%s1364 + $0x20] sm:$0xf]
        %v1371 = vld [vmem:[%s1364 + $0x24] sm:$0xff]
        %v1372 = vld [vmem:[%s1364 + $0x2c] sm:$0xf]
        %v1373 = vld [vmem:[%s1364 + $0x30] sm:$0xff]
        %v1374 = vld [vmem:[%s1364 + $0x38] sm:$0xf]
        %v1375 = vld [vmem:[%s1364 + $0x3c] sm:$0xff]
        %v1376 = vld [vmem:[%s1364 + $0x44] sm:$0xf]
        %v1377 = vld [vmem:[%s1364 + $0x48] sm:$0xff]
        %v1378 = vld [vmem:[%s1364 + $0x50] sm:$0xf]
        %v1379 = vld [vmem:[%s1364 + $0x54] sm:$0xff]
        %v1380 = vld [vmem:[%s1364 + $0x5c] sm:$0xf]
        %v1381 = vld [vmem:[%s1364 + $0x60] sm:$0xff]
        %v1382 = vld [vmem:[%s1364 + $0x68] sm:$0xf]
        %v1383 = vld [vmem:[%s1364 + $0x6c] sm:$0xff]
        %v1384 = vld [vmem:[%s1364 + $0x74] sm:$0xf]
        %v1385 = vld [vmem:[%s1364 + $0x78] sm:$0xff]
        %v1386 = vld [vmem:[%s1364 + $0x80] sm:$0xf]
        %v1387 = vld [vmem:[%s1364 + $0x84] sm:$0xff]
        %v1388 = vld [vmem:[%s1364 + $0x8c] sm:$0xf]
        %v1389 = vld [vmem:[%s1364 + $0x90] sm:$0xff]
        %v1390 = vld [vmem:[%s1364 + $0x98] sm:$0xf]
        %v1391 = vld [vmem:[%s1364 + $0x9c] sm:$0xff]
        %v1392 = vld [vmem:[%s1364 + $0xa4] sm:$0xf]
        %v1393 = vld [vmem:[%s1364 + $0xa8] sm:$0xff]
        %v1394 = vld [vmem:[%s1364 + $0xb0] sm:$0xf]
        %v1395 = vld [vmem:[%s1364 + $0xb4] sm:$0xff]
        %v1396 = vld [vmem:[%s1364 + $0xbc] sm:$0xf]
        %v1429 = vunpack.c.l.b16 %v1365
        %v1430 = vunpack.c.h.b16 %v1365
        %v1431 = vunpack.c.l.b16 %v1366
        %v1432 = vunpack.c.l.b16 %v1367
        %v1433 = vunpack.c.h.b16 %v1367
        %v1434 = vunpack.c.l.b16 %v1368
        %v1435 = vunpack.c.l.b16 %v1369
        %v1436 = vunpack.c.h.b16 %v1369
        %v1437 = vunpack.c.l.b16 %v1370
        %v1438 = vunpack.c.l.b16 %v1371
        %v1439 = vunpack.c.h.b16 %v1371
        %v1440 = vunpack.c.l.b16 %v1372
        %v1441 = vunpack.c.l.b16 %v1373
        %v1442 = vunpack.c.h.b16 %v1373
        %v1443 = vunpack.c.l.b16 %v1374
        %v1444 = vunpack.c.l.b16 %v1375
        %v1445 = vunpack.c.h.b16 %v1375
        %v1446 = vunpack.c.l.b16 %v1376
        %v1447 = vunpack.c.l.b16 %v1377
        %v1448 = vunpack.c.h.b16 %v1377
        %v1449 = vunpack.c.l.b16 %v1378
        %v1450 = vunpack.c.l.b16 %v1379
        %v1451 = vunpack.c.h.b16 %v1379
        %v1452 = vunpack.c.l.b16 %v1380
        %v1453 = vunpack.c.l.b16 %v1381
        %v1454 = vunpack.c.h.b16 %v1381
        %v1455 = vunpack.c.l.b16 %v1382
        %v1456 = vunpack.c.l.b16 %v1383
        %v1457 = vunpack.c.h.b16 %v1383
        %v1458 = vunpack.c.l.b16 %v1384
        %v1459 = vunpack.c.l.b16 %v1385
        %v1460 = vunpack.c.h.b16 %v1385
        %v1461 = vunpack.c.l.b16 %v1386
        %v1462 = vunpack.c.l.b16 %v1387
        %v1463 = vunpack.c.h.b16 %v1387
        %v1464 = vunpack.c.l.b16 %v1388
        %v1465 = vunpack.c.l.b16 %v1389
        %v1466 = vunpack.c.h.b16 %v1389
        %v1467 = vunpack.c.l.b16 %v1390
        %v1468 = vunpack.c.l.b16 %v1391
        %v1469 = vunpack.c.h.b16 %v1391
        %v1470 = vunpack.c.l.b16 %v1392
        %v1471 = vunpack.c.l.b16 %v1393
        %v1472 = vunpack.c.h.b16 %v1393
        %v1473 = vunpack.c.l.b16 %v1394
        %v1474 = vunpack.c.l.b16 %v1395
        %v1475 = vunpack.c.h.b16 %v1395
        %v1476 = vunpack.c.l.b16 %v1396
        %v1477 = vpack.c.b16 %v1432, %v1429
        %v1478 = vpack.c.b16 %v1433, %v1430
        %v1479 = vpack.c.b16 %v1434, %v1431
        %v1480 = vpack.c.b16 %v1438, %v1435
        %v1481 = vpack.c.b16 %v1439, %v1436
        %v1482 = vpack.c.b16 %v1440, %v1437
        %v1483 = vpack.c.b16 %v1444, %v1441
        %v1484 = vpack.c.b16 %v1445, %v1442
        %v1485 = vpack.c.b16 %v1446, %v1443
        %v1486 = vpack.c.b16 %v1450, %v1447
        %v1487 = vpack.c.b16 %v1451, %v1448
        %v1488 = vpack.c.b16 %v1452, %v1449
        %v1489 = vpack.c.b16 %v1456, %v1453
        %v1490 = vpack.c.b16 %v1457, %v1454
        %v1491 = vpack.c.b16 %v1458, %v1455
        %v1492 = vpack.c.b16 %v1462, %v1459
        %v1493 = vpack.c.b16 %v1463, %v1460
        %v1494 = vpack.c.b16 %v1464, %v1461
        %v1495 = vpack.c.b16 %v1468, %v1465
        %v1496 = vpack.c.b16 %v1469, %v1466
        %v1497 = vpack.c.b16 %v1470, %v1467
        %v1498 = vpack.c.b16 %v1474, %v1471
        %v1499 = vpack.c.b16 %v1475, %v1472
        %v1500 = vpack.c.b16 %v1476, %v1473
        %1525 = vmatpush.bf16.msra.mxu0 %v1498
        %1526 = vmatpush.bf16.msra.mxu0 %v1495
        %1527 = vmatpush.bf16.msra.mxu0 %v1492
        %1528 = vmatpush.bf16.msra.mxu0 %v1489
        %1529 = vmatpush.bf16.msra.mxu0 %v1486
        %1530 = vmatpush.bf16.msra.mxu0 %v1483
        %1531 = vmatpush.bf16.msra.mxu0 %v1480
        %1532 = vmatpush.bf16.msra.mxu0 %v1477
        %1533 = vmatmul.bf16.gmra.mxu0 %v1361
        %v1534 = vpop.f32.mrf.mxu0
        %v1535 = vadd.f32 0.0, %v1534
        %v1536 = vpop.f32.mrf.mxu0
        %v1537 = vadd.f32 0.0, %v1536
        %1538 = vmatmul.bf16.gmra.mxu0 %v1362
        %v1539 = vpop.f32.mrf.mxu0
        %v1540 = vpop.f32.mrf.mxu0
        %1541 = vmatmul.bf16.gmra.mxu0 %v1363
        %v1542 = vpop.f32.mrf.mxu0
        %v1543 = vpop.f32.mrf.mxu0
        %1544 = vdwg.mxu0
        %1545 = vmatpush.bf16.msra.mxu0 %v1499
        %1546 = vmatpush.bf16.msra.mxu0 %v1496
        %1547 = vmatpush.bf16.msra.mxu0 %v1493
        %1548 = vmatpush.bf16.msra.mxu0 %v1490
        %1549 = vmatpush.bf16.msra.mxu0 %v1487
        %1550 = vmatpush.bf16.msra.mxu0 %v1484
        %1551 = vmatpush.bf16.msra.mxu0 %v1481
        %1552 = vmatpush.bf16.msra.mxu0 %v1478
        %1553 = vmatmul.bf16.gmra.mxu0 %v1361
        %v1554 = vpop.f32.mrf.mxu0
        %v1555 = vadd.f32 0.0, %v1554
        %v1556 = vpop.f32.mrf.mxu0
        %v1557 = vadd.f32 0.0, %v1556
        %1558 = vmatmul.bf16.gmra.mxu0 %v1362
        %v1559 = vpop.f32.mrf.mxu0
        %v1560 = vadd.f32 0.0, %v1559
        %v1561 = vpop.f32.mrf.mxu0
        %1562 = vmatmul.bf16.gmra.mxu0 %v1363
        %v1563 = vpop.f32.mrf.mxu0
        %v1564 = vpop.f32.mrf.mxu0
        %1565 = vdwg.mxu0
        %1566 = vmatpush.bf16.msra.mxu0 %v1500
        %1567 = vmatpush.bf16.msra.mxu0 %v1497
        %1568 = vmatpush.bf16.msra.mxu0 %v1494
        %1569 = vmatpush.bf16.msra.mxu0 %v1491
        %1570 = vmatpush.bf16.msra.mxu0 %v1488
        %1571 = vmatpush.bf16.msra.mxu0 %v1485
        %1572 = vmatpush.bf16.msra.mxu0 %v1482
        %1573 = vmatpush.bf16.msra.mxu0 %v1479
        %1574 = vmatmul.bf16.gmra.mxu0 %v1361
        %v1575 = vpop.f32.mrf.mxu0
        %v1576 = vadd.f32 0.0, %v1575
        %v1577 = vpop.f32.mrf.mxu0
        %v1578 = vadd.f32 0.0, %v1577
        %1579 = vmatmul.bf16.gmra.mxu0 %v1362
        %v1580 = vpop.f32.mrf.mxu0
        %v1581 = vadd.f32 0.0, %v1580
        %v1582 = vpop.f32.mrf.mxu0
        %1583 = vmatmul.bf16.gmra.mxu0 %v1363
        %v1584 = vpop.f32.mrf.mxu0
        %v1585 = vpop.f32.mrf.mxu0
        %1586 = vdwg.mxu0
        %v1590 = vrot.slane %v1555, 3
        %v1591 = vrot.slane %v1557, 3
        %v1592 = vsel %vm930, %v1590, %v1591
        %v1593 = vrot.slane %v1560, 3
        %v1594 = vsel %vm930, %v1591, %v1593
        %v1597 = vadd.f32 %v1535, %v1592
        %v1598 = vadd.f32 %v1537, %v1594
        %v1602 = vrot.slane %v1576, 6
        %v1603 = vrot.slane %v1578, 6
        %v1604 = vsel %vm994, %v1602, %v1603
        %v1605 = vrot.slane %v1581, 6
        %v1606 = vsel %vm994, %v1603, %v1605
        %v1609 = vadd.f32 %v1597, %v1604
        %v1610 = vadd.f32 %v1598, %v1606
        %s1611 = scalar_lea.vmem %s4, 1
        %v1612 = vld [vmem:[%s1611] sm:$0x1]
        %v1614 = vperm.slane %v1612, 0
        %v1616 = vadd.f32 %v1609, %v1614
        %v1617 = vadd.f32 %v1610, %v1614
        %v1621 = vrot.slane %v1337, 3
        %v1622 = vrot.slane %v1338, 3
        %v1623 = vsel %vm930, %v1621, %v1622
        %v1624 = vrot.slane %v1339, 3
        %v1625 = vsel %vm930, %v1622, %v1624
        %v1628 = vadd.f32 %v1616, %v1623
        %v1629 = vadd.f32 %v1617, %v1625
        %1630 = vst [vmem:[#allocation2] sm:$0xff] %v1628
        %1631 = vst [vmem:[#allocation2 + $0x8] sm:$0xff] %v1629
        %v1632 = vld [vmem:[#allocation2] sm:$0xff]
        %v1633 = vld [vmem:[#allocation2 + $0x8] sm:$0xff]
        %v1634 = vadd.f32 %v1632, %v1633
        %v1635 = vrot.slane %v1634, 4
        %v1636 = vadd.f32 %v1634, %v1635
        %v1637 = vrot.slane %v1636, 2
        %v1638 = vadd.f32 %v1636, %v1637
        %v1639 = vrot.slane %v1638, 1
        %v1640 = vadd.f32 %v1638, %v1639
        %v1641 = vmul.f32 %v1640, 0.0625
        %v1642 = vpack.c.bf16 %v1641, %v1641
        %v1643 = vld [vmem:[#allocation9] sm:$0xf]
        %v1644 = vld [vmem:[#allocation9 + $0x4] sm:$0xf]
        %v1645 = vld [vmem:[#allocation9 + $0x8] sm:$0xf]
        %v1646 = vld [vmem:[#allocation9 + $0xc] sm:$0xf]
        %v1647 = vld [vmem:[#allocation9 + $0x10] sm:$0xf]
        %v1648 = vld [vmem:[#allocation9 + $0x14] sm:$0xf]
        %v1649 = vld [vmem:[#allocation9 + $0x18] sm:$0xf]
        %v1650 = vld [vmem:[#allocation9 + $0x1c] sm:$0xf]
        %v1651 = vld [vmem:[#allocation9 + $0x20] sm:$0xf]
        %v1652 = vld [vmem:[#allocation9 + $0x24] sm:$0xf]
        %v1653 = vld [vmem:[#allocation9 + $0x28] sm:$0xf]
        %v1654 = vld [vmem:[#allocation9 + $0x2c] sm:$0xf]
        %v1655 = vld [vmem:[#allocation9 + $0x30] sm:$0xf]
        %v1656 = vld [vmem:[#allocation9 + $0x34] sm:$0xf]
        %v1657 = vld [vmem:[#allocation9 + $0x38] sm:$0xf]
        %v1658 = vld [vmem:[#allocation9 + $0x3c] sm:$0xf]
        %v1659 = vld [vmem:[%s6] sm:$0x1]
        %v1676 = vunpack.c.l.b16 %v1643
        %v1677 = vunpack.c.l.b16 %v1644
        %v1678 = vunpack.c.l.b16 %v1645
        %v1679 = vunpack.c.l.b16 %v1646
        %v1680 = vunpack.c.l.b16 %v1647
        %v1681 = vunpack.c.l.b16 %v1648
        %v1682 = vunpack.c.l.b16 %v1649
        %v1683 = vunpack.c.l.b16 %v1650
        %v1684 = vunpack.c.l.b16 %v1651
        %v1685 = vunpack.c.l.b16 %v1652
        %v1686 = vunpack.c.l.b16 %v1653
        %v1687 = vunpack.c.l.b16 %v1654
        %v1688 = vunpack.c.l.b16 %v1655
        %v1689 = vunpack.c.l.b16 %v1656
        %v1690 = vunpack.c.l.b16 %v1657
        %v1691 = vunpack.c.l.b16 %v1658
        %v1692 = vpack.c.b16 %v1677, %v1676
        %v1693 = vpack.c.b16 %v1679, %v1678
        %v1694 = vpack.c.b16 %v1681, %v1680
        %v1695 = vpack.c.b16 %v1683, %v1682
        %v1696 = vpack.c.b16 %v1685, %v1684
        %v1697 = vpack.c.b16 %v1687, %v1686
        %v1698 = vpack.c.b16 %v1689, %v1688
        %v1699 = vpack.c.b16 %v1691, %v1690
        %1708 = vmatpush.bf16.msra.mxu0 %v1699
        %1709 = vmatpush.bf16.msra.mxu0 %v1698
        %1710 = vmatpush.bf16.msra.mxu0 %v1697
        %1711 = vmatpush.bf16.msra.mxu0 %v1696
        %1712 = vmatpush.bf16.msra.mxu0 %v1695
        %1713 = vmatpush.bf16.msra.mxu0 %v1694
        %1714 = vmatpush.bf16.msra.mxu0 %v1693
        %1715 = vmatpush.bf16.msra.mxu0 %v1692
        %1716 = vmatmul.bf16.gmra.mxu0 %v1642
        %v1717 = vpop.f32.mrf.mxu0
        %v1718 = vadd.f32 %v1659, %v1717
        %v1719 = vpop.f32.mrf.mxu0
        %1720 = vdwg.mxu0
        %1721 = vst [vmem:[%s347] sm:$0x1] %v1718
        %s1722 = sand.u32 %s186, 1
        %s1723 = scalar_lea.sflag [#allocation5], %s1722
        %s1724 = sand.u32 %s186, 1
        %s1725 = scalar_lea.vmem [#allocation11], %s1724
        // Predicated region
        $region65: #{tpu_custom_call.1} parent=47 // pred_check
          %p1726 = pneg %p196
        $region66: #{tpu_custom_call.1} parent=47 // pred_check_branch
          %1728 = sbr.rel (%p1726) target = $region68
        $region67: #{tpu_custom_call.1} parent=47 // pred_region
          %1730 = vsyncadd %s1723, 0
          %s1731 = scalar_lea.hbm %s7, %s26
          %s1733 = sshll.u32 %s1725, 4
          %s1734 = int_to_ptr.vmem [resolvable:$true] %s1733
          %s1735 = sshll.u32 %s1731, 4
          %s1736 = int_to_ptr.hbm [resolvable:$true] %s1735
          %1738 = dma.vmem_to_hbm [thread:$0]  %s1734, 16, %s1736, %s1723
        $region68: #{tpu_custom_call.1} parent=47 // pred_fallthru
          _
      $region48: #{tpu_custom_call.1} parent=5 // pred_fallthru
        _
      %p1739 = scmp.le.s32.totalorder 2, %s21
      // Predicated region
      $region69: #{tpu_custom_call.1} parent=5 // pred_check
        %p1740 = pneg %p1739
      $region70: #{tpu_custom_call.1} parent=5 // pred_check_branch
        %1742 = sbr.rel (%p1740) target = $region72
      $region71: #{tpu_custom_call.1} parent=5 // pred_region
        %s1743 = ssub.s32 %s21, 2
        // Predicated region
        $region73: #{tpu_custom_call.1} parent=71 // pred_check
          %p1744 = pneg %p202
        $region74: #{tpu_custom_call.1} parent=71 // pred_check_branch
          %1746 = sbr.rel (%p1744) target = $region76
        $region75: #{tpu_custom_call.1} parent=71 // pred_region
          %s1747 = sand.u32 %s187, 1
          %s1748 = scalar_lea.sflag [#allocation5], %s1747
          %s1749 = sand.u32 %s187, 1
          %s1750 = scalar_lea.vmem [#allocation11], %s1749
          %1752 = dma.done %s1748, 16
        $region76: #{tpu_custom_call.1} parent=71 // pred_fallthru
          _
      $region72: #{tpu_custom_call.1} parent=5 // pred_fallthru
        _
    $region6: #{tpu_custom_call.1} parent=1 // loop_footer
      %s25 = sadd.s32 1, %s21
    $region7: #{tpu_custom_call.1} parent=1 // loop_footer_branch
      %20 = sbr.rel target = $region3
    $region8: #{tpu_custom_call.1} parent=1 // loop_exit
      _
    %1753 = vsyncpa [#allocation4], 1
    %s1754 = scalar_lea.sflag [#allocation4], 1
    %1755 = vsyncpa %s1754, 1
    %1756 = vsyncpa [#allocation7], 1
    %1757 = vsyncpa [#allocation10], 1
    %1758 = vsyncpa [#allocation5], 1
    %s1759 = scalar_lea.sflag [#allocation5], 1
    %1760 = vsyncpa %s1759, 1

</llo_original>
